<compile_context>
chip_gen: v7x
topology: tpu7x:2x2x1
jax: 0.10.0
libtpu: 0.0.40
codegen_flags: <defaults>
</compile_context>

<pallas_src>
import functools

import jax
import jax.numpy as jnp
from jax.experimental import pallas as pl
from jax.experimental.pallas import tpu as pltpu

LOG_STD_MAX = -2.0
LOG_STD_MIN = -5.0

_K = 5        # conv kernel size
_STRIDE = 2
_PAD = 2
_POOL = 6     # AvgPool2d(6) -> 6*6 = 36 pooled positions


def _elu(x):
    # ELU(alpha=1): x if x > 0 else exp(x) - 1   (overflow-safe form)
    return jnp.where(x > 0, x, jnp.exp(jnp.minimum(x, 0.0)) - 1.0)


# --------------------------- Pallas kernel bodies ---------------------------

def _gemm_bias_elu_kernel(a_ref, w_ref, b_ref, o_ref):
    acc = jnp.dot(a_ref[...], w_ref[...], preferred_element_type=jnp.float32)
    o_ref[...] = _elu(acc + b_ref[...])


def _tail_kernel(p_ref, w3_ref, b3_ref, w1_ref, b1_ref, w2_ref, b2_ref, o_ref,
                 *, tb, s):
    """Fused tail: conv3 GEMM + ELU + AvgPool(6) + ELU + merged heads + clamp."""
    # conv3 as a GEMM over (tb*s, 800) patches
    h3 = jnp.dot(p_ref[...], w3_ref[...], preferred_element_type=jnp.float32)
    h3 = _elu(h3 + b3_ref[...])                                   # (tb*s, 64)

    # AvgPool2d(6): mean over the s=36 spatial rows of each batch element,
    # done as an MXU matmul with a constant block pooling matrix.
    row = jax.lax.broadcasted_iota(jnp.int32, (tb, tb * s), 0)
    col = jax.lax.broadcasted_iota(jnp.int32, (tb, tb * s), 1)
    pool = jnp.where((col >= row * s) & (col < (row + 1) * s),
                     1.0 / s, 0.0).astype(jnp.float32)
    feat = _elu(jnp.dot(pool, h3, preferred_element_type=jnp.float32))  # (tb, 64)

    # both heads' first layers as one lane-dense [64, 128] dot
    h1 = _elu(jnp.dot(feat, w1_ref[...], preferred_element_type=jnp.float32)
              + b1_ref[...])                                      # (tb, 128)
    # both second layers as one block-diagonal [128, 2] dot:
    #   column 0 = mean, column 1 = log_std (clamped)
    raw = jnp.dot(h1, w2_ref[...], preferred_element_type=jnp.float32) + b2_ref[...]
    clamped = jnp.clip(raw, LOG_STD_MIN, LOG_STD_MAX)
    is_mean = jax.lax.broadcasted_iota(jnp.int32, raw.shape, 1) == 0
    o_ref[...] = jnp.where(is_mean, raw, clamped)                 # (tb, 2)


# ----------------------------- Pallas wrappers ------------------------------

def gemm_bias_elu(a, w, b, *, tile_m=512):
    """ELU(a @ w + b) with an M-tiled grid.  a: [M, K], w: [K, N], b: [N]."""
    M, K = a.shape
    K2, N = w.shape
    assert K == K2
    tm = M if M <= tile_m else tile_m          # full-M block for small inputs
    grid_m = pl.cdiv(M, tm)
    cost = pl.CostEstimate(flops=2 * M * K * N,
                           transcendentals=M * N,
                           bytes_accessed=4 * (M * K + K * N + N + M * N))
    return pl.pallas_call(
        _gemm_bias_elu_kernel,
        out_shape=jax.ShapeDtypeStruct((M, N), jnp.float32),
        grid=(grid_m,),
        in_specs=[
            pl.BlockSpec((tm, K), lambda i: (i, 0)),
            pl.BlockSpec((K, N), lambda i: (0, 0)),   # VMEM-resident across M tiles
            pl.BlockSpec((1, N), lambda i: (0, 0)),
        ],
        out_specs=pl.BlockSpec((tm, N), lambda i: (i, 0)),
        compiler_params=pltpu.CompilerParams(dimension_semantics=("parallel",)),
        cost_estimate=cost,
    )(a, w, b.reshape(1, N))


def conv3_pool_heads(p3, w3, b3, w1, b1, w2, b2, *, tile_b=8):
    """p3: [B*36, 800] conv3 patches -> [B, 2] (col 0 = mean, col 1 = log_std)."""
    S = _POOL * _POOL
    BS, K3 = p3.shape
    B = BS // S
    N3 = w3.shape[1]         # 64
    H2 = w1.shape[1]         # 128 (both heads' hidden concatenated)

    tb = B if B <= tile_b else tile_b
    pad_b = (-B) % tb
    if pad_b:
        # pad batch so every grid block is full (keeps OOB garbage out of the
        # cross-row pooling matmul)
        p3 = jnp.concatenate([p3, jnp.zeros((pad_b * S, K3), p3.dtype)], axis=0)
    Bp = B + pad_b
    grid_b = Bp // tb

    cost = pl.CostEstimate(
        flops=2 * Bp * (S * K3 * N3 + tb * S * N3 + N3 * H2 + H2 * 2),
        transcendentals=Bp * (S * N3 + N3 + H2),
        bytes_accessed=4 * (Bp * S * K3 + K3 * N3 + N3 + N3 * H2 + H2
                            + H2 * 2 + 2 + Bp * 2))

    out = pl.pallas_call(
        functools.partial(_tail_kernel, tb=tb, s=S),
        out_shape=jax.ShapeDtypeStruct((Bp, 2), jnp.float32),
        grid=(grid_b,),
        in_specs=[
            pl.BlockSpec((tb * S, K3), lambda i: (i, 0)),
            pl.BlockSpec((K3, N3), lambda i: (0, 0)),
            pl.BlockSpec((1, N3), lambda i: (0, 0)),
            pl.BlockSpec((N3, H2), lambda i: (0, 0)),
            pl.BlockSpec((1, H2), lambda i: (0, 0)),
            pl.BlockSpec((H2, 2), lambda i: (0, 0)),
            pl.BlockSpec((1, 2), lambda i: (0, 0)),
        ],
        out_specs=pl.BlockSpec((tb, 2), lambda i: (i, 0)),
        compiler_params=pltpu.CompilerParams(dimension_semantics=("parallel",)),
        cost_estimate=cost,
    )(p3, w3, b3, w1, b1, w2, b2)
    return out[:B]


# ------------------------------ JAX glue ------------------------------------

def _extract_patches(x):
    """x: [B, H, W, C] NHWC -> [B, Ho, Wo, C*25] conv-receptive-field patches.

    Feature ordering is channel-major: feature index = c*25 + kh*5 + kw,
    which matches the weight flattening in prepare_params().
    """
    return jax.lax.conv_general_dilated_patches(
        x, filter_shape=(_K, _K), window_strides=(_STRIDE, _STRIDE),
        padding=((_PAD, _PAD), (_PAD, _PAD)),
        dimension_numbers=("NHWC", "HWIO", "NHWC"),
        precision=jax.lax.Precision.HIGHEST)


def init_params(key):
    """Deterministic synthetic parameters (shapes match the PyTorch module).

    Conv weights stored HWIO [kh, kw, cin, cout]; Linear weights [in, out].
    NOTE: to load real PyTorch weights, conv weights must be permuted from
    [cout, cin, kh, kw] -> [kh, kw, cin, cout] and nn.Linear weights transposed
    before being placed in this dict.
    """
    ks = jax.random.split(key, 12)

    def conv_w(k, cin, cout):
        lim = jnp.sqrt(6.0 / (_K * _K * cin + _K * _K * cout))
        return jax.random.uniform(k, (_K, _K, cin, cout), jnp.float32, -lim, lim)

    def lin_w(k, cin, cout):  # xavier_uniform_ (gain=1), as in weights_init_
        lim = jnp.sqrt(6.0 / (cin + cout))
        return jax.random.uniform(k, (cin, cout), jnp.float32, -lim, lim)

    return {
        "c1_w": conv_w(ks[0], 9, 16), "c1_b": 0.01 * jax.random.normal(ks[1], (16,)),
        "c2_w": conv_w(ks[2], 16, 32), "c2_b": 0.01 * jax.random.normal(ks[3], (32,)),
        "c3_w": conv_w(ks[4], 32, 64), "c3_b": 0.01 * jax.random.normal(ks[5], (64,)),
        # mean head (xavier weights, zero bias -> weights_init_)
        "mean_w1": lin_w(ks[6], 64, 64), "mean_b1": jnp.zeros((64,), jnp.float32),
        "mean_w2": lin_w(ks[7], 64, 1), "mean_b2": jnp.zeros((1,), jnp.float32),
        # log_std head (default-ish init)
        "std_w1": lin_w(ks[8], 64, 64), "std_b1": 0.01 * jax.random.normal(ks[9], (64,)),
        "std_w2": lin_w(ks[10], 64, 1), "std_b2": 0.01 * jax.random.normal(ks[11], (1,)),
    }


def prepare_params(p):
    """One-time repack of module parameters into kernel-ready layouts."""
    def flat_conv(w):   # [kh, kw, cin, cout] -> [cin*kh*kw, cout] (matches patches)
        kh, kw, cin, cout = w.shape
        return jnp.transpose(w, (2, 0, 1, 3)).reshape(cin * kh * kw, cout)

    H = p["mean_w1"].shape[1]                       # 64
    w2 = jnp.zeros((2 * H, 2), jnp.float32)         # block-diagonal second layers
    w2 = w2.at[:H, 0].set(p["mean_w2"][:, 0])
    w2 = w2.at[H:, 1].set(p["std_w2"][:, 0])
    return {
        "c1_w": flat_conv(p["c1_w"]), "c1_b": p["c1_b"],
        "c2_w": flat_conv(p["c2_w"]), "c2_b": p["c2_b"],
        "c3_w": flat_conv(p["c3_w"]), "c3_b": p["c3_b"].reshape(1, -1),
        "head_w1": jnp.concatenate([p["mean_w1"], p["std_w1"]], axis=1),       # [64,128]
        "head_b1": jnp.concatenate([p["mean_b1"], p["std_b1"]]).reshape(1, 2 * H),
        "head_w2": w2,                                                         # [128,2]
        "head_b2": jnp.concatenate([p["mean_b2"], p["std_b2"]]).reshape(1, 2),
    }


def gaussian_policy_forward(prepared, state_nchw):
    """GaussianPolicy.forward: state (NCHW) -> (mean [B,1], log_std [B,1])."""
    x = jnp.transpose(state_nchw, (0, 2, 3, 1)).astype(jnp.float32)   # NHWC
    B = x.shape[0]

    # Conv2d(9,16,5,s2,p2)+ELU and Conv2d(16,32,5,s2,p2)+ELU as M-tiled GEMMs
    p1 = _extract_patches(x)                                          # (B,24,24,225)
    h = gemm_bias_elu(p1.reshape(-1, p1.shape[-1]), prepared["c1_w"], prepared["c1_b"])
    x = h.reshape(B, p1.shape[1], p1.shape[2], 16)

    p2 = _extract_patches(x)                                          # (B,12,12,400)
    h = gemm_bias_elu(p2.reshape(-1, p2.shape[-1]), prepared["c2_w"], prepared["c2_b"])
    x = h.reshape(B, p2.shape[1], p2.shape[2], 32)

    # Fused tail: Conv2d(32,64)+ELU + AvgPool(6)+ELU + both heads + clamp
    p3 = _extract_patches(x)                                          # (B,6,6,800)
    out = conv3_pool_heads(p3.reshape(-1, p3.shape[-1]),
                           prepared["c3_w"], prepared["c3_b"],
                           prepared["head_w1"], prepared["head_b1"],
                           prepared["head_w2"], prepared["head_b2"])
    return out[:, 0:1], out[:, 1:2]


def reference_forward(params, state_nchw):
    """Pure-XLA float32 (HIGHEST precision) reference of the same module."""
    x = jnp.transpose(state_nchw, (0, 2, 3, 1)).astype(jnp.float32)

    def conv(x, w, b):
        y = jax.lax.conv_general_dilated(
            x, w, window_strides=(_STRIDE, _STRIDE),
            padding=((_PAD, _PAD), (_PAD, _PAD)),
            dimension_numbers=("NHWC", "HWIO", "NHWC"),
            precision=jax.lax.Precision.HIGHEST)
        return _elu(y + b)

    x = conv(x, params["c1_w"], params["c1_b"])
    x = conv(x, params["c2_w"], params["c2_b"])
    x = conv(x, params["c3_w"], params["c3_b"])
    feat = _elu(jnp.mean(x, axis=(1, 2)))            # AvgPool(6) + ELU + Flatten
    hm = _elu(feat @ params["mean_w1"] + params["mean_b1"])
    mean = hm @ params["mean_w2"] + params["mean_b2"]
    hs = _elu(feat @ params["std_w1"] + params["std_b1"])
    log_std = jnp.clip(hs @ params["std_w2"] + params["std_b2"],
                       LOG_STD_MIN, LOG_STD_MAX)
    return mean, log_std


# ------------------------------- main --------------------------------------

if __name__ == "__main__":
    key = jax.random.PRNGKey(0)
    pkey, xkey = jax.random.split(key)
    params = init_params(pkey)
    prepared = prepare_params(params)

    # input implied by the module: 9 channels, 48x48 spatial (-> 64 flat features)
    state = jax.random.normal(xkey, (2, 9, 48, 48), jnp.float32)

    fwd = jax.jit(gaussian_policy_forward)
    mean, log_std = fwd(prepared, state)
    jax.block_until_ready((mean, log_std))

    assert mean.shape == (2, 1) and log_std.shape == (2, 1)
    assert bool(jnp.all(log_std >= LOG_STD_MIN)) and bool(jnp.all(log_std <= LOG_STD_MAX))

    # cross-check the Pallas path against a pure-XLA float32 reference
    ref_mean, ref_log_std = jax.jit(reference_forward)(params, state)
    assert bool(jnp.allclose(mean, ref_mean, rtol=1e-2, atol=1e-2))
    assert bool(jnp.allclose(log_std, ref_log_std, rtol=1e-2, atol=1e-2))

    print("KERNEL_OK")
</pallas_src>

<mosaic_0001>
module attributes {stable_mosaic.version = 11 : i64} {
  func.func @_gemm_bias_elu_kernel(%arg0: i32, %arg1: memref<512x225xf32, #tpu.memory_space<vmem>>, %arg2: memref<225x16xf32, #tpu.memory_space<vmem>>, %arg3: memref<1x16xf32, #tpu.memory_space<vmem>>, %arg4: memref<512x16xf32, #tpu.memory_space<vmem>>) attributes {dimension_semantics = [#tpu.dimension_semantics<parallel>], iteration_bounds = array<i64: 3>, scalar_prefetch = 0 : i64, scratch_operands = 0 : i64, tpu.core_type = #tpu.core_type<tc>, window_params = [{transform_indices = @transform_0, window_bounds = array<i64: 512, 225>}, {pipeline_mode = #tpu.pipeline_mode<synchronous>, transform_indices = @transform_1, window_bounds = array<i64: 225, 16>}, {pipeline_mode = #tpu.pipeline_mode<synchronous>, transform_indices = @transform_2, window_bounds = array<i64: 1, 16>}, {transform_indices = @transform_3, window_bounds = array<i64: 512, 16>}]} {
    %c0 = arith.constant 0 : index
    %c0_0 = arith.constant 0 : index
    %0 = vector.load %arg1[%c0, %c0_0] : memref<512x225xf32, #tpu.memory_space<vmem>>, vector<512x225xf32>
    %c0_1 = arith.constant 0 : index
    %c0_2 = arith.constant 0 : index
    %1 = vector.load %arg2[%c0_1, %c0_2] : memref<225x16xf32, #tpu.memory_space<vmem>>, vector<225x16xf32>
    %cst = arith.constant dense<0.000000e+00> : vector<512x16xf32>
    %2 = tpu.matmul %0, %1, %cst {dimension_numbers = #tpu.dot_dimension_numbers<[1], [0], [0], [1], [0, 0, 1, 1], [], []>} : vector<512x225xf32>, vector<225x16xf32>, vector<512x16xf32> -> vector<512x16xf32>
    %c0_3 = arith.constant 0 : index
    %c0_4 = arith.constant 0 : index
    %3 = vector.load %arg3[%c0_3, %c0_4] : memref<1x16xf32, #tpu.memory_space<vmem>>, vector<1x16xf32>
    %4 = vector.broadcast %3 : vector<1x16xf32> to vector<512x16xf32>
    %5 = arith.addf %2, %4 : vector<512x16xf32>
    %cst_5 = arith.constant 0.000000e+00 : f32
    %6 = vector.broadcast %cst_5 : f32 to vector<512x16xf32>
    %7 = arith.cmpf ogt, %5, %6 : vector<512x16xf32>
    %cst_6 = arith.constant 0.000000e+00 : f32
    %8 = vector.broadcast %cst_6 : f32 to vector<512x16xf32>
    %9 = arith.minimumf %5, %8 : vector<512x16xf32>
    %10 = math.exp %9 : vector<512x16xf32>
    %cst_7 = arith.constant 1.000000e+00 : f32
    %11 = vector.broadcast %cst_7 : f32 to vector<512x16xf32>
    %12 = arith.subf %10, %11 : vector<512x16xf32>
    %13 = arith.select %7, %5, %12 : vector<512x16xi1>, vector<512x16xf32>
    %c0_8 = arith.constant 0 : index
    %c0_9 = arith.constant 0 : index
    %14 = vector.load %arg4[%c0_8, %c0_9] : memref<512x16xf32, #tpu.memory_space<vmem>>, vector<512x16xf32>
    tpu.vector_store %arg4[%c0_8, %c0_9], %13 {strides = array<i32>} : memref<512x16xf32, #tpu.memory_space<vmem>>, vector<512x16xf32>,
    return
  }
  func.func @transform_0(%arg0: i32) -> (i32, i32) {
    %c0_i32 = arith.constant 0 : i32
    %c0_i32_0 = arith.constant 0 : i32
    return %arg0, %c0_i32 : i32, i32
  }
  func.func @transform_1(%arg0: i32) -> (i32, i32) {
    %c0_i32 = arith.constant 0 : i32
    %c0_i32_0 = arith.constant 0 : i32
    %c0_i32_1 = arith.constant 0 : i32
    return %c0_i32, %c0_i32_0 : i32, i32
  }
  func.func @transform_2(%arg0: i32) -> (i32, i32) {
    %c0_i32 = arith.constant 0 : i32
    %c0_i32_0 = arith.constant 0 : i32
    %c0_i32_1 = arith.constant 0 : i32
    return %c0_i32, %c0_i32_0 : i32, i32
  }
  func.func @transform_3(%arg0: i32) -> (i32, i32) {
    %c0_i32 = arith.constant 0 : i32
    %c0_i32_0 = arith.constant 0 : i32
    return %arg0, %c0_i32 : i32, i32
  }
}

module attributes {stable_mosaic.version = 11 : i64} {
  func.func @_gemm_bias_elu_kernel(%arg0: i32, %arg1: memref<288x400xf32, #tpu.memory_space<vmem>>, %arg2: memref<400x32xf32, #tpu.memory_space<vmem>>, %arg3: memref<1x32xf32, #tpu.memory_space<vmem>>, %arg4: memref<288x32xf32, #tpu.memory_space<vmem>>) attributes {dimension_semantics = [#tpu.dimension_semantics<parallel>], iteration_bounds = array<i64: 1>, scalar_prefetch = 0 : i64, scratch_operands = 0 : i64, tpu.core_type = #tpu.core_type<tc>, window_params = [{transform_indices = @transform_0, window_bounds = array<i64: 288, 400>}, {pipeline_mode = #tpu.pipeline_mode<synchronous>, transform_indices = @transform_1, window_bounds = array<i64: 400, 32>}, {pipeline_mode = #tpu.pipeline_mode<synchronous>, transform_indices = @transform_2, window_bounds = array<i64: 1, 32>}, {transform_indices = @transform_3, window_bounds = array<i64: 288, 32>}]} {
    %c0 = arith.constant 0 : index
    %c0_0 = arith.constant 0 : index
    %0 = vector.load %arg1[%c0, %c0_0] : memref<288x400xf32, #tpu.memory_space<vmem>>, vector<288x400xf32>
    %c0_1 = arith.constant 0 : index
    %c0_2 = arith.constant 0 : index
    %1 = vector.load %arg2[%c0_1, %c0_2] : memref<400x32xf32, #tpu.memory_space<vmem>>, vector<400x32xf32>
    %cst = arith.constant dense<0.000000e+00> : vector<288x32xf32>
    %2 = tpu.matmul %0, %1, %cst {dimension_numbers = #tpu.dot_dimension_numbers<[1], [0], [0], [1], [0, 0, 1, 1], [], []>} : vector<288x400xf32>, vector<400x32xf32>, vector<288x32xf32> -> vector<288x32xf32>
    %c0_3 = arith.constant 0 : index
    %c0_4 = arith.constant 0 : index
    %3 = vector.load %arg3[%c0_3, %c0_4] : memref<1x32xf32, #tpu.memory_space<vmem>>, vector<1x32xf32>
    %4 = vector.broadcast %3 : vector<1x32xf32> to vector<288x32xf32>
    %5 = arith.addf %2, %4 : vector<288x32xf32>
    %cst_5 = arith.constant 0.000000e+00 : f32
    %6 = vector.broadcast %cst_5 : f32 to vector<288x32xf32>
    %7 = arith.cmpf ogt, %5, %6 : vector<288x32xf32>
    %cst_6 = arith.constant 0.000000e+00 : f32
    %8 = vector.broadcast %cst_6 : f32 to vector<288x32xf32>
    %9 = arith.minimumf %5, %8 : vector<288x32xf32>
    %10 = math.exp %9 : vector<288x32xf32>
    %cst_7 = arith.constant 1.000000e+00 : f32
    %11 = vector.broadcast %cst_7 : f32 to vector<288x32xf32>
    %12 = arith.subf %10, %11 : vector<288x32xf32>
    %13 = arith.select %7, %5, %12 : vector<288x32xi1>, vector<288x32xf32>
    %c0_8 = arith.constant 0 : index
    %c0_9 = arith.constant 0 : index
    %14 = vector.load %arg4[%c0_8, %c0_9] : memref<288x32xf32, #tpu.memory_space<vmem>>, vector<288x32xf32>
    tpu.vector_store %arg4[%c0_8, %c0_9], %13 {strides = array<i32>} : memref<288x32xf32, #tpu.memory_space<vmem>>, vector<288x32xf32>,
    return
  }
  func.func @transform_0(%arg0: i32) -> (i32, i32) {
    %c0_i32 = arith.constant 0 : i32
    %c0_i32_0 = arith.constant 0 : i32
    return %arg0, %c0_i32 : i32, i32
  }
  func.func @transform_1(%arg0: i32) -> (i32, i32) {
    %c0_i32 = arith.constant 0 : i32
    %c0_i32_0 = arith.constant 0 : i32
    %c0_i32_1 = arith.constant 0 : i32
    return %c0_i32, %c0_i32_0 : i32, i32
  }
  func.func @transform_2(%arg0: i32) -> (i32, i32) {
    %c0_i32 = arith.constant 0 : i32
    %c0_i32_0 = arith.constant 0 : i32
    %c0_i32_1 = arith.constant 0 : i32
    return %c0_i32, %c0_i32_0 : i32, i32
  }
  func.func @transform_3(%arg0: i32) -> (i32, i32) {
    %c0_i32 = arith.constant 0 : i32
    %c0_i32_0 = arith.constant 0 : i32
    return %arg0, %c0_i32 : i32, i32
  }
}

module attributes {stable_mosaic.version = 11 : i64} {
  func.func @_tail_kernel(%arg0: i32, %arg1: memref<72x800xf32, #tpu.memory_space<vmem>>, %arg2: memref<800x64xf32, #tpu.memory_space<vmem>>, %arg3: memref<1x64xf32, #tpu.memory_space<vmem>>, %arg4: memref<64x128xf32, #tpu.memory_space<vmem>>, %arg5: memref<1x128xf32, #tpu.memory_space<vmem>>, %arg6: memref<128x2xf32, #tpu.memory_space<vmem>>, %arg7: memref<1x2xf32, #tpu.memory_space<vmem>>, %arg8: memref<2x2xf32, #tpu.memory_space<vmem>>) attributes {dimension_semantics = [#tpu.dimension_semantics<parallel>], iteration_bounds = array<i64: 1>, scalar_prefetch = 0 : i64, scratch_operands = 0 : i64, tpu.core_type = #tpu.core_type<tc>, window_params = [{transform_indices = @transform_0, window_bounds = array<i64: 72, 800>}, {pipeline_mode = #tpu.pipeline_mode<synchronous>, transform_indices = @transform_1, window_bounds = array<i64: 800, 64>}, {pipeline_mode = #tpu.pipeline_mode<synchronous>, transform_indices = @transform_2, window_bounds = array<i64: 1, 64>}, {pipeline_mode = #tpu.pipeline_mode<synchronous>, transform_indices = @transform_3, window_bounds = array<i64: 64, 128>}, {pipeline_mode = #tpu.pipeline_mode<synchronous>, transform_indices = @transform_4, window_bounds = array<i64: 1, 128>}, {pipeline_mode = #tpu.pipeline_mode<synchronous>, transform_indices = @transform_5, window_bounds = array<i64: 128, 2>}, {pipeline_mode = #tpu.pipeline_mode<synchronous>, transform_indices = @transform_6, window_bounds = array<i64: 1, 2>}, {transform_indices = @transform_7, window_bounds = array<i64: 2, 2>}]} {
    %c0 = arith.constant 0 : index
    %c0_0 = arith.constant 0 : index
    %0 = vector.load %arg1[%c0, %c0_0] : memref<72x800xf32, #tpu.memory_space<vmem>>, vector<72x800xf32>
    %c0_1 = arith.constant 0 : index
    %c0_2 = arith.constant 0 : index
    %1 = vector.load %arg2[%c0_1, %c0_2] : memref<800x64xf32, #tpu.memory_space<vmem>>, vector<800x64xf32>
    %cst = arith.constant dense<0.000000e+00> : vector<72x64xf32>
    %2 = tpu.matmul %0, %1, %cst {dimension_numbers = #tpu.dot_dimension_numbers<[1], [0], [0], [1], [0, 0, 1, 1], [], []>} : vector<72x800xf32>, vector<800x64xf32>, vector<72x64xf32> -> vector<72x64xf32>
    %c0_3 = arith.constant 0 : index
    %c0_4 = arith.constant 0 : index
    %3 = vector.load %arg3[%c0_3, %c0_4] : memref<1x64xf32, #tpu.memory_space<vmem>>, vector<1x64xf32>
    %4 = vector.broadcast %3 : vector<1x64xf32> to vector<72x64xf32>
    %5 = arith.addf %2, %4 : vector<72x64xf32>
    %cst_5 = arith.constant 0.000000e+00 : f32
    %6 = vector.broadcast %cst_5 : f32 to vector<72x64xf32>
    %7 = arith.cmpf ogt, %5, %6 : vector<72x64xf32>
    %cst_6 = arith.constant 0.000000e+00 : f32
    %8 = vector.broadcast %cst_6 : f32 to vector<72x64xf32>
    %9 = arith.minimumf %5, %8 : vector<72x64xf32>
    %10 = math.exp %9 : vector<72x64xf32>
    %cst_7 = arith.constant 1.000000e+00 : f32
    %11 = vector.broadcast %cst_7 : f32 to vector<72x64xf32>
    %12 = arith.subf %10, %11 : vector<72x64xf32>
    %13 = arith.select %7, %5, %12 : vector<72x64xi1>, vector<72x64xf32>
    %14 = tpu.iota {dimensions = array<i32: 0>} : vector<2x72xi32>
    %15 = tpu.iota {dimensions = array<i32: 1>} : vector<2x72xi32>
    %c36_i32 = arith.constant 36 : i32
    %16 = vector.broadcast %c36_i32 : i32 to vector<2x72xi32>
    %17 = arith.muli %14, %16 : vector<2x72xi32>
    %18 = arith.cmpi sge, %15, %17 : vector<2x72xi32>
    %c1_i32 = arith.constant 1 : i32
    %19 = vector.broadcast %c1_i32 : i32 to vector<2x72xi32>
    %20 = arith.addi %14, %19 : vector<2x72xi32>
    %c36_i32_8 = arith.constant 36 : i32
    %21 = vector.broadcast %c36_i32_8 : i32 to vector<2x72xi32>
    %22 = arith.muli %20, %21 : vector<2x72xi32>
    %23 = arith.cmpi slt, %15, %22 : vector<2x72xi32>
    %24 = arith.andi %18, %23 : vector<2x72xi1>
    %cst_9 = arith.constant 0.027777778 : f32
    %cst_10 = arith.constant 0.000000e+00 : f32
    %25 = vector.broadcast %cst_9 : f32 to vector<2x72xf32>
    %26 = vector.broadcast %cst_10 : f32 to vector<2x72xf32>
    %27 = arith.select %24, %25, %26 : vector<2x72xi1>, vector<2x72xf32>
    %cst_11 = arith.constant dense<0.000000e+00> : vector<2x64xf32>
    %28 = tpu.matmul %27, %13, %cst_11 {dimension_numbers = #tpu.dot_dimension_numbers<[1], [0], [0], [1], [0, 0, 1, 1], [], []>} : vector<2x72xf32>, vector<72x64xf32>, vector<2x64xf32> -> vector<2x64xf32>
    %cst_12 = arith.constant 0.000000e+00 : f32
    %29 = vector.broadcast %cst_12 : f32 to vector<2x64xf32>
    %30 = arith.cmpf ogt, %28, %29 : vector<2x64xf32>
    %cst_13 = arith.constant 0.000000e+00 : f32
    %31 = vector.broadcast %cst_13 : f32 to vector<2x64xf32>
    %32 = arith.minimumf %28, %31 : vector<2x64xf32>
    %33 = math.exp %32 : vector<2x64xf32>
    %cst_14 = arith.constant 1.000000e+00 : f32
    %34 = vector.broadcast %cst_14 : f32 to vector<2x64xf32>
    %35 = arith.subf %33, %34 : vector<2x64xf32>
    %36 = arith.select %30, %28, %35 : vector<2x64xi1>, vector<2x64xf32>
    %c0_15 = arith.constant 0 : index
    %c0_16 = arith.constant 0 : index
    %37 = vector.load %arg4[%c0_15, %c0_16] : memref<64x128xf32, #tpu.memory_space<vmem>>, vector<64x128xf32>
    %cst_17 = arith.constant dense<0.000000e+00> : vector<2x128xf32>
    %38 = tpu.matmul %36, %37, %cst_17 {dimension_numbers = #tpu.dot_dimension_numbers<[1], [0], [0], [1], [0, 0, 1, 1], [], []>} : vector<2x64xf32>, vector<64x128xf32>, vector<2x128xf32> -> vector<2x128xf32>
    %c0_18 = arith.constant 0 : index
    %c0_19 = arith.constant 0 : index
    %39 = vector.load %arg5[%c0_18, %c0_19] : memref<1x128xf32, #tpu.memory_space<vmem>>, vector<1x128xf32>
    %40 = vector.broadcast %39 : vector<1x128xf32> to vector<2x128xf32>
    %41 = arith.addf %38, %40 : vector<2x128xf32>
    %cst_20 = arith.constant 0.000000e+00 : f32
    %42 = vector.broadcast %cst_20 : f32 to vector<2x128xf32>
    %43 = arith.cmpf ogt, %41, %42 : vector<2x128xf32>
    %cst_21 = arith.constant 0.000000e+00 : f32
    %44 = vector.broadcast %cst_21 : f32 to vector<2x128xf32>
    %45 = arith.minimumf %41, %44 : vector<2x128xf32>
    %46 = math.exp %45 : vector<2x128xf32>
    %cst_22 = arith.constant 1.000000e+00 : f32
    %47 = vector.broadcast %cst_22 : f32 to vector<2x128xf32>
    %48 = arith.subf %46, %47 : vector<2x128xf32>
    %49 = arith.select %43, %41, %48 : vector<2x128xi1>, vector<2x128xf32>
    %c0_23 = arith.constant 0 : index
    %c0_24 = arith.constant 0 : index
    %50 = vector.load %arg6[%c0_23, %c0_24] : memref<128x2xf32, #tpu.memory_space<vmem>>, vector<128x2xf32>
    %cst_25 = arith.constant dense<0.000000e+00> : vector<2x2xf32>
    %51 = tpu.matmul %49, %50, %cst_25 {dimension_numbers = #tpu.dot_dimension_numbers<[1], [0], [0], [1], [0, 0, 1, 1], [], []>} : vector<2x128xf32>, vector<128x2xf32>, vector<2x2xf32> -> vector<2x2xf32>
    %c0_26 = arith.constant 0 : index
    %c0_27 = arith.constant 0 : index
    %52 = vector.load %arg7[%c0_26, %c0_27] : memref<1x2xf32, #tpu.memory_space<vmem>>, vector<1x2xf32>
    %53 = vector.broadcast %52 : vector<1x2xf32> to vector<2x2xf32>
    %54 = arith.addf %51, %53 : vector<2x2xf32>
    %cst_28 = arith.constant -5.000000e+00 : f32
    %cst_29 = arith.constant -2.000000e+00 : f32
    %55 = vector.broadcast %cst_28 : f32 to vector<2x2xf32>
    %56 = arith.maximumf %55, %54 : vector<2x2xf32>
    %57 = vector.broadcast %cst_29 : f32 to vector<2x2xf32>
    %58 = arith.minimumf %57, %56 : vector<2x2xf32>
    %59 = tpu.iota {dimensions = array<i32: 1>} : vector<2x2xi32>
    %c0_i32 = arith.constant 0 : i32
    %60 = vector.broadcast %c0_i32 : i32 to vector<2x2xi32>
    %61 = arith.cmpi eq, %59, %60 : vector<2x2xi32>
    %62 = arith.select %61, %54, %58 : vector<2x2xi1>, vector<2x2xf32>
    %c0_30 = arith.constant 0 : index
    %c0_31 = arith.constant 0 : index
    %63 = vector.load %arg8[%c0_30, %c0_31] : memref<2x2xf32, #tpu.memory_space<vmem>>, vector<2x2xf32>
    tpu.vector_store %arg8[%c0_30, %c0_31], %62 {strides = array<i32>} : memref<2x2xf32, #tpu.memory_space<vmem>>, vector<2x2xf32>,
    return
  }
  func.func @transform_0(%arg0: i32) -> (i32, i32) {
    %c0_i32 = arith.constant 0 : i32
    %c0_i32_0 = arith.constant 0 : i32
    return %arg0, %c0_i32 : i32, i32
  }
  func.func @transform_1(%arg0: i32) -> (i32, i32) {
    %c0_i32 = arith.constant 0 : i32
    %c0_i32_0 = arith.constant 0 : i32
    %c0_i32_1 = arith.constant 0 : i32
    return %c0_i32, %c0_i32_0 : i32, i32
  }
  func.func @transform_2(%arg0: i32) -> (i32, i32) {
    %c0_i32 = arith.constant 0 : i32
    %c0_i32_0 = arith.constant 0 : i32
    %c0_i32_1 = arith.constant 0 : i32
    return %c0_i32, %c0_i32_0 : i32, i32
  }
  func.func @transform_3(%arg0: i32) -> (i32, i32) {
    %c0_i32 = arith.constant 0 : i32
    %c0_i32_0 = arith.constant 0 : i32
    %c0_i32_1 = arith.constant 0 : i32
    return %c0_i32, %c0_i32_0 : i32, i32
  }
  func.func @transform_4(%arg0: i32) -> (i32, i32) {
    %c0_i32 = arith.constant 0 : i32
    %c0_i32_0 = arith.constant 0 : i32
    %c0_i32_1 = arith.constant 0 : i32
    return %c0_i32, %c0_i32_0 : i32, i32
  }
  func.func @transform_5(%arg0: i32) -> (i32, i32) {
    %c0_i32 = arith.constant 0 : i32
    %c0_i32_0 = arith.constant 0 : i32
    %c0_i32_1 = arith.constant 0 : i32
    return %c0_i32, %c0_i32_0 : i32, i32
  }
  func.func @transform_6(%arg0: i32) -> (i32, i32) {
    %c0_i32 = arith.constant 0 : i32
    %c0_i32_0 = arith.constant 0 : i32
    %c0_i32_1 = arith.constant 0 : i32
    return %c0_i32, %c0_i32_0 : i32, i32
  }
  func.func @transform_7(%arg0: i32) -> (i32, i32) {
    %c0_i32 = arith.constant 0 : i32
    %c0_i32_0 = arith.constant 0 : i32
    return %arg0, %c0_i32 : i32, i32
  }
}

</mosaic_0001>

<llo_original>
// kernel: gaussian_policy_forward.3
$region0: #{gaussian_policy_forward.3}
  #allocation0 [shape = 'u32[]', space=smem, size = 0x4, offset = 0x4, fixed_abs, tag = 'smem constant byte address 0x4 - core index']
  #allocation1 [shape = 'u32[144,128]{1,0:T(1,128)}', space=vmem, size = 0x12000, scoped, tag = 'internal scratch']
  %s0 = inlined_call_operand.vmem [shape: f32[1152,225], index: 0, kind: input, shape index: {}]
  %s1 = inlined_call_operand.vmem [shape: f32[225,16], index: 1, kind: input, shape index: {}]
  %s2 = inlined_call_operand.vmem [shape: f32[1,16], index: 2, kind: input, shape index: {}]
  %s3 = inlined_call_operand.vmem [shape: f32[1152,16], index: 3, kind: output, shape index: {}]
  %s4 = sld [smem:[#allocation0]]
  $region93: #{gaussian_policy_forward.3} parent=0
    _
  %s6 = ssub.s32 1, %s4
  %s7 = scalar_select 0, %s6, %s4
  $region1: #{gaussian_policy_forward.3} parent=0
    #allocation2 [shape = 'u8[524288]{0}', space=vmem, size = 0x80000, scoped, tag = 'output window, operand 0']
    loop: start=0, step=1, limit=5
    $region2: #{gaussian_policy_forward.3} parent=1 // loop_pre_header
      _
    $region3: #{gaussian_policy_forward.3} parent=1 // loop_header
      %s9 = sphi 0, %s13
      %p10 = scmp.ge.s32.totalorder %s9, 5
      %s19 = sphi 0, %s21
      %s22 = sphi 0, %s19
      %s23 = sphi 0, %s22
      %s39 = sphi 0, %s23
      %s43 = sphi 0, %s43
      %s45 = sphi 0, %s43
      %s46 = sphi 0, %s45
      %s60 = sphi 0, %s46
      %s64 = sphi 0, %s64
      %s66 = sphi 0, %s64
      %s67 = sphi 0, %s66
      %s81 = sphi 0, %s67
      %s87 = sphi 0, %s89
      %s90 = sphi 0, %s87
      %s91 = sphi 0, %s90
      %s107 = sphi 0, %s91
    $region4: #{gaussian_policy_forward.3} parent=1 // loop_header_branch
      %12 = sbr.rel (%p10) target = $region8
    $region5: #{gaussian_policy_forward.3} parent=1 // loop_body
      %s14 = ssub.s32 %s9, 1
      %s15 = ssub.s32 %s9, 2
      %s16 = sadd.s32 %s9, 1
      %s17 = ssub.s32 %s9, %s16
      %p18 = scmp.eq.s32.totalorder %s17, 0
      %s20 = sadd.s32 %s19, 1
      %s21 = scalar_select %p18, %s19, %s20
      %p24 = pneg %p18
      %p25 = scmp.eq.s32.totalorder %s9, 2
      %p26 = por %p24, %p25
      %p27 = scmp.ne.s32.totalorder %s19, %s22
      %p28 = scmp.eq.s32.totalorder %s9, 0
      %p29 = por %p27, %p28
      %p30 = scmp.ne.s32.totalorder %s19, %s22
      %p31 = scmp.eq.s32.totalorder %s14, 2
      %p32 = por %p30, %p31
      %p33 = scmp.ne.s32.totalorder %s22, %s23
      %p34 = scmp.eq.s32.totalorder %s14, 0
      %p35 = por %p33, %p34
      %p36 = scmp.ne.s32.totalorder %s22, %s23
      %p37 = scmp.eq.s32.totalorder %s15, 2
      %p38 = por %p36, %p37
      %p40 = scmp.ne.s32.totalorder %s23, %s39
      %p41 = scmp.eq.s32.totalorder %s15, 0
      %p42 = por %p40, %p41
      %s44 = sadd.s32 %s43, 1
      %p47 = scmp.eq.s32.totalorder %s9, 2
      %p48 = scmp.ne.s32.totalorder %s43, %s45
      %p49 = scmp.eq.s32.totalorder %s9, 0
      %p50 = por %p48, %p49
      %p51 = scmp.ne.s32.totalorder %s43, %s45
      %p52 = scmp.eq.s32.totalorder %s14, 2
      %p53 = por %p51, %p52
      %p54 = scmp.ne.s32.totalorder %s45, %s46
      %p55 = scmp.eq.s32.totalorder %s14, 0
      %p56 = por %p54, %p55
      %p57 = scmp.ne.s32.totalorder %s45, %s46
      %p58 = scmp.eq.s32.totalorder %s15, 2
      %p59 = por %p57, %p58
      %p61 = scmp.ne.s32.totalorder %s46, %s60
      %p62 = scmp.eq.s32.totalorder %s15, 0
      %p63 = por %p61, %p62
      %s65 = sadd.s32 %s64, 1
      %p68 = scmp.eq.s32.totalorder %s9, 2
      %p69 = scmp.ne.s32.totalorder %s64, %s66
      %p70 = scmp.eq.s32.totalorder %s9, 0
      %p71 = por %p69, %p70
      %p72 = scmp.ne.s32.totalorder %s64, %s66
      %p73 = scmp.eq.s32.totalorder %s14, 2
      %p74 = por %p72, %p73
      %p75 = scmp.ne.s32.totalorder %s66, %s67
      %p76 = scmp.eq.s32.totalorder %s14, 0
      %p77 = por %p75, %p76
      %p78 = scmp.ne.s32.totalorder %s66, %s67
      %p79 = scmp.eq.s32.totalorder %s15, 2
      %p80 = por %p78, %p79
      %p82 = scmp.ne.s32.totalorder %s67, %s81
      %p83 = scmp.eq.s32.totalorder %s15, 0
      %p84 = por %p82, %p83
      %s85 = ssub.s32 %s9, %s16
      %p86 = scmp.eq.s32.totalorder %s85, 0
      %s88 = sadd.s32 %s87, 1
      %s89 = scalar_select %p86, %s87, %s88
      %p92 = pneg %p86
      %p93 = scmp.eq.s32.totalorder %s9, 2
      %p94 = por %p92, %p93
      %p95 = scmp.ne.s32.totalorder %s87, %s90
      %p96 = scmp.eq.s32.totalorder %s9, 0
      %p97 = por %p95, %p96
      %p98 = scmp.ne.s32.totalorder %s87, %s90
      %p99 = scmp.eq.s32.totalorder %s14, 2
      %p100 = por %p98, %p99
      %p101 = scmp.ne.s32.totalorder %s90, %s91
      %p102 = scmp.eq.s32.totalorder %s14, 0
      %p103 = por %p101, %p102
      %p104 = scmp.ne.s32.totalorder %s90, %s91
      %p105 = scmp.eq.s32.totalorder %s15, 2
      %p106 = por %p104, %p105
      %p108 = scmp.ne.s32.totalorder %s91, %s107
      %p109 = scmp.eq.s32.totalorder %s15, 0
      %p110 = por %p108, %p109
      %p111 = scmp.le.s32.totalorder 1, %s9
      %p112 = scmp.lt.s32.totalorder %s9, 4
      %p113 = pnand %p111, %p112
      %p114 = pneg %p113
      // Predicated region
      $region9: #{gaussian_policy_forward.3} parent=5 // pred_check
        _
      $region10: #{gaussian_policy_forward.3} parent=5 // pred_check_branch
        %116 = sbr.rel (%p113) target = $region12
      $region11: #{gaussian_policy_forward.3} parent=5 // pred_region
        %s117 = ssub.s32 %s9, 1
        // Predicated region
        $region13: #{gaussian_policy_forward.3} parent=11 // pred_check
          %p118 = pneg %p56
        $region14: #{gaussian_policy_forward.3} parent=11 // pred_check_branch
          %120 = sbr.rel (%p118) target = $region16
        $region15: #{gaussian_policy_forward.3} parent=11 // pred_region
          _
        $region16: #{gaussian_policy_forward.3} parent=11 // pred_fallthru
          _
        // Predicated region
        $region17: #{gaussian_policy_forward.3} parent=11 // pred_check
          %p121 = pneg %p77
        $region18: #{gaussian_policy_forward.3} parent=11 // pred_check_branch
          %123 = sbr.rel (%p121) target = $region20
        $region19: #{gaussian_policy_forward.3} parent=11 // pred_region
          _
        $region20: #{gaussian_policy_forward.3} parent=11 // pred_fallthru
          _
      $region12: #{gaussian_policy_forward.3} parent=5 // pred_fallthru
        _
      %p124 = scmp.lt.s32.totalorder %s9, 3
      // Predicated region
      $region21: #{gaussian_policy_forward.3} parent=5 // pred_check
        %p125 = pneg %p124
      $region22: #{gaussian_policy_forward.3} parent=5 // pred_check_branch
        %127 = sbr.rel (%p125) target = $region24
      $region23: #{gaussian_policy_forward.3} parent=5 // pred_region
        // Predicated region
        $region25: #{gaussian_policy_forward.3} parent=23 // pred_check
          %p128 = pneg %p29
        $region26: #{gaussian_policy_forward.3} parent=23 // pred_check_branch
          %130 = sbr.rel (%p128) target = $region28
        $region27: #{gaussian_policy_forward.3} parent=23 // pred_region
          %s131 = smul.u32 64, %s9
          %s132 = ssub.s32 144, %s131
          %p133 = scmp.lt.s32.totalorder %s132, 64
          %s134 = scalar_select %p133, %s132, 64
          %s135 = smul.u32 128, %s134
          %s136 = smul.u32 %s135, 2
          %p137 = scmp.lt.s32.totalorder %s131, 143
          %s138 = scalar_select %p137, %s131, 143
          %s139 = smul.addr %s138, 2
          %s140 = smul.addr %s139, 8
          %s141 = scalar_lea.vmem %s0, %s140
          %s142 = smul.u32 64, %s9
          %s143 = ssub.s32 144, %s142
          %p144 = scmp.lt.s32.totalorder %s143, 64
          %s145 = scalar_select %p144, %s143, 64
          %s146 = smul.u32 128, %s145
          %s147 = smul.u32 %s146, 2
        $region28: #{gaussian_policy_forward.3} parent=23 // pred_fallthru
          _
      $region24: #{gaussian_policy_forward.3} parent=5 // pred_fallthru
        _
      %p148 = scmp.le.s32.totalorder 1, %s9
      %p149 = scmp.lt.s32.totalorder %s9, 4
      %p150 = pnand %p148, %p149
      %p151 = pneg %p150
      // Predicated region
      $region29: #{gaussian_policy_forward.3} parent=5 // pred_check
        _
      $region30: #{gaussian_policy_forward.3} parent=5 // pred_check_branch
        %153 = sbr.rel (%p150) target = $region32
      $region31: #{gaussian_policy_forward.3} parent=5 // pred_region
        %s154 = ssub.s32 %s9, 1
        %s155 = smul.u32 64, %s14
        %s156 = ssub.s32 144, %s155
        %p157 = scmp.lt.s32.totalorder %s156, 64
        %s158 = scalar_select %p157, %s156, 64
        %s159 = smul.u32 128, %s158
        %s160 = smul.u32 %s159, 2
        %p161 = scmp.lt.s32.totalorder %s155, 143
        %s162 = scalar_select %p161, %s155, 143
        %s163 = smul.addr %s162, 2
        %s164 = smul.addr %s163, 8
        %s165 = scalar_lea.vmem %s0, %s164
        %p166 = pneg %p35
        %p167 = pneg %p32
        %p168 = pneg %p56
        %p169 = pneg %p53
        %p170 = pneg %p77
        %p171 = pneg %p74
        %p172 = pneg %p103
        %p173 = pneg %p100
        %s174 = sand.u32 %s90, 1
        %s175 = sand.u32 %s90, 1
        %s176 = smul.addr %s175, 512
        %s177 = scalar_lea.vmem [#allocation2], %s176
        %s178 = smul.u32 64, %s14
        %s179 = ssub.s32 144, %s178
        %p180 = scmp.lt.s32.totalorder %s179, 64
        %s181 = scalar_select %p180, %s179, 64
        %s182 = smul.u32 128, %s181
        %s183 = smul.u32 %s182, 2
        %p184 = scmp.lt.s32.totalorder %s178, 143
        %s185 = scalar_select %p184, %s178, 143
        %s186 = smul.addr %s185, 2
        %s187 = smul.addr %s186, 8
        %s188 = scalar_lea.vmem %s0, %s187
        %s189 = smul.u32 64, %s14
        %s190 = ssub.s32 144, %s189
        %p191 = scmp.lt.s32.totalorder %s190, 64
        %s192 = scalar_select %p191, %s190, 64
        %s193 = smul.u32 128, %s192
        %s194 = smul.u32 %s193, 2
        %s195 = smul.u32 64, %s14
        %s196 = ssub.s32 144, %s195
        %p197 = scmp.lt.s32.totalorder %s196, 64
        %s198 = scalar_select %p197, %s196, 64
        %s199 = smul.u32 128, %s198
        %v200 = vld [vmem:[%s188] sm:$0xff]
        %v201 = vld [vmem:[%s188 + $0x8] sm:$0xff]
        %v202 = vld [vmem:[%s188 + $0x10] sm:$0xff]
        %v203 = vld [vmem:[%s188 + $0x18] sm:$0xff]
        %v204 = vld [vmem:[%s188 + $0x20] sm:$0xff]
        %v205 = vld [vmem:[%s188 + $0x28] sm:$0xff]
        %v206 = vld [vmem:[%s188 + $0x30] sm:$0xff]
        %v207 = vld [vmem:[%s188 + $0x38] sm:$0xff]
        %v208 = vld [vmem:[%s188 + $0x40] sm:$0xff]
        %v209 = vld [vmem:[%s188 + $0x48] sm:$0xff]
        %v210 = vld [vmem:[%s188 + $0x50] sm:$0xff]
        %v211 = vld [vmem:[%s188 + $0x58] sm:$0xff]
        %v212 = vld [vmem:[%s188 + $0x60] sm:$0xff]
        %v213 = vld [vmem:[%s188 + $0x68] sm:$0xff]
        %v214 = vld [vmem:[%s188 + $0x70] sm:$0xff]
        %v215 = vld [vmem:[%s188 + $0x78] sm:$0xff]
        %v216 = vld [vmem:[%s188 + $0x80] sm:$0xff]
        %v217 = vld [vmem:[%s188 + $0x88] sm:$0xff]
        %v218 = vld [vmem:[%s188 + $0x90] sm:$0xff]
        %v219 = vld [vmem:[%s188 + $0x98] sm:$0xff]
        %v220 = vld [vmem:[%s188 + $0xa0] sm:$0xff]
        %v221 = vld [vmem:[%s188 + $0xa8] sm:$0xff]
        %v222 = vld [vmem:[%s188 + $0xb0] sm:$0xff]
        %v223 = vld [vmem:[%s188 + $0xb8] sm:$0xff]
        %v224 = vld [vmem:[%s188 + $0xc0] sm:$0xff]
        %v225 = vld [vmem:[%s188 + $0xc8] sm:$0xff]
        %v226 = vld [vmem:[%s188 + $0xd0] sm:$0xff]
        %v227 = vld [vmem:[%s188 + $0xd8] sm:$0xff]
        %v228 = vld [vmem:[%s188 + $0xe0] sm:$0xff]
        %v229 = vld [vmem:[%s188 + $0xe8] sm:$0xff]
        %v230 = vld [vmem:[%s188 + $0xf0] sm:$0xff]
        %v231 = vld [vmem:[%s188 + $0xf8] sm:$0xff]
        %v232 = vld [vmem:[%s188 + $0x100] sm:$0xff]
        %v233 = vld [vmem:[%s188 + $0x108] sm:$0xff]
        %v234 = vld [vmem:[%s188 + $0x110] sm:$0xff]
        %v235 = vld [vmem:[%s188 + $0x118] sm:$0xff]
        %v236 = vld [vmem:[%s188 + $0x120] sm:$0xff]
        %v237 = vld [vmem:[%s188 + $0x128] sm:$0xff]
        %v238 = vld [vmem:[%s188 + $0x130] sm:$0xff]
        %v239 = vld [vmem:[%s188 + $0x138] sm:$0xff]
        %v240 = vld [vmem:[%s188 + $0x140] sm:$0xff]
        %v241 = vld [vmem:[%s188 + $0x148] sm:$0xff]
        %v242 = vld [vmem:[%s188 + $0x150] sm:$0xff]
        %v243 = vld [vmem:[%s188 + $0x158] sm:$0xff]
        %v244 = vld [vmem:[%s188 + $0x160] sm:$0xff]
        %v245 = vld [vmem:[%s188 + $0x168] sm:$0xff]
        %v246 = vld [vmem:[%s188 + $0x170] sm:$0xff]
        %v247 = vld [vmem:[%s188 + $0x178] sm:$0xff]
        %v248 = vld [vmem:[%s188 + $0x180] sm:$0xff]
        %v249 = vld [vmem:[%s188 + $0x188] sm:$0xff]
        %v250 = vld [vmem:[%s188 + $0x190] sm:$0xff]
        %v251 = vld [vmem:[%s188 + $0x198] sm:$0xff]
        %v252 = vld [vmem:[%s188 + $0x1a0] sm:$0xff]
        %v253 = vld [vmem:[%s188 + $0x1a8] sm:$0xff]
        %v254 = vld [vmem:[%s188 + $0x1b0] sm:$0xff]
        %v255 = vld [vmem:[%s188 + $0x1b8] sm:$0xff]
        %v256 = vld [vmem:[%s188 + $0x1c0] sm:$0xff]
        %v257 = vld [vmem:[%s188 + $0x1c8] sm:$0xff]
        %v258 = vld [vmem:[%s188 + $0x1d0] sm:$0xff]
        %v259 = vld [vmem:[%s188 + $0x1d8] sm:$0xff]
        %v260 = vld [vmem:[%s188 + $0x1e0] sm:$0xff]
        %v261 = vld [vmem:[%s188 + $0x1e8] sm:$0xff]
        %v262 = vld [vmem:[%s188 + $0x1f0] sm:$0xff]
        %v263 = vld [vmem:[%s188 + $0x1f8] sm:$0xff]
        %v264 = vld [vmem:[%s188 + $0x200] sm:$0xff]
        %v265 = vld [vmem:[%s188 + $0x208] sm:$0xff]
        %v266 = vld [vmem:[%s188 + $0x210] sm:$0xff]
        %v267 = vld [vmem:[%s188 + $0x218] sm:$0xff]
        %v268 = vld [vmem:[%s188 + $0x220] sm:$0xff]
        %v269 = vld [vmem:[%s188 + $0x228] sm:$0xff]
        %v270 = vld [vmem:[%s188 + $0x230] sm:$0xff]
        %v271 = vld [vmem:[%s188 + $0x238] sm:$0xff]
        %v272 = vld [vmem:[%s188 + $0x240] sm:$0xff]
        %v273 = vld [vmem:[%s188 + $0x248] sm:$0xff]
        %v274 = vld [vmem:[%s188 + $0x250] sm:$0xff]
        %v275 = vld [vmem:[%s188 + $0x258] sm:$0xff]
        %v276 = vld [vmem:[%s188 + $0x260] sm:$0xff]
        %v277 = vld [vmem:[%s188 + $0x268] sm:$0xff]
        %v278 = vld [vmem:[%s188 + $0x270] sm:$0xff]
        %v279 = vld [vmem:[%s188 + $0x278] sm:$0xff]
        %v280 = vld [vmem:[%s188 + $0x280] sm:$0xff]
        %v281 = vld [vmem:[%s188 + $0x288] sm:$0xff]
        %v282 = vld [vmem:[%s188 + $0x290] sm:$0xff]
        %v283 = vld [vmem:[%s188 + $0x298] sm:$0xff]
        %v284 = vld [vmem:[%s188 + $0x2a0] sm:$0xff]
        %v285 = vld [vmem:[%s188 + $0x2a8] sm:$0xff]
        %v286 = vld [vmem:[%s188 + $0x2b0] sm:$0xff]
        %v287 = vld [vmem:[%s188 + $0x2b8] sm:$0xff]
        %v288 = vld [vmem:[%s188 + $0x2c0] sm:$0xff]
        %v289 = vld [vmem:[%s188 + $0x2c8] sm:$0xff]
        %v290 = vld [vmem:[%s188 + $0x2d0] sm:$0xff]
        %v291 = vld [vmem:[%s188 + $0x2d8] sm:$0xff]
        %v292 = vld [vmem:[%s188 + $0x2e0] sm:$0xff]
        %v293 = vld [vmem:[%s188 + $0x2e8] sm:$0xff]
        %v294 = vld [vmem:[%s188 + $0x2f0] sm:$0xff]
        %v295 = vld [vmem:[%s188 + $0x2f8] sm:$0xff]
        %v296 = vld [vmem:[%s188 + $0x300] sm:$0xff]
        %v297 = vld [vmem:[%s188 + $0x308] sm:$0xff]
        %v298 = vld [vmem:[%s188 + $0x310] sm:$0xff]
        %v299 = vld [vmem:[%s188 + $0x318] sm:$0xff]
        %v300 = vld [vmem:[%s188 + $0x320] sm:$0xff]
        %v301 = vld [vmem:[%s188 + $0x328] sm:$0xff]
        %v302 = vld [vmem:[%s188 + $0x330] sm:$0xff]
        %v303 = vld [vmem:[%s188 + $0x338] sm:$0xff]
        %v304 = vld [vmem:[%s188 + $0x340] sm:$0xff]
        %v305 = vld [vmem:[%s188 + $0x348] sm:$0xff]
        %v306 = vld [vmem:[%s188 + $0x350] sm:$0xff]
        %v307 = vld [vmem:[%s188 + $0x358] sm:$0xff]
        %v308 = vld [vmem:[%s188 + $0x360] sm:$0xff]
        %v309 = vld [vmem:[%s188 + $0x368] sm:$0xff]
        %v310 = vld [vmem:[%s188 + $0x370] sm:$0xff]
        %v311 = vld [vmem:[%s188 + $0x378] sm:$0xff]
        %v312 = vld [vmem:[%s188 + $0x380] sm:$0xff]
        %v313 = vld [vmem:[%s188 + $0x388] sm:$0xff]
        %v314 = vld [vmem:[%s188 + $0x390] sm:$0xff]
        %v315 = vld [vmem:[%s188 + $0x398] sm:$0xff]
        %v316 = vld [vmem:[%s188 + $0x3a0] sm:$0xff]
        %v317 = vld [vmem:[%s188 + $0x3a8] sm:$0xff]
        %v318 = vld [vmem:[%s188 + $0x3b0] sm:$0xff]
        %v319 = vld [vmem:[%s188 + $0x3b8] sm:$0xff]
        %v320 = vld [vmem:[%s188 + $0x3c0] sm:$0xff]
        %v321 = vld [vmem:[%s188 + $0x3c8] sm:$0xff]
        %v322 = vld [vmem:[%s188 + $0x3d0] sm:$0xff]
        %v323 = vld [vmem:[%s188 + $0x3d8] sm:$0xff]
        %v324 = vld [vmem:[%s188 + $0x3e0] sm:$0xff]
        %v325 = vld [vmem:[%s188 + $0x3e8] sm:$0xff]
        %v326 = vld [vmem:[%s188 + $0x3f0] sm:$0xff]
        %v327 = vld [vmem:[%s188 + $0x3f8] sm:$0xff]
        %v328 = vld [vmem:[%s1] sm:$0xff]
        %v329 = vld [vmem:[%s1 + $0x8] sm:$0xff]
        %v330 = vld [vmem:[%s1 + $0x10] sm:$0xff]
        %v331 = vld [vmem:[%s1 + $0x18] sm:$0xff]
        %v332 = vld [vmem:[%s1 + $0x20] sm:$0xff]
        %v333 = vld [vmem:[%s1 + $0x28] sm:$0xff]
        %v334 = vld [vmem:[%s1 + $0x30] sm:$0xff]
        %v335 = vld [vmem:[%s1 + $0x38] sm:$0xff]
        %v336 = vld [vmem:[%s1 + $0x40] sm:$0xff]
        %v337 = vld [vmem:[%s1 + $0x48] sm:$0xff]
        %v338 = vld [vmem:[%s1 + $0x50] sm:$0xff]
        %v339 = vld [vmem:[%s1 + $0x58] sm:$0xff]
        %v340 = vld [vmem:[%s1 + $0x60] sm:$0xff]
        %v341 = vld [vmem:[%s1 + $0x68] sm:$0xff]
        %v342 = vld [vmem:[%s1 + $0x70] sm:$0xff]
        %v343 = vld [vmem:[%s1 + $0x78] sm:$0xff]
        %v344 = vld [vmem:[%s1 + $0x80] sm:$0xff]
        %v345 = vld [vmem:[%s1 + $0x88] sm:$0xff]
        %v346 = vld [vmem:[%s1 + $0x90] sm:$0xff]
        %v347 = vld [vmem:[%s1 + $0x98] sm:$0xff]
        %v348 = vld [vmem:[%s1 + $0xa0] sm:$0xff]
        %v349 = vld [vmem:[%s1 + $0xa8] sm:$0xff]
        %v350 = vld [vmem:[%s1 + $0xb0] sm:$0xff]
        %v351 = vld [vmem:[%s1 + $0xb8] sm:$0xff]
        %v352 = vld [vmem:[%s1 + $0xc0] sm:$0xff]
        %v353 = vld [vmem:[%s1 + $0xc8] sm:$0xff]
        %v354 = vld [vmem:[%s1 + $0xd0] sm:$0xff]
        %v355 = vld [vmem:[%s1 + $0xd8] sm:$0xff]
        %v356 = vld [vmem:[%s1 + $0xe0] sm:$0x1]
        %v357 = vld [vmem:[%s2] sm:$0x1]
        %v359 = vlaneseq
        %v360 = vshrl.u32 %v359, 7
        %v361 = vsub.s32 0, %v360
        %v362 = vrot.slane %v357, %v361
        %vm364 = vcmask 793600
        %v366 = vsel %vm364, %v201, 0
        %v369 = vsel %vm364, %v203, 0
        %v372 = vsel %vm364, %v205, 0
        %v375 = vsel %vm364, %v207, 0
        %v378 = vsel %vm364, %v209, 0
        %v381 = vsel %vm364, %v211, 0
        %v384 = vsel %vm364, %v213, 0
        %v387 = vsel %vm364, %v215, 0
        %v390 = vsel %vm364, %v217, 0
        %v393 = vsel %vm364, %v219, 0
        %v396 = vsel %vm364, %v221, 0
        %v399 = vsel %vm364, %v223, 0
        %v402 = vsel %vm364, %v225, 0
        %v405 = vsel %vm364, %v227, 0
        %v408 = vsel %vm364, %v229, 0
        %v411 = vsel %vm364, %v231, 0
        %v414 = vsel %vm364, %v233, 0
        %v417 = vsel %vm364, %v235, 0
        %v420 = vsel %vm364, %v237, 0
        %v423 = vsel %vm364, %v239, 0
        %v426 = vsel %vm364, %v241, 0
        %v429 = vsel %vm364, %v243, 0
        %v432 = vsel %vm364, %v245, 0
        %v435 = vsel %vm364, %v247, 0
        %v438 = vsel %vm364, %v249, 0
        %v441 = vsel %vm364, %v251, 0
        %v444 = vsel %vm364, %v253, 0
        %v447 = vsel %vm364, %v255, 0
        %v450 = vsel %vm364, %v257, 0
        %v453 = vsel %vm364, %v259, 0
        %v456 = vsel %vm364, %v261, 0
        %v459 = vsel %vm364, %v263, 0
        %v462 = vsel %vm364, %v265, 0
        %v465 = vsel %vm364, %v267, 0
        %v468 = vsel %vm364, %v269, 0
        %v471 = vsel %vm364, %v271, 0
        %v474 = vsel %vm364, %v273, 0
        %v477 = vsel %vm364, %v275, 0
        %v480 = vsel %vm364, %v277, 0
        %v483 = vsel %vm364, %v279, 0
        %v486 = vsel %vm364, %v281, 0
        %v489 = vsel %vm364, %v283, 0
        %v492 = vsel %vm364, %v285, 0
        %v495 = vsel %vm364, %v287, 0
        %v498 = vsel %vm364, %v289, 0
        %v501 = vsel %vm364, %v291, 0
        %v504 = vsel %vm364, %v293, 0
        %v507 = vsel %vm364, %v295, 0
        %v510 = vsel %vm364, %v297, 0
        %v513 = vsel %vm364, %v299, 0
        %v516 = vsel %vm364, %v301, 0
        %v519 = vsel %vm364, %v303, 0
        %v522 = vsel %vm364, %v305, 0
        %v525 = vsel %vm364, %v307, 0
        %v528 = vsel %vm364, %v309, 0
        %v531 = vsel %vm364, %v311, 0
        %v534 = vsel %vm364, %v313, 0
        %v537 = vsel %vm364, %v315, 0
        %v540 = vsel %vm364, %v317, 0
        %v543 = vsel %vm364, %v319, 0
        %v546 = vsel %vm364, %v321, 0
        %v549 = vsel %vm364, %v323, 0
        %v552 = vsel %vm364, %v325, 0
        %v555 = vsel %vm364, %v327, 0
        %vm557 = vcmask 1040384
        %v559 = vsel %vm557, %v356, 0
        %561 = vmatprep.subr.mxu0 0.0
        %562 = vmatpush1.msra.mxu0 %v328
        %563 = vmatprep.subr.mxu0 0.0
        %564 = vmatpush1.msra.mxu0 %v329
        %565 = vmatprep.subr.mxu0 0.0
        %566 = vmatpush1.msra.mxu0 %v330
        %567 = vmatprep.subr.mxu0 0.0
        %568 = vmatpush1.msra.mxu0 %v331
        %569 = vmatprep.subr.mxu0 0.0
        %570 = vmatpush1.msra.mxu0 %v332
        %571 = vmatprep.subr.mxu0 0.0
        %572 = vmatpush1.msra.mxu0 %v333
        %573 = vmatprep.subr.mxu0 0.0
        %574 = vmatpush1.msra.mxu0 %v334
        %575 = vmatprep.subr.mxu0 0.0
        %576 = vmatpush1.msra.mxu0 %v335
        %577 = vmatprep.subr.mxu0 0.0
        %578 = vmatpush1.msra.mxu0 %v336
        %579 = vmatprep.subr.mxu0 0.0
        %580 = vmatpush1.msra.mxu0 %v337
        %581 = vmatprep.subr.mxu0 0.0
        %582 = vmatpush1.msra.mxu0 %v338
        %583 = vmatprep.subr.mxu0 0.0
        %584 = vmatpush1.msra.mxu0 %v339
        %585 = vmatprep.subr.mxu0 0.0
        %586 = vmatpush1.msra.mxu0 %v340
        %587 = vmatprep.subr.mxu0 0.0
        %588 = vmatpush1.msra.mxu0 %v341
        %589 = vmatprep.subr.mxu0 0.0
        %590 = vmatpush1.msra.mxu0 %v342
        %591 = vmatprep.subr.mxu0 0.0
        %592 = vmatpush1.msra.mxu0 %v343
        %593 = vmatprep.subr.mxu0 0.0
        %594 = vmatpush1.msra.mxu0 %v344
        %595 = vmatprep.subr.mxu0 0.0
        %596 = vmatpush1.msra.mxu0 %v345
        %597 = vmatprep.subr.mxu0 0.0
        %598 = vmatpush1.msra.mxu0 %v346
        %599 = vmatprep.subr.mxu0 0.0
        %600 = vmatpush1.msra.mxu0 %v347
        %601 = vmatprep.subr.mxu0 0.0
        %602 = vmatpush1.msra.mxu0 %v348
        %603 = vmatprep.subr.mxu0 0.0
        %604 = vmatpush1.msra.mxu0 %v349
        %605 = vmatprep.subr.mxu0 0.0
        %606 = vmatpush1.msra.mxu0 %v350
        %607 = vmatprep.subr.mxu0 0.0
        %608 = vmatpush1.msra.mxu0 %v351
        %609 = vmatprep.subr.mxu0 0.0
        %610 = vmatpush1.msra.mxu0 %v352
        %611 = vmatprep.subr.mxu0 0.0
        %612 = vmatpush1.msra.mxu0 %v353
        %613 = vmatprep.subr.mxu0 0.0
        %614 = vmatpush1.msra.mxu0 %v354
        %615 = vmatprep.subr.mxu0 0.0
        %616 = vmatpush1.msra.mxu0 %v355
        %617 = vmatprep.subr.mxu0 0.0
        %618 = vmatpush1.msra.mxu0 %v559
        %619 = vmatprep.subr.mxu0 0.0
        %620 = vmatpush1.msra.mxu0 0.0
        %621 = vmatprep.subr.mxu0 0.0
        %622 = vmatpush1.msra.mxu0 0.0
        %623 = vmatprep.subr.mxu0 0.0
        %624 = vmatpush1.msra.mxu0 0.0
        %625 = vmatprep.mubr.f32.mxu0 %v366
        %626 = vmatmul.mubr.f32.gmra.mrb[0].mxu0 %v200
        %v627 = vpop.f32.mrb[0].mxu0
        %v628 = vadd.f32 %v362, %v627
        %v629 = vpop.f32.mrb[0].mxu0
        %630 = vmatprep.mubr.f32.mxu0 %v369
        %631 = vmatmul.mubr.f32.gmra.mrb[0].mxu0 %v202
        %v632 = vpop.f32.mrb[0].mxu0
        %v633 = vadd.f32 %v362, %v632
        %v634 = vpop.f32.mrb[0].mxu0
        %635 = vmatprep.mubr.f32.mxu0 %v372
        %636 = vmatmul.mubr.f32.gmra.mrb[0].mxu0 %v204
        %v637 = vpop.f32.mrb[0].mxu0
        %v638 = vadd.f32 %v362, %v637
        %v639 = vpop.f32.mrb[0].mxu0
        %640 = vmatprep.mubr.f32.mxu0 %v375
        %641 = vmatmul.mubr.f32.gmra.mrb[0].mxu0 %v206
        %v642 = vpop.f32.mrb[0].mxu0
        %v643 = vadd.f32 %v362, %v642
        %v644 = vpop.f32.mrb[0].mxu0
        %645 = vmatprep.mubr.f32.mxu0 %v378
        %646 = vmatmul.mubr.f32.gmra.mrb[0].mxu0 %v208
        %v647 = vpop.f32.mrb[0].mxu0
        %v648 = vadd.f32 %v362, %v647
        %v649 = vpop.f32.mrb[0].mxu0
        %650 = vmatprep.mubr.f32.mxu0 %v381
        %651 = vmatmul.mubr.f32.gmra.mrb[0].mxu0 %v210
        %v652 = vpop.f32.mrb[0].mxu0
        %v653 = vadd.f32 %v362, %v652
        %v654 = vpop.f32.mrb[0].mxu0
        %655 = vmatprep.mubr.f32.mxu0 %v384
        %656 = vmatmul.mubr.f32.gmra.mrb[0].mxu0 %v212
        %v657 = vpop.f32.mrb[0].mxu0
        %v658 = vadd.f32 %v362, %v657
        %v659 = vpop.f32.mrb[0].mxu0
        %660 = vmatprep.mubr.f32.mxu0 %v387
        %661 = vmatmul.mubr.f32.gmra.mrb[0].mxu0 %v214
        %v662 = vpop.f32.mrb[0].mxu0
        %v663 = vadd.f32 %v362, %v662
        %v664 = vpop.f32.mrb[0].mxu0
        %665 = vmatprep.mubr.f32.mxu0 %v390
        %666 = vmatmul.mubr.f32.gmra.mrb[0].mxu0 %v216
        %v667 = vpop.f32.mrb[0].mxu0
        %v668 = vadd.f32 %v362, %v667
        %v669 = vpop.f32.mrb[0].mxu0
        %670 = vmatprep.mubr.f32.mxu0 %v393
        %671 = vmatmul.mubr.f32.gmra.mrb[0].mxu0 %v218
        %v672 = vpop.f32.mrb[0].mxu0
        %v673 = vadd.f32 %v362, %v672
        %v674 = vpop.f32.mrb[0].mxu0
        %675 = vmatprep.mubr.f32.mxu0 %v396
        %676 = vmatmul.mubr.f32.gmra.mrb[0].mxu0 %v220
        %v677 = vpop.f32.mrb[0].mxu0
        %v678 = vadd.f32 %v362, %v677
        %v679 = vpop.f32.mrb[0].mxu0
        %680 = vmatprep.mubr.f32.mxu0 %v399
        %681 = vmatmul.mubr.f32.gmra.mrb[0].mxu0 %v222
        %v682 = vpop.f32.mrb[0].mxu0
        %v683 = vadd.f32 %v362, %v682
        %v684 = vpop.f32.mrb[0].mxu0
        %685 = vmatprep.mubr.f32.mxu0 %v402
        %686 = vmatmul.mubr.f32.gmra.mrb[0].mxu0 %v224
        %v687 = vpop.f32.mrb[0].mxu0
        %v688 = vadd.f32 %v362, %v687
        %v689 = vpop.f32.mrb[0].mxu0
        %690 = vmatprep.mubr.f32.mxu0 %v405
        %691 = vmatmul.mubr.f32.gmra.mrb[0].mxu0 %v226
        %v692 = vpop.f32.mrb[0].mxu0
        %v693 = vadd.f32 %v362, %v692
        %v694 = vpop.f32.mrb[0].mxu0
        %695 = vmatprep.mubr.f32.mxu0 %v408
        %696 = vmatmul.mubr.f32.gmra.mrb[0].mxu0 %v228
        %v697 = vpop.f32.mrb[0].mxu0
        %v698 = vadd.f32 %v362, %v697
        %v699 = vpop.f32.mrb[0].mxu0
        %700 = vmatprep.mubr.f32.mxu0 %v411
        %701 = vmatmul.mubr.f32.gmra.mrb[0].mxu0 %v230
        %v702 = vpop.f32.mrb[0].mxu0
        %v703 = vadd.f32 %v362, %v702
        %v704 = vpop.f32.mrb[0].mxu0
        %705 = vmatprep.mubr.f32.mxu0 %v414
        %706 = vmatmul.mubr.f32.gmra.mrb[0].mxu0 %v232
        %v707 = vpop.f32.mrb[0].mxu0
        %v708 = vadd.f32 %v362, %v707
        %v709 = vpop.f32.mrb[0].mxu0
        %710 = vmatprep.mubr.f32.mxu0 %v417
        %711 = vmatmul.mubr.f32.gmra.mrb[0].mxu0 %v234
        %v712 = vpop.f32.mrb[0].mxu0
        %v713 = vadd.f32 %v362, %v712
        %v714 = vpop.f32.mrb[0].mxu0
        %715 = vmatprep.mubr.f32.mxu0 %v420
        %716 = vmatmul.mubr.f32.gmra.mrb[0].mxu0 %v236
        %v717 = vpop.f32.mrb[0].mxu0
        %v718 = vadd.f32 %v362, %v717
        %v719 = vpop.f32.mrb[0].mxu0
        %720 = vmatprep.mubr.f32.mxu0 %v423
        %721 = vmatmul.mubr.f32.gmra.mrb[0].mxu0 %v238
        %v722 = vpop.f32.mrb[0].mxu0
        %v723 = vadd.f32 %v362, %v722
        %v724 = vpop.f32.mrb[0].mxu0
        %725 = vmatprep.mubr.f32.mxu0 %v426
        %726 = vmatmul.mubr.f32.gmra.mrb[0].mxu0 %v240
        %v727 = vpop.f32.mrb[0].mxu0
        %v728 = vadd.f32 %v362, %v727
        %v729 = vpop.f32.mrb[0].mxu0
        %730 = vmatprep.mubr.f32.mxu0 %v429
        %731 = vmatmul.mubr.f32.gmra.mrb[0].mxu0 %v242
        %v732 = vpop.f32.mrb[0].mxu0
        %v733 = vadd.f32 %v362, %v732
        %v734 = vpop.f32.mrb[0].mxu0
        %735 = vmatprep.mubr.f32.mxu0 %v432
        %736 = vmatmul.mubr.f32.gmra.mrb[0].mxu0 %v244
        %v737 = vpop.f32.mrb[0].mxu0
        %v738 = vadd.f32 %v362, %v737
        %v739 = vpop.f32.mrb[0].mxu0
        %740 = vmatprep.mubr.f32.mxu0 %v435
        %741 = vmatmul.mubr.f32.gmra.mrb[0].mxu0 %v246
        %v742 = vpop.f32.mrb[0].mxu0
        %v743 = vadd.f32 %v362, %v742
        %v744 = vpop.f32.mrb[0].mxu0
        %745 = vmatprep.mubr.f32.mxu0 %v438
        %746 = vmatmul.mubr.f32.gmra.mrb[0].mxu0 %v248
        %v747 = vpop.f32.mrb[0].mxu0
        %v748 = vadd.f32 %v362, %v747
        %v749 = vpop.f32.mrb[0].mxu0
        %750 = vmatprep.mubr.f32.mxu0 %v441
        %751 = vmatmul.mubr.f32.gmra.mrb[0].mxu0 %v250
        %v752 = vpop.f32.mrb[0].mxu0
        %v753 = vadd.f32 %v362, %v752
        %v754 = vpop.f32.mrb[0].mxu0
        %755 = vmatprep.mubr.f32.mxu0 %v444
        %756 = vmatmul.mubr.f32.gmra.mrb[0].mxu0 %v252
        %v757 = vpop.f32.mrb[0].mxu0
        %v758 = vadd.f32 %v362, %v757
        %v759 = vpop.f32.mrb[0].mxu0
        %760 = vmatprep.mubr.f32.mxu0 %v447
        %761 = vmatmul.mubr.f32.gmra.mrb[0].mxu0 %v254
        %v762 = vpop.f32.mrb[0].mxu0
        %v763 = vadd.f32 %v362, %v762
        %v764 = vpop.f32.mrb[0].mxu0
        %765 = vmatprep.mubr.f32.mxu0 %v450
        %766 = vmatmul.mubr.f32.gmra.mrb[0].mxu0 %v256
        %v767 = vpop.f32.mrb[0].mxu0
        %v768 = vadd.f32 %v362, %v767
        %v769 = vpop.f32.mrb[0].mxu0
        %770 = vmatprep.mubr.f32.mxu0 %v453
        %771 = vmatmul.mubr.f32.gmra.mrb[0].mxu0 %v258
        %v772 = vpop.f32.mrb[0].mxu0
        %v773 = vadd.f32 %v362, %v772
        %v774 = vpop.f32.mrb[0].mxu0
        %775 = vmatprep.mubr.f32.mxu0 %v456
        %776 = vmatmul.mubr.f32.gmra.mrb[0].mxu0 %v260
        %v777 = vpop.f32.mrb[0].mxu0
        %v778 = vadd.f32 %v362, %v777
        %v779 = vpop.f32.mrb[0].mxu0
        %780 = vmatprep.mubr.f32.mxu0 %v459
        %781 = vmatmul.mubr.f32.gmra.mrb[0].mxu0 %v262
        %v782 = vpop.f32.mrb[0].mxu0
        %v783 = vadd.f32 %v362, %v782
        %v784 = vpop.f32.mrb[0].mxu0
        %785 = vmatprep.mubr.f32.mxu0 %v462
        %786 = vmatmul.mubr.f32.gmra.mrb[0].mxu0 %v264
        %v787 = vpop.f32.mrb[0].mxu0
        %v788 = vadd.f32 %v362, %v787
        %v789 = vpop.f32.mrb[0].mxu0
        %790 = vmatprep.mubr.f32.mxu0 %v465
        %791 = vmatmul.mubr.f32.gmra.mrb[0].mxu0 %v266
        %v792 = vpop.f32.mrb[0].mxu0
        %v793 = vadd.f32 %v362, %v792
        %v794 = vpop.f32.mrb[0].mxu0
        %795 = vmatprep.mubr.f32.mxu0 %v468
        %796 = vmatmul.mubr.f32.gmra.mrb[0].mxu0 %v268
        %v797 = vpop.f32.mrb[0].mxu0
        %v798 = vadd.f32 %v362, %v797
        %v799 = vpop.f32.mrb[0].mxu0
        %800 = vmatprep.mubr.f32.mxu0 %v471
        %801 = vmatmul.mubr.f32.gmra.mrb[0].mxu0 %v270
        %v802 = vpop.f32.mrb[0].mxu0
        %v803 = vadd.f32 %v362, %v802
        %v804 = vpop.f32.mrb[0].mxu0
        %805 = vmatprep.mubr.f32.mxu0 %v474
        %806 = vmatmul.mubr.f32.gmra.mrb[0].mxu0 %v272
        %v807 = vpop.f32.mrb[0].mxu0
        %v808 = vadd.f32 %v362, %v807
        %v809 = vpop.f32.mrb[0].mxu0
        %810 = vmatprep.mubr.f32.mxu0 %v477
        %811 = vmatmul.mubr.f32.gmra.mrb[0].mxu0 %v274
        %v812 = vpop.f32.mrb[0].mxu0
        %v813 = vadd.f32 %v362, %v812
        %v814 = vpop.f32.mrb[0].mxu0
        %815 = vmatprep.mubr.f32.mxu0 %v480
        %816 = vmatmul.mubr.f32.gmra.mrb[0].mxu0 %v276
        %v817 = vpop.f32.mrb[0].mxu0
        %v818 = vadd.f32 %v362, %v817
        %v819 = vpop.f32.mrb[0].mxu0
        %820 = vmatprep.mubr.f32.mxu0 %v483
        %821 = vmatmul.mubr.f32.gmra.mrb[0].mxu0 %v278
        %v822 = vpop.f32.mrb[0].mxu0
        %v823 = vadd.f32 %v362, %v822
        %v824 = vpop.f32.mrb[0].mxu0
        %825 = vmatprep.mubr.f32.mxu0 %v486
        %826 = vmatmul.mubr.f32.gmra.mrb[0].mxu0 %v280
        %v827 = vpop.f32.mrb[0].mxu0
        %v828 = vadd.f32 %v362, %v827
        %v829 = vpop.f32.mrb[0].mxu0
        %830 = vmatprep.mubr.f32.mxu0 %v489
        %831 = vmatmul.mubr.f32.gmra.mrb[0].mxu0 %v282
        %v832 = vpop.f32.mrb[0].mxu0
        %v833 = vadd.f32 %v362, %v832
        %v834 = vpop.f32.mrb[0].mxu0
        %835 = vmatprep.mubr.f32.mxu0 %v492
        %836 = vmatmul.mubr.f32.gmra.mrb[0].mxu0 %v284
        %v837 = vpop.f32.mrb[0].mxu0
        %v838 = vadd.f32 %v362, %v837
        %v839 = vpop.f32.mrb[0].mxu0
        %840 = vmatprep.mubr.f32.mxu0 %v495
        %841 = vmatmul.mubr.f32.gmra.mrb[0].mxu0 %v286
        %v842 = vpop.f32.mrb[0].mxu0
        %v843 = vadd.f32 %v362, %v842
        %v844 = vpop.f32.mrb[0].mxu0
        %845 = vmatprep.mubr.f32.mxu0 %v498
        %846 = vmatmul.mubr.f32.gmra.mrb[0].mxu0 %v288
        %v847 = vpop.f32.mrb[0].mxu0
        %v848 = vadd.f32 %v362, %v847
        %v849 = vpop.f32.mrb[0].mxu0
        %850 = vmatprep.mubr.f32.mxu0 %v501
        %851 = vmatmul.mubr.f32.gmra.mrb[0].mxu0 %v290
        %v852 = vpop.f32.mrb[0].mxu0
        %v853 = vadd.f32 %v362, %v852
        %v854 = vpop.f32.mrb[0].mxu0
        %855 = vmatprep.mubr.f32.mxu0 %v504
        %856 = vmatmul.mubr.f32.gmra.mrb[0].mxu0 %v292
        %v857 = vpop.f32.mrb[0].mxu0
        %v858 = vadd.f32 %v362, %v857
        %v859 = vpop.f32.mrb[0].mxu0
        %860 = vmatprep.mubr.f32.mxu0 %v507
        %861 = vmatmul.mubr.f32.gmra.mrb[0].mxu0 %v294
        %v862 = vpop.f32.mrb[0].mxu0
        %v863 = vadd.f32 %v362, %v862
        %v864 = vpop.f32.mrb[0].mxu0
        %865 = vmatprep.mubr.f32.mxu0 %v510
        %866 = vmatmul.mubr.f32.gmra.mrb[0].mxu0 %v296
        %v867 = vpop.f32.mrb[0].mxu0
        %v868 = vadd.f32 %v362, %v867
        %v869 = vpop.f32.mrb[0].mxu0
        %870 = vmatprep.mubr.f32.mxu0 %v513
        %871 = vmatmul.mubr.f32.gmra.mrb[0].mxu0 %v298
        %v872 = vpop.f32.mrb[0].mxu0
        %v873 = vadd.f32 %v362, %v872
        %v874 = vpop.f32.mrb[0].mxu0
        %875 = vmatprep.mubr.f32.mxu0 %v516
        %876 = vmatmul.mubr.f32.gmra.mrb[0].mxu0 %v300
        %v877 = vpop.f32.mrb[0].mxu0
        %v878 = vadd.f32 %v362, %v877
        %v879 = vpop.f32.mrb[0].mxu0
        %880 = vmatprep.mubr.f32.mxu0 %v519
        %881 = vmatmul.mubr.f32.gmra.mrb[0].mxu0 %v302
        %v882 = vpop.f32.mrb[0].mxu0
        %v883 = vadd.f32 %v362, %v882
        %v884 = vpop.f32.mrb[0].mxu0
        %885 = vmatprep.mubr.f32.mxu0 %v522
        %886 = vmatmul.mubr.f32.gmra.mrb[0].mxu0 %v304
        %v887 = vpop.f32.mrb[0].mxu0
        %v888 = vadd.f32 %v362, %v887
        %v889 = vpop.f32.mrb[0].mxu0
        %890 = vmatprep.mubr.f32.mxu0 %v525
        %891 = vmatmul.mubr.f32.gmra.mrb[0].mxu0 %v306
        %v892 = vpop.f32.mrb[0].mxu0
        %v893 = vadd.f32 %v362, %v892
        %v894 = vpop.f32.mrb[0].mxu0
        %895 = vmatprep.mubr.f32.mxu0 %v528
        %896 = vmatmul.mubr.f32.gmra.mrb[0].mxu0 %v308
        %v897 = vpop.f32.mrb[0].mxu0
        %v898 = vadd.f32 %v362, %v897
        %v899 = vpop.f32.mrb[0].mxu0
        %900 = vmatprep.mubr.f32.mxu0 %v531
        %901 = vmatmul.mubr.f32.gmra.mrb[0].mxu0 %v310
        %v902 = vpop.f32.mrb[0].mxu0
        %v903 = vadd.f32 %v362, %v902
        %v904 = vpop.f32.mrb[0].mxu0
        %905 = vmatprep.mubr.f32.mxu0 %v534
        %906 = vmatmul.mubr.f32.gmra.mrb[0].mxu0 %v312
        %v907 = vpop.f32.mrb[0].mxu0
        %v908 = vadd.f32 %v362, %v907
        %v909 = vpop.f32.mrb[0].mxu0
        %910 = vmatprep.mubr.f32.mxu0 %v537
        %911 = vmatmul.mubr.f32.gmra.mrb[0].mxu0 %v314
        %v912 = vpop.f32.mrb[0].mxu0
        %v913 = vadd.f32 %v362, %v912
        %v914 = vpop.f32.mrb[0].mxu0
        %915 = vmatprep.mubr.f32.mxu0 %v540
        %916 = vmatmul.mubr.f32.gmra.mrb[0].mxu0 %v316
        %v917 = vpop.f32.mrb[0].mxu0
        %v918 = vadd.f32 %v362, %v917
        %v919 = vpop.f32.mrb[0].mxu0
        %920 = vmatprep.mubr.f32.mxu0 %v543
        %921 = vmatmul.mubr.f32.gmra.mrb[0].mxu0 %v318
        %v922 = vpop.f32.mrb[0].mxu0
        %v923 = vadd.f32 %v362, %v922
        %v924 = vpop.f32.mrb[0].mxu0
        %925 = vmatprep.mubr.f32.mxu0 %v546
        %926 = vmatmul.mubr.f32.gmra.mrb[0].mxu0 %v320
        %v927 = vpop.f32.mrb[0].mxu0
        %v928 = vadd.f32 %v362, %v927
        %v929 = vpop.f32.mrb[0].mxu0
        %930 = vmatprep.mubr.f32.mxu0 %v549
        %931 = vmatmul.mubr.f32.gmra.mrb[0].mxu0 %v322
        %v932 = vpop.f32.mrb[0].mxu0
        %v933 = vadd.f32 %v362, %v932
        %v934 = vpop.f32.mrb[0].mxu0
        %935 = vmatprep.mubr.f32.mxu0 %v552
        %936 = vmatmul.mubr.f32.gmra.mrb[0].mxu0 %v324
        %v937 = vpop.f32.mrb[0].mxu0
        %v938 = vadd.f32 %v362, %v937
        %v939 = vpop.f32.mrb[0].mxu0
        %940 = vmatprep.mubr.f32.mxu0 %v555
        %941 = vmatmul.mubr.f32.gmra.mrb[0].mxu0 %v326
        %v942 = vpop.f32.mrb[0].mxu0
        %v943 = vadd.f32 %v362, %v942
        %v944 = vpop.f32.mrb[0].mxu0
        %945 = vdwg.mxu0
        %vm946 = vcmp.gt.f32.partialorder %v628, 0.0
        %vm947 = vcmp.gt.f32.partialorder %v633, 0.0
        %vm948 = vcmp.gt.f32.partialorder %v638, 0.0
        %vm949 = vcmp.gt.f32.partialorder %v643, 0.0
        %vm950 = vcmp.gt.f32.partialorder %v648, 0.0
        %vm951 = vcmp.gt.f32.partialorder %v653, 0.0
        %vm952 = vcmp.gt.f32.partialorder %v658, 0.0
        %vm953 = vcmp.gt.f32.partialorder %v663, 0.0
        %vm954 = vcmp.gt.f32.partialorder %v668, 0.0
        %vm955 = vcmp.gt.f32.partialorder %v673, 0.0
        %vm956 = vcmp.gt.f32.partialorder %v678, 0.0
        %vm957 = vcmp.gt.f32.partialorder %v683, 0.0
        %vm958 = vcmp.gt.f32.partialorder %v688, 0.0
        %vm959 = vcmp.gt.f32.partialorder %v693, 0.0
        %vm960 = vcmp.gt.f32.partialorder %v698, 0.0
        %vm961 = vcmp.gt.f32.partialorder %v703, 0.0
        %vm962 = vcmp.gt.f32.partialorder %v708, 0.0
        %vm963 = vcmp.gt.f32.partialorder %v713, 0.0
        %vm964 = vcmp.gt.f32.partialorder %v718, 0.0
        %vm965 = vcmp.gt.f32.partialorder %v723, 0.0
        %vm966 = vcmp.gt.f32.partialorder %v728, 0.0
        %vm967 = vcmp.gt.f32.partialorder %v733, 0.0
        %vm968 = vcmp.gt.f32.partialorder %v738, 0.0
        %vm969 = vcmp.gt.f32.partialorder %v743, 0.0
        %vm970 = vcmp.gt.f32.partialorder %v748, 0.0
        %vm971 = vcmp.gt.f32.partialorder %v753, 0.0
        %vm972 = vcmp.gt.f32.partialorder %v758, 0.0
        %vm973 = vcmp.gt.f32.partialorder %v763, 0.0
        %vm974 = vcmp.gt.f32.partialorder %v768, 0.0
        %vm975 = vcmp.gt.f32.partialorder %v773, 0.0
        %vm976 = vcmp.gt.f32.partialorder %v778, 0.0
        %vm977 = vcmp.gt.f32.partialorder %v783, 0.0
        %vm978 = vcmp.gt.f32.partialorder %v788, 0.0
        %vm979 = vcmp.gt.f32.partialorder %v793, 0.0
        %vm980 = vcmp.gt.f32.partialorder %v798, 0.0
        %vm981 = vcmp.gt.f32.partialorder %v803, 0.0
        %vm982 = vcmp.gt.f32.partialorder %v808, 0.0
        %vm983 = vcmp.gt.f32.partialorder %v813, 0.0
        %vm984 = vcmp.gt.f32.partialorder %v818, 0.0
        %vm985 = vcmp.gt.f32.partialorder %v823, 0.0
        %vm986 = vcmp.gt.f32.partialorder %v828, 0.0
        %vm987 = vcmp.gt.f32.partialorder %v833, 0.0
        %vm988 = vcmp.gt.f32.partialorder %v838, 0.0
        %vm989 = vcmp.gt.f32.partialorder %v843, 0.0
        %vm990 = vcmp.gt.f32.partialorder %v848, 0.0
        %vm991 = vcmp.gt.f32.partialorder %v853, 0.0
        %vm992 = vcmp.gt.f32.partialorder %v858, 0.0
        %vm993 = vcmp.gt.f32.partialorder %v863, 0.0
        %vm994 = vcmp.gt.f32.partialorder %v868, 0.0
        %vm995 = vcmp.gt.f32.partialorder %v873, 0.0
        %vm996 = vcmp.gt.f32.partialorder %v878, 0.0
        %vm997 = vcmp.gt.f32.partialorder %v883, 0.0
        %vm998 = vcmp.gt.f32.partialorder %v888, 0.0
        %vm999 = vcmp.gt.f32.partialorder %v893, 0.0
        %vm1000 = vcmp.gt.f32.partialorder %v898, 0.0
        %vm1001 = vcmp.gt.f32.partialorder %v903, 0.0
        %vm1002 = vcmp.gt.f32.partialorder %v908, 0.0
        %vm1003 = vcmp.gt.f32.partialorder %v913, 0.0
        %vm1004 = vcmp.gt.f32.partialorder %v918, 0.0
        %vm1005 = vcmp.gt.f32.partialorder %v923, 0.0
        %vm1006 = vcmp.gt.f32.partialorder %v928, 0.0
        %vm1007 = vcmp.gt.f32.partialorder %v933, 0.0
        %vm1008 = vcmp.gt.f32.partialorder %v938, 0.0
        %vm1009 = vcmp.gt.f32.partialorder %v943, 0.0
        %v1010 = vmin.f32 %v628, 0.0
        %v1011 = vmin.f32 %v633, 0.0
        %v1012 = vmin.f32 %v638, 0.0
        %v1013 = vmin.f32 %v643, 0.0
        %v1014 = vmin.f32 %v648, 0.0
        %v1015 = vmin.f32 %v653, 0.0
        %v1016 = vmin.f32 %v658, 0.0
        %v1017 = vmin.f32 %v663, 0.0
        %v1018 = vmin.f32 %v668, 0.0
        %v1019 = vmin.f32 %v673, 0.0
        %v1020 = vmin.f32 %v678, 0.0
        %v1021 = vmin.f32 %v683, 0.0
        %v1022 = vmin.f32 %v688, 0.0
        %v1023 = vmin.f32 %v693, 0.0
        %v1024 = vmin.f32 %v698, 0.0
        %v1025 = vmin.f32 %v703, 0.0
        %v1026 = vmin.f32 %v708, 0.0
        %v1027 = vmin.f32 %v713, 0.0
        %v1028 = vmin.f32 %v718, 0.0
        %v1029 = vmin.f32 %v723, 0.0
        %v1030 = vmin.f32 %v728, 0.0
        %v1031 = vmin.f32 %v733, 0.0
        %v1032 = vmin.f32 %v738, 0.0
        %v1033 = vmin.f32 %v743, 0.0
        %v1034 = vmin.f32 %v748, 0.0
        %v1035 = vmin.f32 %v753, 0.0
        %v1036 = vmin.f32 %v758, 0.0
        %v1037 = vmin.f32 %v763, 0.0
        %v1038 = vmin.f32 %v768, 0.0
        %v1039 = vmin.f32 %v773, 0.0
        %v1040 = vmin.f32 %v778, 0.0
        %v1041 = vmin.f32 %v783, 0.0
        %v1042 = vmin.f32 %v788, 0.0
        %v1043 = vmin.f32 %v793, 0.0
        %v1044 = vmin.f32 %v798, 0.0
        %v1045 = vmin.f32 %v803, 0.0
        %v1046 = vmin.f32 %v808, 0.0
        %v1047 = vmin.f32 %v813, 0.0
        %v1048 = vmin.f32 %v818, 0.0
        %v1049 = vmin.f32 %v823, 0.0
        %v1050 = vmin.f32 %v828, 0.0
        %v1051 = vmin.f32 %v833, 0.0
        %v1052 = vmin.f32 %v838, 0.0
        %v1053 = vmin.f32 %v843, 0.0
        %v1054 = vmin.f32 %v848, 0.0
        %v1055 = vmin.f32 %v853, 0.0
        %v1056 = vmin.f32 %v858, 0.0
        %v1057 = vmin.f32 %v863, 0.0
        %v1058 = vmin.f32 %v868, 0.0
        %v1059 = vmin.f32 %v873, 0.0
        %v1060 = vmin.f32 %v878, 0.0
        %v1061 = vmin.f32 %v883, 0.0
        %v1062 = vmin.f32 %v888, 0.0
        %v1063 = vmin.f32 %v893, 0.0
        %v1064 = vmin.f32 %v898, 0.0
        %v1065 = vmin.f32 %v903, 0.0
        %v1066 = vmin.f32 %v908, 0.0
        %v1067 = vmin.f32 %v913, 0.0
        %v1068 = vmin.f32 %v918, 0.0
        %v1069 = vmin.f32 %v923, 0.0
        %v1070 = vmin.f32 %v928, 0.0
        %v1071 = vmin.f32 %v933, 0.0
        %v1072 = vmin.f32 %v938, 0.0
        %v1073 = vmin.f32 %v943, 0.0
        %v1074 = vmul.f32 %v1010, 1.442695
        %v1075 = vpow.pop %v1074
        %v1076 = vmul.f32 %v1011, 1.442695
        %v1077 = vpow.pop %v1076
        %v1078 = vmul.f32 %v1012, 1.442695
        %v1079 = vpow.pop %v1078
        %v1080 = vmul.f32 %v1013, 1.442695
        %v1081 = vpow.pop %v1080
        %v1082 = vmul.f32 %v1014, 1.442695
        %v1083 = vpow.pop %v1082
        %v1084 = vmul.f32 %v1015, 1.442695
        %v1085 = vpow.pop %v1084
        %v1086 = vmul.f32 %v1016, 1.442695
        %v1087 = vpow.pop %v1086
        %v1088 = vmul.f32 %v1017, 1.442695
        %v1089 = vpow.pop %v1088
        %v1090 = vmul.f32 %v1018, 1.442695
        %v1091 = vpow.pop %v1090
        %v1092 = vmul.f32 %v1019, 1.442695
        %v1093 = vpow.pop %v1092
        %v1094 = vmul.f32 %v1020, 1.442695
        %v1095 = vpow.pop %v1094
        %v1096 = vmul.f32 %v1021, 1.442695
        %v1097 = vpow.pop %v1096
        %v1098 = vmul.f32 %v1022, 1.442695
        %v1099 = vpow.pop %v1098
        %v1100 = vmul.f32 %v1023, 1.442695
        %v1101 = vpow.pop %v1100
        %v1102 = vmul.f32 %v1024, 1.442695
        %v1103 = vpow.pop %v1102
        %v1104 = vmul.f32 %v1025, 1.442695
        %v1105 = vpow.pop %v1104
        %v1106 = vmul.f32 %v1026, 1.442695
        %v1107 = vpow.pop %v1106
        %v1108 = vmul.f32 %v1027, 1.442695
        %v1109 = vpow.pop %v1108
        %v1110 = vmul.f32 %v1028, 1.442695
        %v1111 = vpow.pop %v1110
        %v1112 = vmul.f32 %v1029, 1.442695
        %v1113 = vpow.pop %v1112
        %v1114 = vmul.f32 %v1030, 1.442695
        %v1115 = vpow.pop %v1114
        %v1116 = vmul.f32 %v1031, 1.442695
        %v1117 = vpow.pop %v1116
        %v1118 = vmul.f32 %v1032, 1.442695
        %v1119 = vpow.pop %v1118
        %v1120 = vmul.f32 %v1033, 1.442695
        %v1121 = vpow.pop %v1120
        %v1122 = vmul.f32 %v1034, 1.442695
        %v1123 = vpow.pop %v1122
        %v1124 = vmul.f32 %v1035, 1.442695
        %v1125 = vpow.pop %v1124
        %v1126 = vmul.f32 %v1036, 1.442695
        %v1127 = vpow.pop %v1126
        %v1128 = vmul.f32 %v1037, 1.442695
        %v1129 = vpow.pop %v1128
        %v1130 = vmul.f32 %v1038, 1.442695
        %v1131 = vpow.pop %v1130
        %v1132 = vmul.f32 %v1039, 1.442695
        %v1133 = vpow.pop %v1132
        %v1134 = vmul.f32 %v1040, 1.442695
        %v1135 = vpow.pop %v1134
        %v1136 = vmul.f32 %v1041, 1.442695
        %v1137 = vpow.pop %v1136
        %v1138 = vmul.f32 %v1042, 1.442695
        %v1139 = vpow.pop %v1138
        %v1140 = vmul.f32 %v1043, 1.442695
        %v1141 = vpow.pop %v1140
        %v1142 = vmul.f32 %v1044, 1.442695
        %v1143 = vpow.pop %v1142
        %v1144 = vmul.f32 %v1045, 1.442695
        %v1145 = vpow.pop %v1144
        %v1146 = vmul.f32 %v1046, 1.442695
        %v1147 = vpow.pop %v1146
        %v1148 = vmul.f32 %v1047, 1.442695
        %v1149 = vpow.pop %v1148
        %v1150 = vmul.f32 %v1048, 1.442695
        %v1151 = vpow.pop %v1150
        %v1152 = vmul.f32 %v1049, 1.442695
        %v1153 = vpow.pop %v1152
        %v1154 = vmul.f32 %v1050, 1.442695
        %v1155 = vpow.pop %v1154
        %v1156 = vmul.f32 %v1051, 1.442695
        %v1157 = vpow.pop %v1156
        %v1158 = vmul.f32 %v1052, 1.442695
        %v1159 = vpow.pop %v1158
        %v1160 = vmul.f32 %v1053, 1.442695
        %v1161 = vpow.pop %v1160
        %v1162 = vmul.f32 %v1054, 1.442695
        %v1163 = vpow.pop %v1162
        %v1164 = vmul.f32 %v1055, 1.442695
        %v1165 = vpow.pop %v1164
        %v1166 = vmul.f32 %v1056, 1.442695
        %v1167 = vpow.pop %v1166
        %v1168 = vmul.f32 %v1057, 1.442695
        %v1169 = vpow.pop %v1168
        %v1170 = vmul.f32 %v1058, 1.442695
        %v1171 = vpow.pop %v1170
        %v1172 = vmul.f32 %v1059, 1.442695
        %v1173 = vpow.pop %v1172
        %v1174 = vmul.f32 %v1060, 1.442695
        %v1175 = vpow.pop %v1174
        %v1176 = vmul.f32 %v1061, 1.442695
        %v1177 = vpow.pop %v1176
        %v1178 = vmul.f32 %v1062, 1.442695
        %v1179 = vpow.pop %v1178
        %v1180 = vmul.f32 %v1063, 1.442695
        %v1181 = vpow.pop %v1180
        %v1182 = vmul.f32 %v1064, 1.442695
        %v1183 = vpow.pop %v1182
        %v1184 = vmul.f32 %v1065, 1.442695
        %v1185 = vpow.pop %v1184
        %v1186 = vmul.f32 %v1066, 1.442695
        %v1187 = vpow.pop %v1186
        %v1188 = vmul.f32 %v1067, 1.442695
        %v1189 = vpow.pop %v1188
        %v1190 = vmul.f32 %v1068, 1.442695
        %v1191 = vpow.pop %v1190
        %v1192 = vmul.f32 %v1069, 1.442695
        %v1193 = vpow.pop %v1192
        %v1194 = vmul.f32 %v1070, 1.442695
        %v1195 = vpow.pop %v1194
        %v1196 = vmul.f32 %v1071, 1.442695
        %v1197 = vpow.pop %v1196
        %v1198 = vmul.f32 %v1072, 1.442695
        %v1199 = vpow.pop %v1198
        %v1200 = vmul.f32 %v1073, 1.442695
        %v1201 = vpow.pop %v1200
        %v1202 = vsub.f32 %v1075, 1.0
        %v1203 = vsub.f32 %v1077, 1.0
        %v1204 = vsub.f32 %v1079, 1.0
        %v1205 = vsub.f32 %v1081, 1.0
        %v1206 = vsub.f32 %v1083, 1.0
        %v1207 = vsub.f32 %v1085, 1.0
        %v1208 = vsub.f32 %v1087, 1.0
        %v1209 = vsub.f32 %v1089, 1.0
        %v1210 = vsub.f32 %v1091, 1.0
        %v1211 = vsub.f32 %v1093, 1.0
        %v1212 = vsub.f32 %v1095, 1.0
        %v1213 = vsub.f32 %v1097, 1.0
        %v1214 = vsub.f32 %v1099, 1.0
        %v1215 = vsub.f32 %v1101, 1.0
        %v1216 = vsub.f32 %v1103, 1.0
        %v1217 = vsub.f32 %v1105, 1.0
        %v1218 = vsub.f32 %v1107, 1.0
        %v1219 = vsub.f32 %v1109, 1.0
        %v1220 = vsub.f32 %v1111, 1.0
        %v1221 = vsub.f32 %v1113, 1.0
        %v1222 = vsub.f32 %v1115, 1.0
        %v1223 = vsub.f32 %v1117, 1.0
        %v1224 = vsub.f32 %v1119, 1.0
        %v1225 = vsub.f32 %v1121, 1.0
        %v1226 = vsub.f32 %v1123, 1.0
        %v1227 = vsub.f32 %v1125, 1.0
        %v1228 = vsub.f32 %v1127, 1.0
        %v1229 = vsub.f32 %v1129, 1.0
        %v1230 = vsub.f32 %v1131, 1.0
        %v1231 = vsub.f32 %v1133, 1.0
        %v1232 = vsub.f32 %v1135, 1.0
        %v1233 = vsub.f32 %v1137, 1.0
        %v1234 = vsub.f32 %v1139, 1.0
        %v1235 = vsub.f32 %v1141, 1.0
        %v1236 = vsub.f32 %v1143, 1.0
        %v1237 = vsub.f32 %v1145, 1.0
        %v1238 = vsub.f32 %v1147, 1.0
        %v1239 = vsub.f32 %v1149, 1.0
        %v1240 = vsub.f32 %v1151, 1.0
        %v1241 = vsub.f32 %v1153, 1.0
        %v1242 = vsub.f32 %v1155, 1.0
        %v1243 = vsub.f32 %v1157, 1.0
        %v1244 = vsub.f32 %v1159, 1.0
        %v1245 = vsub.f32 %v1161, 1.0
        %v1246 = vsub.f32 %v1163, 1.0
        %v1247 = vsub.f32 %v1165, 1.0
        %v1248 = vsub.f32 %v1167, 1.0
        %v1249 = vsub.f32 %v1169, 1.0
        %v1250 = vsub.f32 %v1171, 1.0
        %v1251 = vsub.f32 %v1173, 1.0
        %v1252 = vsub.f32 %v1175, 1.0
        %v1253 = vsub.f32 %v1177, 1.0
        %v1254 = vsub.f32 %v1179, 1.0
        %v1255 = vsub.f32 %v1181, 1.0
        %v1256 = vsub.f32 %v1183, 1.0
        %v1257 = vsub.f32 %v1185, 1.0
        %v1258 = vsub.f32 %v1187, 1.0
        %v1259 = vsub.f32 %v1189, 1.0
        %v1260 = vsub.f32 %v1191, 1.0
        %v1261 = vsub.f32 %v1193, 1.0
        %v1262 = vsub.f32 %v1195, 1.0
        %v1263 = vsub.f32 %v1197, 1.0
        %v1264 = vsub.f32 %v1199, 1.0
        %v1265 = vsub.f32 %v1201, 1.0
        %v1266 = vsel %vm946, %v628, %v1202
        %v1267 = vsel %vm947, %v633, %v1203
        %v1268 = vsel %vm948, %v638, %v1204
        %v1269 = vsel %vm949, %v643, %v1205
        %v1270 = vsel %vm950, %v648, %v1206
        %v1271 = vsel %vm951, %v653, %v1207
        %v1272 = vsel %vm952, %v658, %v1208
        %v1273 = vsel %vm953, %v663, %v1209
        %v1274 = vsel %vm954, %v668, %v1210
        %v1275 = vsel %vm955, %v673, %v1211
        %v1276 = vsel %vm956, %v678, %v1212
        %v1277 = vsel %vm957, %v683, %v1213
        %v1278 = vsel %vm958, %v688, %v1214
        %v1279 = vsel %vm959, %v693, %v1215
        %v1280 = vsel %vm960, %v698, %v1216
        %v1281 = vsel %vm961, %v703, %v1217
        %v1282 = vsel %vm962, %v708, %v1218
        %v1283 = vsel %vm963, %v713, %v1219
        %v1284 = vsel %vm964, %v718, %v1220
        %v1285 = vsel %vm965, %v723, %v1221
        %v1286 = vsel %vm966, %v728, %v1222
        %v1287 = vsel %vm967, %v733, %v1223
        %v1288 = vsel %vm968, %v738, %v1224
        %v1289 = vsel %vm969, %v743, %v1225
        %v1290 = vsel %vm970, %v748, %v1226
        %v1291 = vsel %vm971, %v753, %v1227
        %v1292 = vsel %vm972, %v758, %v1228
        %v1293 = vsel %vm973, %v763, %v1229
        %v1294 = vsel %vm974, %v768, %v1230
        %v1295 = vsel %vm975, %v773, %v1231
        %v1296 = vsel %vm976, %v778, %v1232
        %v1297 = vsel %vm977, %v783, %v1233
        %v1298 = vsel %vm978, %v788, %v1234
        %v1299 = vsel %vm979, %v793, %v1235
        %v1300 = vsel %vm980, %v798, %v1236
        %v1301 = vsel %vm981, %v803, %v1237
        %v1302 = vsel %vm982, %v808, %v1238
        %v1303 = vsel %vm983, %v813, %v1239
        %v1304 = vsel %vm984, %v818, %v1240
        %v1305 = vsel %vm985, %v823, %v1241
        %v1306 = vsel %vm986, %v828, %v1242
        %v1307 = vsel %vm987, %v833, %v1243
        %v1308 = vsel %vm988, %v838, %v1244
        %v1309 = vsel %vm989, %v843, %v1245
        %v1310 = vsel %vm990, %v848, %v1246
        %v1311 = vsel %vm991, %v853, %v1247
        %v1312 = vsel %vm992, %v858, %v1248
        %v1313 = vsel %vm993, %v863, %v1249
        %v1314 = vsel %vm994, %v868, %v1250
        %v1315 = vsel %vm995, %v873, %v1251
        %v1316 = vsel %vm996, %v878, %v1252
        %v1317 = vsel %vm997, %v883, %v1253
        %v1318 = vsel %vm998, %v888, %v1254
        %v1319 = vsel %vm999, %v893, %v1255
        %v1320 = vsel %vm1000, %v898, %v1256
        %v1321 = vsel %vm1001, %v903, %v1257
        %v1322 = vsel %vm1002, %v908, %v1258
        %v1323 = vsel %vm1003, %v913, %v1259
        %v1324 = vsel %vm1004, %v918, %v1260
        %v1325 = vsel %vm1005, %v923, %v1261
        %v1326 = vsel %vm1006, %v928, %v1262
        %v1327 = vsel %vm1007, %v933, %v1263
        %v1328 = vsel %vm1008, %v938, %v1264
        %v1329 = vsel %vm1009, %v943, %v1265
        %vm1330 = vcmask 130048
        %1331 = vst.msk [vmem:[%s177] sm:$0xff] %vm1330, %v1266
        %1332 = vst.msk [vmem:[%s177 + $0x8] sm:$0xff] %vm1330, %v1267
        %1333 = vst.msk [vmem:[%s177 + $0x10] sm:$0xff] %vm1330, %v1268
        %1334 = vst.msk [vmem:[%s177 + $0x18] sm:$0xff] %vm1330, %v1269
        %1335 = vst.msk [vmem:[%s177 + $0x20] sm:$0xff] %vm1330, %v1270
        %1336 = vst.msk [vmem:[%s177 + $0x28] sm:$0xff] %vm1330, %v1271
        %1337 = vst.msk [vmem:[%s177 + $0x30] sm:$0xff] %vm1330, %v1272
        %1338 = vst.msk [vmem:[%s177 + $0x38] sm:$0xff] %vm1330, %v1273
        %1339 = vst.msk [vmem:[%s177 + $0x40] sm:$0xff] %vm1330, %v1274
        %1340 = vst.msk [vmem:[%s177 + $0x48] sm:$0xff] %vm1330, %v1275
        %1341 = vst.msk [vmem:[%s177 + $0x50] sm:$0xff] %vm1330, %v1276
        %1342 = vst.msk [vmem:[%s177 + $0x58] sm:$0xff] %vm1330, %v1277
        %1343 = vst.msk [vmem:[%s177 + $0x60] sm:$0xff] %vm1330, %v1278
        %1344 = vst.msk [vmem:[%s177 + $0x68] sm:$0xff] %vm1330, %v1279
        %1345 = vst.msk [vmem:[%s177 + $0x70] sm:$0xff] %vm1330, %v1280
        %1346 = vst.msk [vmem:[%s177 + $0x78] sm:$0xff] %vm1330, %v1281
        %1347 = vst.msk [vmem:[%s177 + $0x80] sm:$0xff] %vm1330, %v1282
        %1348 = vst.msk [vmem:[%s177 + $0x88] sm:$0xff] %vm1330, %v1283
        %1349 = vst.msk [vmem:[%s177 + $0x90] sm:$0xff] %vm1330, %v1284
        %1350 = vst.msk [vmem:[%s177 + $0x98] sm:$0xff] %vm1330, %v1285
        %1351 = vst.msk [vmem:[%s177 + $0xa0] sm:$0xff] %vm1330, %v1286
        %1352 = vst.msk [vmem:[%s177 + $0xa8] sm:$0xff] %vm1330, %v1287
        %1353 = vst.msk [vmem:[%s177 + $0xb0] sm:$0xff] %vm1330, %v1288
        %1354 = vst.msk [vmem:[%s177 + $0xb8] sm:$0xff] %vm1330, %v1289
        %1355 = vst.msk [vmem:[%s177 + $0xc0] sm:$0xff] %vm1330, %v1290
        %1356 = vst.msk [vmem:[%s177 + $0xc8] sm:$0xff] %vm1330, %v1291
        %1357 = vst.msk [vmem:[%s177 + $0xd0] sm:$0xff] %vm1330, %v1292
        %1358 = vst.msk [vmem:[%s177 + $0xd8] sm:$0xff] %vm1330, %v1293
        %1359 = vst.msk [vmem:[%s177 + $0xe0] sm:$0xff] %vm1330, %v1294
        %1360 = vst.msk [vmem:[%s177 + $0xe8] sm:$0xff] %vm1330, %v1295
        %1361 = vst.msk [vmem:[%s177 + $0xf0] sm:$0xff] %vm1330, %v1296
        %1362 = vst.msk [vmem:[%s177 + $0xf8] sm:$0xff] %vm1330, %v1297
        %1363 = vst.msk [vmem:[%s177 + $0x100] sm:$0xff] %vm1330, %v1298
        %1364 = vst.msk [vmem:[%s177 + $0x108] sm:$0xff] %vm1330, %v1299
        %1365 = vst.msk [vmem:[%s177 + $0x110] sm:$0xff] %vm1330, %v1300
        %1366 = vst.msk [vmem:[%s177 + $0x118] sm:$0xff] %vm1330, %v1301
        %1367 = vst.msk [vmem:[%s177 + $0x120] sm:$0xff] %vm1330, %v1302
        %1368 = vst.msk [vmem:[%s177 + $0x128] sm:$0xff] %vm1330, %v1303
        %1369 = vst.msk [vmem:[%s177 + $0x130] sm:$0xff] %vm1330, %v1304
        %1370 = vst.msk [vmem:[%s177 + $0x138] sm:$0xff] %vm1330, %v1305
        %1371 = vst.msk [vmem:[%s177 + $0x140] sm:$0xff] %vm1330, %v1306
        %1372 = vst.msk [vmem:[%s177 + $0x148] sm:$0xff] %vm1330, %v1307
        %1373 = vst.msk [vmem:[%s177 + $0x150] sm:$0xff] %vm1330, %v1308
        %1374 = vst.msk [vmem:[%s177 + $0x158] sm:$0xff] %vm1330, %v1309
        %1375 = vst.msk [vmem:[%s177 + $0x160] sm:$0xff] %vm1330, %v1310
        %1376 = vst.msk [vmem:[%s177 + $0x168] sm:$0xff] %vm1330, %v1311
        %1377 = vst.msk [vmem:[%s177 + $0x170] sm:$0xff] %vm1330, %v1312
        %1378 = vst.msk [vmem:[%s177 + $0x178] sm:$0xff] %vm1330, %v1313
        %1379 = vst.msk [vmem:[%s177 + $0x180] sm:$0xff] %vm1330, %v1314
        %1380 = vst.msk [vmem:[%s177 + $0x188] sm:$0xff] %vm1330, %v1315
        %1381 = vst.msk [vmem:[%s177 + $0x190] sm:$0xff] %vm1330, %v1316
        %1382 = vst.msk [vmem:[%s177 + $0x198] sm:$0xff] %vm1330, %v1317
        %1383 = vst.msk [vmem:[%s177 + $0x1a0] sm:$0xff] %vm1330, %v1318
        %1384 = vst.msk [vmem:[%s177 + $0x1a8] sm:$0xff] %vm1330, %v1319
        %1385 = vst.msk [vmem:[%s177 + $0x1b0] sm:$0xff] %vm1330, %v1320
        %1386 = vst.msk [vmem:[%s177 + $0x1b8] sm:$0xff] %vm1330, %v1321
        %1387 = vst.msk [vmem:[%s177 + $0x1c0] sm:$0xff] %vm1330, %v1322
        %1388 = vst.msk [vmem:[%s177 + $0x1c8] sm:$0xff] %vm1330, %v1323
        %1389 = vst.msk [vmem:[%s177 + $0x1d0] sm:$0xff] %vm1330, %v1324
        %1390 = vst.msk [vmem:[%s177 + $0x1d8] sm:$0xff] %vm1330, %v1325
        %1391 = vst.msk [vmem:[%s177 + $0x1e0] sm:$0xff] %vm1330, %v1326
        %1392 = vst.msk [vmem:[%s177 + $0x1e8] sm:$0xff] %vm1330, %v1327
        %1393 = vst.msk [vmem:[%s177 + $0x1f0] sm:$0xff] %vm1330, %v1328
        %1394 = vst.msk [vmem:[%s177 + $0x1f8] sm:$0xff] %vm1330, %v1329
        %s1395 = sand.u32 %s90, 1
        %s1396 = sand.u32 %s90, 1
        %s1397 = smul.addr %s1396, 512
        %s1398 = scalar_lea.vmem [#allocation2], %s1397
        // Predicated region
        $region33: #{gaussian_policy_forward.3} parent=31 // pred_check
          %p1399 = pneg %p100
        $region34: #{gaussian_policy_forward.3} parent=31 // pred_check_branch
          %1401 = sbr.rel (%p1399) target = $region36
        $region35: #{gaussian_policy_forward.3} parent=31 // pred_region
          %s1402 = smul.u32 64, %s14
          %s1403 = ssub.s32 144, %s1402
          %p1404 = scmp.lt.s32.totalorder %s1403, 64
          %s1405 = scalar_select %p1404, %s1403, 64
          %s1406 = smul.u32 128, %s1405
          %p1407 = scmp.ne.s32.totalorder 0, %s1406
          %s1408 = smul.addr %s1402, 8
          %s1409 = scalar_lea.vmem %s3, %s1408
          // Predicated region
          $region37: #{gaussian_policy_forward.3} parent=35 // pred_check
            %p1410 = pneg %p1407
          $region38: #{gaussian_policy_forward.3} parent=35 // pred_check_branch
            %1412 = sbr.rel (%p1410) target = $region40
          $region39: #{gaussian_policy_forward.3} parent=35 // pred_region
            // Predicated region
            $region41: #{gaussian_policy_forward.3} parent=39 // pred_check
              _
            $region42: #{gaussian_policy_forward.3} parent=39 // pred_check_branch
              %1414 = sbr.rel (0) target = $region44
            $region43: #{gaussian_policy_forward.3} parent=39 // pred_region
              // Predicated region
              $region63: #{gaussian_policy_forward.3} parent=43 // pred_check
                _
              $region64: #{gaussian_policy_forward.3} parent=43 // pred_check_branch
                %1589 = sbr.rel (0) target = $region66
              $region65: #{gaussian_policy_forward.3} parent=43 // pred_region
                %s1590 = sshrl.u32 %s1405, 6
                // While loop
                $region67: #{gaussian_policy_forward.3} parent=65 // loop_pre_header
                  _
                $region68: #{gaussian_policy_forward.3} parent=65 // loop_header
                  %s1592 = sphi 0, %s1594
                  %p1593 = scmp.ge.s32.totalorder %s1592, %s1590
                  %s1597 = sphi 0, %s1730
                  %s1598 = sphi %s1398, %s1733
                  %s1599 = sphi %s1409, %s1734
                $region69: #{gaussian_policy_forward.3} parent=65 // loop_header_branch
                  %1596 = sbr.rel (%p1593) target = $region73
                $region70: #{gaussian_policy_forward.3} parent=65 // loop_body
                  %v1600 = vld [vmem:[%s1598] sm:$0xff]
                  %1601 = vst [vmem:[%s1599] sm:$0xff] %v1600
                  %v1602 = vld [vmem:[%s1598 + $0x8] sm:$0xff]
                  %1603 = vst [vmem:[%s1599 + $0x8] sm:$0xff] %v1602
                  %v1604 = vld [vmem:[%s1598 + $0x10] sm:$0xff]
                  %1605 = vst [vmem:[%s1599 + $0x10] sm:$0xff] %v1604
                  %v1606 = vld [vmem:[%s1598 + $0x18] sm:$0xff]
                  %1607 = vst [vmem:[%s1599 + $0x18] sm:$0xff] %v1606
                  %v1608 = vld [vmem:[%s1598 + $0x20] sm:$0xff]
                  %1609 = vst [vmem:[%s1599 + $0x20] sm:$0xff] %v1608
                  %v1610 = vld [vmem:[%s1598 + $0x28] sm:$0xff]
                  %1611 = vst [vmem:[%s1599 + $0x28] sm:$0xff] %v1610
                  %v1612 = vld [vmem:[%s1598 + $0x30] sm:$0xff]
                  %1613 = vst [vmem:[%s1599 + $0x30] sm:$0xff] %v1612
                  %v1614 = vld [vmem:[%s1598 + $0x38] sm:$0xff]
                  %1615 = vst [vmem:[%s1599 + $0x38] sm:$0xff] %v1614
                  %v1616 = vld [vmem:[%s1598 + $0x40] sm:$0xff]
                  %1617 = vst [vmem:[%s1599 + $0x40] sm:$0xff] %v1616
                  %v1618 = vld [vmem:[%s1598 + $0x48] sm:$0xff]
                  %1619 = vst [vmem:[%s1599 + $0x48] sm:$0xff] %v1618
                  %v1620 = vld [vmem:[%s1598 + $0x50] sm:$0xff]
                  %1621 = vst [vmem:[%s1599 + $0x50] sm:$0xff] %v1620
                  %v1622 = vld [vmem:[%s1598 + $0x58] sm:$0xff]
                  %1623 = vst [vmem:[%s1599 + $0x58] sm:$0xff] %v1622
                  %v1624 = vld [vmem:[%s1598 + $0x60] sm:$0xff]
                  %1625 = vst [vmem:[%s1599 + $0x60] sm:$0xff] %v1624
                  %v1626 = vld [vmem:[%s1598 + $0x68] sm:$0xff]
                  %1627 = vst [vmem:[%s1599 + $0x68] sm:$0xff] %v1626
                  %v1628 = vld [vmem:[%s1598 + $0x70] sm:$0xff]
                  %1629 = vst [vmem:[%s1599 + $0x70] sm:$0xff] %v1628
                  %v1630 = vld [vmem:[%s1598 + $0x78] sm:$0xff]
                  %1631 = vst [vmem:[%s1599 + $0x78] sm:$0xff] %v1630
                  %v1632 = vld [vmem:[%s1598 + $0x80] sm:$0xff]
                  %1633 = vst [vmem:[%s1599 + $0x80] sm:$0xff] %v1632
                  %v1634 = vld [vmem:[%s1598 + $0x88] sm:$0xff]
                  %1635 = vst [vmem:[%s1599 + $0x88] sm:$0xff] %v1634
                  %v1636 = vld [vmem:[%s1598 + $0x90] sm:$0xff]
                  %1637 = vst [vmem:[%s1599 + $0x90] sm:$0xff] %v1636
                  %v1638 = vld [vmem:[%s1598 + $0x98] sm:$0xff]
                  %1639 = vst [vmem:[%s1599 + $0x98] sm:$0xff] %v1638
                  %v1640 = vld [vmem:[%s1598 + $0xa0] sm:$0xff]
                  %1641 = vst [vmem:[%s1599 + $0xa0] sm:$0xff] %v1640
                  %v1642 = vld [vmem:[%s1598 + $0xa8] sm:$0xff]
                  %1643 = vst [vmem:[%s1599 + $0xa8] sm:$0xff] %v1642
                  %v1644 = vld [vmem:[%s1598 + $0xb0] sm:$0xff]
                  %1645 = vst [vmem:[%s1599 + $0xb0] sm:$0xff] %v1644
                  %v1646 = vld [vmem:[%s1598 + $0xb8] sm:$0xff]
                  %1647 = vst [vmem:[%s1599 + $0xb8] sm:$0xff] %v1646
                  %v1648 = vld [vmem:[%s1598 + $0xc0] sm:$0xff]
                  %1649 = vst [vmem:[%s1599 + $0xc0] sm:$0xff] %v1648
                  %v1650 = vld [vmem:[%s1598 + $0xc8] sm:$0xff]
                  %1651 = vst [vmem:[%s1599 + $0xc8] sm:$0xff] %v1650
                  %v1652 = vld [vmem:[%s1598 + $0xd0] sm:$0xff]
                  %1653 = vst [vmem:[%s1599 + $0xd0] sm:$0xff] %v1652
                  %v1654 = vld [vmem:[%s1598 + $0xd8] sm:$0xff]
                  %1655 = vst [vmem:[%s1599 + $0xd8] sm:$0xff] %v1654
                  %v1656 = vld [vmem:[%s1598 + $0xe0] sm:$0xff]
                  %1657 = vst [vmem:[%s1599 + $0xe0] sm:$0xff] %v1656
                  %v1658 = vld [vmem:[%s1598 + $0xe8] sm:$0xff]
                  %1659 = vst [vmem:[%s1599 + $0xe8] sm:$0xff] %v1658
                  %v1660 = vld [vmem:[%s1598 + $0xf0] sm:$0xff]
                  %1661 = vst [vmem:[%s1599 + $0xf0] sm:$0xff] %v1660
                  %v1662 = vld [vmem:[%s1598 + $0xf8] sm:$0xff]
                  %1663 = vst [vmem:[%s1599 + $0xf8] sm:$0xff] %v1662
                  %v1664 = vld [vmem:[%s1598 + $0x100] sm:$0xff]
                  %1665 = vst [vmem:[%s1599 + $0x100] sm:$0xff] %v1664
                  %v1666 = vld [vmem:[%s1598 + $0x108] sm:$0xff]
                  %1667 = vst [vmem:[%s1599 + $0x108] sm:$0xff] %v1666
                  %v1668 = vld [vmem:[%s1598 + $0x110] sm:$0xff]
                  %1669 = vst [vmem:[%s1599 + $0x110] sm:$0xff] %v1668
                  %v1670 = vld [vmem:[%s1598 + $0x118] sm:$0xff]
                  %1671 = vst [vmem:[%s1599 + $0x118] sm:$0xff] %v1670
                  %v1672 = vld [vmem:[%s1598 + $0x120] sm:$0xff]
                  %1673 = vst [vmem:[%s1599 + $0x120] sm:$0xff] %v1672
                  %v1674 = vld [vmem:[%s1598 + $0x128] sm:$0xff]
                  %1675 = vst [vmem:[%s1599 + $0x128] sm:$0xff] %v1674
                  %v1676 = vld [vmem:[%s1598 + $0x130] sm:$0xff]
                  %1677 = vst [vmem:[%s1599 + $0x130] sm:$0xff] %v1676
                  %v1678 = vld [vmem:[%s1598 + $0x138] sm:$0xff]
                  %1679 = vst [vmem:[%s1599 + $0x138] sm:$0xff] %v1678
                  %v1680 = vld [vmem:[%s1598 + $0x140] sm:$0xff]
                  %1681 = vst [vmem:[%s1599 + $0x140] sm:$0xff] %v1680
                  %v1682 = vld [vmem:[%s1598 + $0x148] sm:$0xff]
                  %1683 = vst [vmem:[%s1599 + $0x148] sm:$0xff] %v1682
                  %v1684 = vld [vmem:[%s1598 + $0x150] sm:$0xff]
                  %1685 = vst [vmem:[%s1599 + $0x150] sm:$0xff] %v1684
                  %v1686 = vld [vmem:[%s1598 + $0x158] sm:$0xff]
                  %1687 = vst [vmem:[%s1599 + $0x158] sm:$0xff] %v1686
                  %v1688 = vld [vmem:[%s1598 + $0x160] sm:$0xff]
                  %1689 = vst [vmem:[%s1599 + $0x160] sm:$0xff] %v1688
                  %v1690 = vld [vmem:[%s1598 + $0x168] sm:$0xff]
                  %1691 = vst [vmem:[%s1599 + $0x168] sm:$0xff] %v1690
                  %v1692 = vld [vmem:[%s1598 + $0x170] sm:$0xff]
                  %1693 = vst [vmem:[%s1599 + $0x170] sm:$0xff] %v1692
                  %v1694 = vld [vmem:[%s1598 + $0x178] sm:$0xff]
                  %1695 = vst [vmem:[%s1599 + $0x178] sm:$0xff] %v1694
                  %v1696 = vld [vmem:[%s1598 + $0x180] sm:$0xff]
                  %1697 = vst [vmem:[%s1599 + $0x180] sm:$0xff] %v1696
                  %v1698 = vld [vmem:[%s1598 + $0x188] sm:$0xff]
                  %1699 = vst [vmem:[%s1599 + $0x188] sm:$0xff] %v1698
                  %v1700 = vld [vmem:[%s1598 + $0x190] sm:$0xff]
                  %1701 = vst [vmem:[%s1599 + $0x190] sm:$0xff] %v1700
                  %v1702 = vld [vmem:[%s1598 + $0x198] sm:$0xff]
                  %1703 = vst [vmem:[%s1599 + $0x198] sm:$0xff] %v1702
                  %v1704 = vld [vmem:[%s1598 + $0x1a0] sm:$0xff]
                  %1705 = vst [vmem:[%s1599 + $0x1a0] sm:$0xff] %v1704
                  %v1706 = vld [vmem:[%s1598 + $0x1a8] sm:$0xff]
                  %1707 = vst [vmem:[%s1599 + $0x1a8] sm:$0xff] %v1706
                  %v1708 = vld [vmem:[%s1598 + $0x1b0] sm:$0xff]
                  %1709 = vst [vmem:[%s1599 + $0x1b0] sm:$0xff] %v1708
                  %v1710 = vld [vmem:[%s1598 + $0x1b8] sm:$0xff]
                  %1711 = vst [vmem:[%s1599 + $0x1b8] sm:$0xff] %v1710
                  %v1712 = vld [vmem:[%s1598 + $0x1c0] sm:$0xff]
                  %1713 = vst [vmem:[%s1599 + $0x1c0] sm:$0xff] %v1712
                  %v1714 = vld [vmem:[%s1598 + $0x1c8] sm:$0xff]
                  %1715 = vst [vmem:[%s1599 + $0x1c8] sm:$0xff] %v1714
                  %v1716 = vld [vmem:[%s1598 + $0x1d0] sm:$0xff]
                  %1717 = vst [vmem:[%s1599 + $0x1d0] sm:$0xff] %v1716
                  %v1718 = vld [vmem:[%s1598 + $0x1d8] sm:$0xff]
                  %1719 = vst [vmem:[%s1599 + $0x1d8] sm:$0xff] %v1718
                  %v1720 = vld [vmem:[%s1598 + $0x1e0] sm:$0xff]
                  %1721 = vst [vmem:[%s1599 + $0x1e0] sm:$0xff] %v1720
                  %v1722 = vld [vmem:[%s1598 + $0x1e8] sm:$0xff]
                  %1723 = vst [vmem:[%s1599 + $0x1e8] sm:$0xff] %v1722
                  %v1724 = vld [vmem:[%s1598 + $0x1f0] sm:$0xff]
                  %1725 = vst [vmem:[%s1599 + $0x1f0] sm:$0xff] %v1724
                  %v1726 = vld [vmem:[%s1598 + $0x1f8] sm:$0xff]
                  %1727 = vst [vmem:[%s1599 + $0x1f8] sm:$0xff] %v1726
                  %s1728 = sadd.s32 1, %s1597
                  %p1729 = scmp.ge.s32.totalorder %s1728, %s1590
                  %s1730 = scalar_select %p1729, 0, %s1728
                  %s1731 = smul.u32 %s1730, 512
                  %s1732 = smul.u32 %s1730, 512
                  %s1733 = scalar_lea.vmem %s1398, %s1731 [#allocation2]
                  %s1734 = scalar_lea.vmem %s1409, %s1732
                $region71: #{gaussian_policy_forward.3} parent=65 // loop_footer
                  %s1594 = sadd.s32 %s1592, 1
                $region72: #{gaussian_policy_forward.3} parent=65 // loop_footer_branch
                  %1591 = sbr.rel target = $region68
                $region73: #{gaussian_policy_forward.3} parent=65 // loop_exit
                  _
                %s1735 = sshrl.u32 %s1405, 6
                %s1736 = sand.u32 %s1405, 63
                %s1737 = smul.u32 %s1735, 64
                %s1738 = smul.u32 8, %s1737
                %s1739 = scalar_lea.vmem %s1398, %s1738 [#allocation2]
                %s1740 = smul.u32 8, %s1737
                %s1741 = scalar_lea.vmem %s1409, %s1740
                // While loop
                $region74: #{gaussian_policy_forward.3} parent=65 // loop_pre_header
                  _
                $region75: #{gaussian_policy_forward.3} parent=65 // loop_header
                  %s1743 = sphi 0, %s1745
                  %p1744 = scmp.ge.s32.totalorder %s1743, %s1736
                  %s1748 = sphi 0, %s1755
                  %s1749 = sphi %s1739, %s1758
                  %s1750 = sphi %s1741, %s1759
                $region76: #{gaussian_policy_forward.3} parent=65 // loop_header_branch
                  %1747 = sbr.rel (%p1744) target = $region80
                $region77: #{gaussian_policy_forward.3} parent=65 // loop_body
                  %v1751 = vld [vmem:[%s1749] sm:$0xff]
                  %1752 = vst [vmem:[%s1750] sm:$0xff] %v1751
                  %s1753 = sadd.s32 1, %s1748
                  %p1754 = scmp.ge.s32.totalorder %s1753, %s1736
                  %s1755 = scalar_select %p1754, 0, %s1753
                  %s1756 = smul.u32 %s1755, 8
                  %s1757 = smul.u32 %s1755, 8
                  %s1758 = scalar_lea.vmem %s1739, %s1756 [#allocation2]
                  %s1759 = scalar_lea.vmem %s1741, %s1757
                $region78: #{gaussian_policy_forward.3} parent=65 // loop_footer
                  %s1745 = sadd.s32 %s1743, 1
                $region79: #{gaussian_policy_forward.3} parent=65 // loop_footer_branch
                  %1742 = sbr.rel target = $region75
                $region80: #{gaussian_policy_forward.3} parent=65 // loop_exit
                  _
              $region66: #{gaussian_policy_forward.3} parent=43 // pred_fallthru
                _
              // Predicated region
              $region81: #{gaussian_policy_forward.3} parent=43 // pred_check
                _
              $region82: #{gaussian_policy_forward.3} parent=43 // pred_check_branch
                %1761 = sbr.rel target = $region84
              $region83: #{gaussian_policy_forward.3} parent=43 // pred_region
                _
              $region84: #{gaussian_policy_forward.3} parent=43 // pred_fallthru
                _
            $region44: #{gaussian_policy_forward.3} parent=39 // pred_fallthru
              _
            // Predicated region
            $region45: #{gaussian_policy_forward.3} parent=39 // pred_check
              _
            $region46: #{gaussian_policy_forward.3} parent=39 // pred_check_branch
              %1416 = sbr.rel target = $region48
            $region47: #{gaussian_policy_forward.3} parent=39 // pred_region
              %s1418 = sshrl.u32 %s1405, 6
              // While loop
              $region49: #{gaussian_policy_forward.3} parent=47 // loop_pre_header
                _
              $region50: #{gaussian_policy_forward.3} parent=47 // loop_header
                %s1420 = sphi 0, %s1422
                %p1421 = scmp.ge.s32.totalorder %s1420, %s1418
                %s1425 = sphi 0, %s1558
                %s1426 = sphi %s1398, %s1561
                %s1427 = sphi %s1409, %s1562
              $region51: #{gaussian_policy_forward.3} parent=47 // loop_header_branch
                %1424 = sbr.rel (%p1421) target = $region55
              $region52: #{gaussian_policy_forward.3} parent=47 // loop_body
                %v1428 = vld [vmem:[%s1426] sm:$0xff]
                %1429 = vst [vmem:[%s1427] sm:$0xff] %v1428
                %v1430 = vld [vmem:[%s1426 + $0x8] sm:$0xff]
                %1431 = vst [vmem:[%s1427 + $0x8] sm:$0xff] %v1430
                %v1432 = vld [vmem:[%s1426 + $0x10] sm:$0xff]
                %1433 = vst [vmem:[%s1427 + $0x10] sm:$0xff] %v1432
                %v1434 = vld [vmem:[%s1426 + $0x18] sm:$0xff]
                %1435 = vst [vmem:[%s1427 + $0x18] sm:$0xff] %v1434
                %v1436 = vld [vmem:[%s1426 + $0x20] sm:$0xff]
                %1437 = vst [vmem:[%s1427 + $0x20] sm:$0xff] %v1436
                %v1438 = vld [vmem:[%s1426 + $0x28] sm:$0xff]
                %1439 = vst [vmem:[%s1427 + $0x28] sm:$0xff] %v1438
                %v1440 = vld [vmem:[%s1426 + $0x30] sm:$0xff]
                %1441 = vst [vmem:[%s1427 + $0x30] sm:$0xff] %v1440
                %v1442 = vld [vmem:[%s1426 + $0x38] sm:$0xff]
                %1443 = vst [vmem:[%s1427 + $0x38] sm:$0xff] %v1442
                %v1444 = vld [vmem:[%s1426 + $0x40] sm:$0xff]
                %1445 = vst [vmem:[%s1427 + $0x40] sm:$0xff] %v1444
                %v1446 = vld [vmem:[%s1426 + $0x48] sm:$0xff]
                %1447 = vst [vmem:[%s1427 + $0x48] sm:$0xff] %v1446
                %v1448 = vld [vmem:[%s1426 + $0x50] sm:$0xff]
                %1449 = vst [vmem:[%s1427 + $0x50] sm:$0xff] %v1448
                %v1450 = vld [vmem:[%s1426 + $0x58] sm:$0xff]
                %1451 = vst [vmem:[%s1427 + $0x58] sm:$0xff] %v1450
                %v1452 = vld [vmem:[%s1426 + $0x60] sm:$0xff]
                %1453 = vst [vmem:[%s1427 + $0x60] sm:$0xff] %v1452
                %v1454 = vld [vmem:[%s1426 + $0x68] sm:$0xff]
                %1455 = vst [vmem:[%s1427 + $0x68] sm:$0xff] %v1454
                %v1456 = vld [vmem:[%s1426 + $0x70] sm:$0xff]
                %1457 = vst [vmem:[%s1427 + $0x70] sm:$0xff] %v1456
                %v1458 = vld [vmem:[%s1426 + $0x78] sm:$0xff]
                %1459 = vst [vmem:[%s1427 + $0x78] sm:$0xff] %v1458
                %v1460 = vld [vmem:[%s1426 + $0x80] sm:$0xff]
                %1461 = vst [vmem:[%s1427 + $0x80] sm:$0xff] %v1460
                %v1462 = vld [vmem:[%s1426 + $0x88] sm:$0xff]
                %1463 = vst [vmem:[%s1427 + $0x88] sm:$0xff] %v1462
                %v1464 = vld [vmem:[%s1426 + $0x90] sm:$0xff]
                %1465 = vst [vmem:[%s1427 + $0x90] sm:$0xff] %v1464
                %v1466 = vld [vmem:[%s1426 + $0x98] sm:$0xff]
                %1467 = vst [vmem:[%s1427 + $0x98] sm:$0xff] %v1466
                %v1468 = vld [vmem:[%s1426 + $0xa0] sm:$0xff]
                %1469 = vst [vmem:[%s1427 + $0xa0] sm:$0xff] %v1468
                %v1470 = vld [vmem:[%s1426 + $0xa8] sm:$0xff]
                %1471 = vst [vmem:[%s1427 + $0xa8] sm:$0xff] %v1470
                %v1472 = vld [vmem:[%s1426 + $0xb0] sm:$0xff]
                %1473 = vst [vmem:[%s1427 + $0xb0] sm:$0xff] %v1472
                %v1474 = vld [vmem:[%s1426 + $0xb8] sm:$0xff]
                %1475 = vst [vmem:[%s1427 + $0xb8] sm:$0xff] %v1474
                %v1476 = vld [vmem:[%s1426 + $0xc0] sm:$0xff]
                %1477 = vst [vmem:[%s1427 + $0xc0] sm:$0xff] %v1476
                %v1478 = vld [vmem:[%s1426 + $0xc8] sm:$0xff]
                %1479 = vst [vmem:[%s1427 + $0xc8] sm:$0xff] %v1478
                %v1480 = vld [vmem:[%s1426 + $0xd0] sm:$0xff]
                %1481 = vst [vmem:[%s1427 + $0xd0] sm:$0xff] %v1480
                %v1482 = vld [vmem:[%s1426 + $0xd8] sm:$0xff]
                %1483 = vst [vmem:[%s1427 + $0xd8] sm:$0xff] %v1482
                %v1484 = vld [vmem:[%s1426 + $0xe0] sm:$0xff]
                %1485 = vst [vmem:[%s1427 + $0xe0] sm:$0xff] %v1484
                %v1486 = vld [vmem:[%s1426 + $0xe8] sm:$0xff]
                %1487 = vst [vmem:[%s1427 + $0xe8] sm:$0xff] %v1486
                %v1488 = vld [vmem:[%s1426 + $0xf0] sm:$0xff]
                %1489 = vst [vmem:[%s1427 + $0xf0] sm:$0xff] %v1488
                %v1490 = vld [vmem:[%s1426 + $0xf8] sm:$0xff]
                %1491 = vst [vmem:[%s1427 + $0xf8] sm:$0xff] %v1490
                %v1492 = vld [vmem:[%s1426 + $0x100] sm:$0xff]
                %1493 = vst [vmem:[%s1427 + $0x100] sm:$0xff] %v1492
                %v1494 = vld [vmem:[%s1426 + $0x108] sm:$0xff]
                %1495 = vst [vmem:[%s1427 + $0x108] sm:$0xff] %v1494
                %v1496 = vld [vmem:[%s1426 + $0x110] sm:$0xff]
                %1497 = vst [vmem:[%s1427 + $0x110] sm:$0xff] %v1496
                %v1498 = vld [vmem:[%s1426 + $0x118] sm:$0xff]
                %1499 = vst [vmem:[%s1427 + $0x118] sm:$0xff] %v1498
                %v1500 = vld [vmem:[%s1426 + $0x120] sm:$0xff]
                %1501 = vst [vmem:[%s1427 + $0x120] sm:$0xff] %v1500
                %v1502 = vld [vmem:[%s1426 + $0x128] sm:$0xff]
                %1503 = vst [vmem:[%s1427 + $0x128] sm:$0xff] %v1502
                %v1504 = vld [vmem:[%s1426 + $0x130] sm:$0xff]
                %1505 = vst [vmem:[%s1427 + $0x130] sm:$0xff] %v1504
                %v1506 = vld [vmem:[%s1426 + $0x138] sm:$0xff]
                %1507 = vst [vmem:[%s1427 + $0x138] sm:$0xff] %v1506
                %v1508 = vld [vmem:[%s1426 + $0x140] sm:$0xff]
                %1509 = vst [vmem:[%s1427 + $0x140] sm:$0xff] %v1508
                %v1510 = vld [vmem:[%s1426 + $0x148] sm:$0xff]
                %1511 = vst [vmem:[%s1427 + $0x148] sm:$0xff] %v1510
                %v1512 = vld [vmem:[%s1426 + $0x150] sm:$0xff]
                %1513 = vst [vmem:[%s1427 + $0x150] sm:$0xff] %v1512
                %v1514 = vld [vmem:[%s1426 + $0x158] sm:$0xff]
                %1515 = vst [vmem:[%s1427 + $0x158] sm:$0xff] %v1514
                %v1516 = vld [vmem:[%s1426 + $0x160] sm:$0xff]
                %1517 = vst [vmem:[%s1427 + $0x160] sm:$0xff] %v1516
                %v1518 = vld [vmem:[%s1426 + $0x168] sm:$0xff]
                %1519 = vst [vmem:[%s1427 + $0x168] sm:$0xff] %v1518
                %v1520 = vld [vmem:[%s1426 + $0x170] sm:$0xff]
                %1521 = vst [vmem:[%s1427 + $0x170] sm:$0xff] %v1520
                %v1522 = vld [vmem:[%s1426 + $0x178] sm:$0xff]
                %1523 = vst [vmem:[%s1427 + $0x178] sm:$0xff] %v1522
                %v1524 = vld [vmem:[%s1426 + $0x180] sm:$0xff]
                %1525 = vst [vmem:[%s1427 + $0x180] sm:$0xff] %v1524
                %v1526 = vld [vmem:[%s1426 + $0x188] sm:$0xff]
                %1527 = vst [vmem:[%s1427 + $0x188] sm:$0xff] %v1526
                %v1528 = vld [vmem:[%s1426 + $0x190] sm:$0xff]
                %1529 = vst [vmem:[%s1427 + $0x190] sm:$0xff] %v1528
                %v1530 = vld [vmem:[%s1426 + $0x198] sm:$0xff]
                %1531 = vst [vmem:[%s1427 + $0x198] sm:$0xff] %v1530
                %v1532 = vld [vmem:[%s1426 + $0x1a0] sm:$0xff]
                %1533 = vst [vmem:[%s1427 + $0x1a0] sm:$0xff] %v1532
                %v1534 = vld [vmem:[%s1426 + $0x1a8] sm:$0xff]
                %1535 = vst [vmem:[%s1427 + $0x1a8] sm:$0xff] %v1534
                %v1536 = vld [vmem:[%s1426 + $0x1b0] sm:$0xff]
                %1537 = vst [vmem:[%s1427 + $0x1b0] sm:$0xff] %v1536
                %v1538 = vld [vmem:[%s1426 + $0x1b8] sm:$0xff]
                %1539 = vst [vmem:[%s1427 + $0x1b8] sm:$0xff] %v1538
                %v1540 = vld [vmem:[%s1426 + $0x1c0] sm:$0xff]
                %1541 = vst [vmem:[%s1427 + $0x1c0] sm:$0xff] %v1540
                %v1542 = vld [vmem:[%s1426 + $0x1c8] sm:$0xff]
                %1543 = vst [vmem:[%s1427 + $0x1c8] sm:$0xff] %v1542
                %v1544 = vld [vmem:[%s1426 + $0x1d0] sm:$0xff]
                %1545 = vst [vmem:[%s1427 + $0x1d0] sm:$0xff] %v1544
                %v1546 = vld [vmem:[%s1426 + $0x1d8] sm:$0xff]
                %1547 = vst [vmem:[%s1427 + $0x1d8] sm:$0xff] %v1546
                %v1548 = vld [vmem:[%s1426 + $0x1e0] sm:$0xff]
                %1549 = vst [vmem:[%s1427 + $0x1e0] sm:$0xff] %v1548
                %v1550 = vld [vmem:[%s1426 + $0x1e8] sm:$0xff]
                %1551 = vst [vmem:[%s1427 + $0x1e8] sm:$0xff] %v1550
                %v1552 = vld [vmem:[%s1426 + $0x1f0] sm:$0xff]
                %1553 = vst [vmem:[%s1427 + $0x1f0] sm:$0xff] %v1552
                %v1554 = vld [vmem:[%s1426 + $0x1f8] sm:$0xff]
                %1555 = vst [vmem:[%s1427 + $0x1f8] sm:$0xff] %v1554
                %s1556 = sadd.s32 1, %s1425
                %p1557 = scmp.ge.s32.totalorder %s1556, %s1418
                %s1558 = scalar_select %p1557, 0, %s1556
                %s1559 = smul.u32 %s1558, 512
                %s1560 = smul.u32 %s1558, 512
                %s1561 = scalar_lea.vmem %s1398, %s1559 [#allocation2]
                %s1562 = scalar_lea.vmem %s1409, %s1560
              $region53: #{gaussian_policy_forward.3} parent=47 // loop_footer
                %s1422 = sadd.s32 %s1420, 1
              $region54: #{gaussian_policy_forward.3} parent=47 // loop_footer_branch
                %1419 = sbr.rel target = $region50
              $region55: #{gaussian_policy_forward.3} parent=47 // loop_exit
                _
              %s1563 = sshrl.u32 %s1405, 6
              %s1564 = sand.u32 %s1405, 63
              %s1565 = smul.u32 %s1563, 64
              %s1566 = smul.u32 8, %s1565
              %s1567 = scalar_lea.vmem %s1398, %s1566 [#allocation2]
              %s1568 = smul.u32 8, %s1565
              %s1569 = scalar_lea.vmem %s1409, %s1568
              // While loop
              $region56: #{gaussian_policy_forward.3} parent=47 // loop_pre_header
                _
              $region57: #{gaussian_policy_forward.3} parent=47 // loop_header
                %s1571 = sphi 0, %s1573
                %p1572 = scmp.ge.s32.totalorder %s1571, %s1564
                %s1576 = sphi 0, %s1583
                %s1577 = sphi %s1567, %s1586
                %s1578 = sphi %s1569, %s1587
              $region58: #{gaussian_policy_forward.3} parent=47 // loop_header_branch
                %1575 = sbr.rel (%p1572) target = $region62
              $region59: #{gaussian_policy_forward.3} parent=47 // loop_body
                %v1579 = vld [vmem:[%s1577] sm:$0xff]
                %1580 = vst [vmem:[%s1578] sm:$0xff] %v1579
                %s1581 = sadd.s32 1, %s1576
                %p1582 = scmp.ge.s32.totalorder %s1581, %s1564
                %s1583 = scalar_select %p1582, 0, %s1581
                %s1584 = smul.u32 %s1583, 8
                %s1585 = smul.u32 %s1583, 8
                %s1586 = scalar_lea.vmem %s1567, %s1584 [#allocation2]
                %s1587 = scalar_lea.vmem %s1569, %s1585
              $region60: #{gaussian_policy_forward.3} parent=47 // loop_footer
                %s1573 = sadd.s32 %s1571, 1
              $region61: #{gaussian_policy_forward.3} parent=47 // loop_footer_branch
                %1570 = sbr.rel target = $region57
              $region62: #{gaussian_policy_forward.3} parent=47 // loop_exit
                _
            $region48: #{gaussian_policy_forward.3} parent=39 // pred_fallthru
              _
          $region40: #{gaussian_policy_forward.3} parent=35 // pred_fallthru
            _
          %1762 = vnop
        $region36: #{gaussian_policy_forward.3} parent=31 // pred_fallthru
          _
      $region32: #{gaussian_policy_forward.3} parent=5 // pred_fallthru
        _
      %p1763 = scmp.le.s32.totalorder 2, %s9
      // Predicated region
      $region85: #{gaussian_policy_forward.3} parent=5 // pred_check
        %p1764 = pneg %p1763
      $region86: #{gaussian_policy_forward.3} parent=5 // pred_check_branch
        %1766 = sbr.rel (%p1764) target = $region88
      $region87: #{gaussian_policy_forward.3} parent=5 // pred_region
        %s1767 = ssub.s32 %s9, 2
        // Predicated region
        $region89: #{gaussian_policy_forward.3} parent=87 // pred_check
          %p1768 = pneg %p106
        $region90: #{gaussian_policy_forward.3} parent=87 // pred_check_branch
          %1770 = sbr.rel (%p1768) target = $region92
        $region91: #{gaussian_policy_forward.3} parent=87 // pred_region
          %s1771 = sand.u32 %s91, 1
          %s1772 = sand.u32 %s91, 1
          %s1773 = smul.addr %s1772, 512
          %s1774 = scalar_lea.vmem [#allocation2], %s1773
        $region92: #{gaussian_policy_forward.3} parent=87 // pred_fallthru
          _
      $region88: #{gaussian_policy_forward.3} parent=5 // pred_fallthru
        _
    $region6: #{gaussian_policy_forward.3} parent=1 // loop_footer
      %s13 = sadd.s32 1, %s9
    $region7: #{gaussian_policy_forward.3} parent=1 // loop_footer_branch
      %8 = sbr.rel target = $region3
    $region8: #{gaussian_policy_forward.3} parent=1 // loop_exit
      _

// kernel: gaussian_policy_forward.4
$region0: #{gaussian_policy_forward.4}
  #allocation0 [shape = 'u32[]', space=smem, size = 0x4, offset = 0x4, fixed_abs, tag = 'smem constant byte address 0x4 - core index']
  #allocation1 [shape = 'u32[144,128]{1,0:T(1,128)}', space=vmem, size = 0x12000, scoped, tag = 'internal scratch']
  %s0 = inlined_call_operand.vmem [shape: f32[288,400], index: 0, kind: input, shape index: {}]
  %s1 = inlined_call_operand.vmem [shape: f32[400,32], index: 1, kind: input, shape index: {}]
  %s2 = inlined_call_operand.vmem [shape: f32[1,32], index: 2, kind: input, shape index: {}]
  %s3 = inlined_call_operand.vmem [shape: f32[288,32], index: 3, kind: output, shape index: {}]
  %s4 = sld [smem:[#allocation0]]
  $region22: #{gaussian_policy_forward.4} parent=0
    _
  %s6 = ssub.s32 1, %s4
  %s7 = scalar_select 0, %s6, %s4
  // Predicated region
  $region2: #{gaussian_policy_forward.4} parent=0 // pred_check
    _
  $region3: #{gaussian_policy_forward.4} parent=0 // pred_check_branch
    %9 = sbr.rel (0) target = $region5
  $region4: #{gaussian_policy_forward.4} parent=0 // pred_region
    _
  $region5: #{gaussian_policy_forward.4} parent=0 // pred_fallthru
    _
  // Predicated region
  $region6: #{gaussian_policy_forward.4} parent=0 // pred_check
    _
  $region7: #{gaussian_policy_forward.4} parent=0 // pred_check_branch
    %11 = sbr.rel (0) target = $region9
  $region8: #{gaussian_policy_forward.4} parent=0 // pred_region
    _
  $region9: #{gaussian_policy_forward.4} parent=0 // pred_fallthru
    _
  // Predicated region
  $region10: #{gaussian_policy_forward.4} parent=0 // pred_check
    _
  $region11: #{gaussian_policy_forward.4} parent=0 // pred_check_branch
    %13 = sbr.rel (0) target = $region13
  $region12: #{gaussian_policy_forward.4} parent=0 // pred_region
    _
  $region13: #{gaussian_policy_forward.4} parent=0 // pred_fallthru
    _
  %v14 = vld [vmem:[%s0] sm:$0xff]
  %v15 = vld [vmem:[%s0 + $0x8] sm:$0xff]
  %v16 = vld [vmem:[%s0 + $0x10] sm:$0xff]
  %v17 = vld [vmem:[%s0 + $0x18] sm:$0xff]
  %v18 = vld [vmem:[%s0 + $0x20] sm:$0xff]
  %v19 = vld [vmem:[%s0 + $0x28] sm:$0xff]
  %v20 = vld [vmem:[%s0 + $0x30] sm:$0xff]
  %v21 = vld [vmem:[%s0 + $0x38] sm:$0xff]
  %v22 = vld [vmem:[%s0 + $0x40] sm:$0xff]
  %v23 = vld [vmem:[%s0 + $0x48] sm:$0xff]
  %v24 = vld [vmem:[%s0 + $0x50] sm:$0xff]
  %v25 = vld [vmem:[%s0 + $0x58] sm:$0xff]
  %v26 = vld [vmem:[%s0 + $0x60] sm:$0xff]
  %v27 = vld [vmem:[%s0 + $0x68] sm:$0xff]
  %v28 = vld [vmem:[%s0 + $0x70] sm:$0xff]
  %v29 = vld [vmem:[%s0 + $0x78] sm:$0xff]
  %v30 = vld [vmem:[%s0 + $0x80] sm:$0xff]
  %v31 = vld [vmem:[%s0 + $0x88] sm:$0xff]
  %v32 = vld [vmem:[%s0 + $0x90] sm:$0xff]
  %v33 = vld [vmem:[%s0 + $0x98] sm:$0xff]
  %v34 = vld [vmem:[%s0 + $0xa0] sm:$0xff]
  %v35 = vld [vmem:[%s0 + $0xa8] sm:$0xff]
  %v36 = vld [vmem:[%s0 + $0xb0] sm:$0xff]
  %v37 = vld [vmem:[%s0 + $0xb8] sm:$0xff]
  %v38 = vld [vmem:[%s0 + $0xc0] sm:$0xff]
  %v39 = vld [vmem:[%s0 + $0xc8] sm:$0xff]
  %v40 = vld [vmem:[%s0 + $0xd0] sm:$0xff]
  %v41 = vld [vmem:[%s0 + $0xd8] sm:$0xff]
  %v42 = vld [vmem:[%s0 + $0xe0] sm:$0xff]
  %v43 = vld [vmem:[%s0 + $0xe8] sm:$0xff]
  %v44 = vld [vmem:[%s0 + $0xf0] sm:$0xff]
  %v45 = vld [vmem:[%s0 + $0xf8] sm:$0xff]
  %v46 = vld [vmem:[%s0 + $0x100] sm:$0xff]
  %v47 = vld [vmem:[%s0 + $0x108] sm:$0xff]
  %v48 = vld [vmem:[%s0 + $0x110] sm:$0xff]
  %v49 = vld [vmem:[%s0 + $0x118] sm:$0xff]
  %v50 = vld [vmem:[%s0 + $0x120] sm:$0xff]
  %v51 = vld [vmem:[%s0 + $0x128] sm:$0xff]
  %v52 = vld [vmem:[%s0 + $0x130] sm:$0xff]
  %v53 = vld [vmem:[%s0 + $0x138] sm:$0xff]
  %v54 = vld [vmem:[%s0 + $0x140] sm:$0xff]
  %v55 = vld [vmem:[%s0 + $0x148] sm:$0xff]
  %v56 = vld [vmem:[%s0 + $0x150] sm:$0xff]
  %v57 = vld [vmem:[%s0 + $0x158] sm:$0xff]
  %v58 = vld [vmem:[%s0 + $0x160] sm:$0xff]
  %v59 = vld [vmem:[%s0 + $0x168] sm:$0xff]
  %v60 = vld [vmem:[%s0 + $0x170] sm:$0xff]
  %v61 = vld [vmem:[%s0 + $0x178] sm:$0xff]
  %v62 = vld [vmem:[%s0 + $0x180] sm:$0xff]
  %v63 = vld [vmem:[%s0 + $0x188] sm:$0xff]
  %v64 = vld [vmem:[%s0 + $0x190] sm:$0xff]
  %v65 = vld [vmem:[%s0 + $0x198] sm:$0xff]
  %v66 = vld [vmem:[%s0 + $0x1a0] sm:$0xff]
  %v67 = vld [vmem:[%s0 + $0x1a8] sm:$0xff]
  %v68 = vld [vmem:[%s0 + $0x1b0] sm:$0xff]
  %v69 = vld [vmem:[%s0 + $0x1b8] sm:$0xff]
  %v70 = vld [vmem:[%s0 + $0x1c0] sm:$0xff]
  %v71 = vld [vmem:[%s0 + $0x1c8] sm:$0xff]
  %v72 = vld [vmem:[%s0 + $0x1d0] sm:$0xff]
  %v73 = vld [vmem:[%s0 + $0x1d8] sm:$0xff]
  %v74 = vld [vmem:[%s0 + $0x1e0] sm:$0xff]
  %v75 = vld [vmem:[%s0 + $0x1e8] sm:$0xff]
  %v76 = vld [vmem:[%s0 + $0x1f0] sm:$0xff]
  %v77 = vld [vmem:[%s0 + $0x1f8] sm:$0xff]
  %v78 = vld [vmem:[%s0 + $0x200] sm:$0xff]
  %v79 = vld [vmem:[%s0 + $0x208] sm:$0xff]
  %v80 = vld [vmem:[%s0 + $0x210] sm:$0xff]
  %v81 = vld [vmem:[%s0 + $0x218] sm:$0xff]
  %v82 = vld [vmem:[%s0 + $0x220] sm:$0xff]
  %v83 = vld [vmem:[%s0 + $0x228] sm:$0xff]
  %v84 = vld [vmem:[%s0 + $0x230] sm:$0xff]
  %v85 = vld [vmem:[%s0 + $0x238] sm:$0xff]
  %v86 = vld [vmem:[%s0 + $0x240] sm:$0xff]
  %v87 = vld [vmem:[%s0 + $0x248] sm:$0xff]
  %v88 = vld [vmem:[%s0 + $0x250] sm:$0xff]
  %v89 = vld [vmem:[%s0 + $0x258] sm:$0xff]
  %v90 = vld [vmem:[%s0 + $0x260] sm:$0xff]
  %v91 = vld [vmem:[%s0 + $0x268] sm:$0xff]
  %v92 = vld [vmem:[%s0 + $0x270] sm:$0xff]
  %v93 = vld [vmem:[%s0 + $0x278] sm:$0xff]
  %v94 = vld [vmem:[%s0 + $0x280] sm:$0xff]
  %v95 = vld [vmem:[%s0 + $0x288] sm:$0xff]
  %v96 = vld [vmem:[%s0 + $0x290] sm:$0xff]
  %v97 = vld [vmem:[%s0 + $0x298] sm:$0xff]
  %v98 = vld [vmem:[%s0 + $0x2a0] sm:$0xff]
  %v99 = vld [vmem:[%s0 + $0x2a8] sm:$0xff]
  %v100 = vld [vmem:[%s0 + $0x2b0] sm:$0xff]
  %v101 = vld [vmem:[%s0 + $0x2b8] sm:$0xff]
  %v102 = vld [vmem:[%s0 + $0x2c0] sm:$0xff]
  %v103 = vld [vmem:[%s0 + $0x2c8] sm:$0xff]
  %v104 = vld [vmem:[%s0 + $0x2d0] sm:$0xff]
  %v105 = vld [vmem:[%s0 + $0x2d8] sm:$0xff]
  %v106 = vld [vmem:[%s0 + $0x2e0] sm:$0xff]
  %v107 = vld [vmem:[%s0 + $0x2e8] sm:$0xff]
  %v108 = vld [vmem:[%s0 + $0x2f0] sm:$0xff]
  %v109 = vld [vmem:[%s0 + $0x2f8] sm:$0xff]
  %v110 = vld [vmem:[%s0 + $0x300] sm:$0xff]
  %v111 = vld [vmem:[%s0 + $0x308] sm:$0xff]
  %v112 = vld [vmem:[%s0 + $0x310] sm:$0xff]
  %v113 = vld [vmem:[%s0 + $0x318] sm:$0xff]
  %v114 = vld [vmem:[%s0 + $0x320] sm:$0xff]
  %v115 = vld [vmem:[%s0 + $0x328] sm:$0xff]
  %v116 = vld [vmem:[%s0 + $0x330] sm:$0xff]
  %v117 = vld [vmem:[%s0 + $0x338] sm:$0xff]
  %v118 = vld [vmem:[%s0 + $0x340] sm:$0xff]
  %v119 = vld [vmem:[%s0 + $0x348] sm:$0xff]
  %v120 = vld [vmem:[%s0 + $0x350] sm:$0xff]
  %v121 = vld [vmem:[%s0 + $0x358] sm:$0xff]
  %v122 = vld [vmem:[%s0 + $0x360] sm:$0xff]
  %v123 = vld [vmem:[%s0 + $0x368] sm:$0xff]
  %v124 = vld [vmem:[%s0 + $0x370] sm:$0xff]
  %v125 = vld [vmem:[%s0 + $0x378] sm:$0xff]
  %v126 = vld [vmem:[%s0 + $0x380] sm:$0xff]
  %v127 = vld [vmem:[%s0 + $0x388] sm:$0xff]
  %v128 = vld [vmem:[%s0 + $0x390] sm:$0xff]
  %v129 = vld [vmem:[%s0 + $0x398] sm:$0xff]
  %v130 = vld [vmem:[%s0 + $0x3a0] sm:$0xff]
  %v131 = vld [vmem:[%s0 + $0x3a8] sm:$0xff]
  %v132 = vld [vmem:[%s0 + $0x3b0] sm:$0xff]
  %v133 = vld [vmem:[%s0 + $0x3b8] sm:$0xff]
  %v134 = vld [vmem:[%s0 + $0x3c0] sm:$0xff]
  %v135 = vld [vmem:[%s0 + $0x3c8] sm:$0xff]
  %v136 = vld [vmem:[%s0 + $0x3d0] sm:$0xff]
  %v137 = vld [vmem:[%s0 + $0x3d8] sm:$0xff]
  %v138 = vld [vmem:[%s0 + $0x3e0] sm:$0xff]
  %v139 = vld [vmem:[%s0 + $0x3e8] sm:$0xff]
  %v140 = vld [vmem:[%s0 + $0x3f0] sm:$0xff]
  %v141 = vld [vmem:[%s0 + $0x3f8] sm:$0xff]
  %v142 = vld [vmem:[%s0 + $0x400] sm:$0xff]
  %v143 = vld [vmem:[%s0 + $0x408] sm:$0xff]
  %v144 = vld [vmem:[%s0 + $0x410] sm:$0xff]
  %v145 = vld [vmem:[%s0 + $0x418] sm:$0xff]
  %v146 = vld [vmem:[%s0 + $0x420] sm:$0xff]
  %v147 = vld [vmem:[%s0 + $0x428] sm:$0xff]
  %v148 = vld [vmem:[%s0 + $0x430] sm:$0xff]
  %v149 = vld [vmem:[%s0 + $0x438] sm:$0xff]
  %v150 = vld [vmem:[%s0 + $0x440] sm:$0xff]
  %v151 = vld [vmem:[%s0 + $0x448] sm:$0xff]
  %v152 = vld [vmem:[%s0 + $0x450] sm:$0xff]
  %v153 = vld [vmem:[%s0 + $0x458] sm:$0xff]
  %v154 = vld [vmem:[%s0 + $0x460] sm:$0xff]
  %v155 = vld [vmem:[%s0 + $0x468] sm:$0xff]
  %v156 = vld [vmem:[%s0 + $0x470] sm:$0xff]
  %v157 = vld [vmem:[%s0 + $0x478] sm:$0xff]
  %v158 = vld [vmem:[%s1] sm:$0xff]
  %v159 = vld [vmem:[%s1 + $0x8] sm:$0xff]
  %v160 = vld [vmem:[%s1 + $0x10] sm:$0xff]
  %v161 = vld [vmem:[%s1 + $0x18] sm:$0xff]
  %v162 = vld [vmem:[%s1 + $0x20] sm:$0xff]
  %v163 = vld [vmem:[%s1 + $0x28] sm:$0xff]
  %v164 = vld [vmem:[%s1 + $0x30] sm:$0xff]
  %v165 = vld [vmem:[%s1 + $0x38] sm:$0xff]
  %v166 = vld [vmem:[%s1 + $0x40] sm:$0xff]
  %v167 = vld [vmem:[%s1 + $0x48] sm:$0xff]
  %v168 = vld [vmem:[%s1 + $0x50] sm:$0xff]
  %v169 = vld [vmem:[%s1 + $0x58] sm:$0xff]
  %v170 = vld [vmem:[%s1 + $0x60] sm:$0xff]
  %v171 = vld [vmem:[%s1 + $0x68] sm:$0xff]
  %v172 = vld [vmem:[%s1 + $0x70] sm:$0xff]
  %v173 = vld [vmem:[%s1 + $0x78] sm:$0xff]
  %v174 = vld [vmem:[%s1 + $0x80] sm:$0xff]
  %v175 = vld [vmem:[%s1 + $0x88] sm:$0xff]
  %v176 = vld [vmem:[%s1 + $0x90] sm:$0xff]
  %v177 = vld [vmem:[%s1 + $0x98] sm:$0xff]
  %v178 = vld [vmem:[%s1 + $0xa0] sm:$0xff]
  %v179 = vld [vmem:[%s1 + $0xa8] sm:$0xff]
  %v180 = vld [vmem:[%s1 + $0xb0] sm:$0xff]
  %v181 = vld [vmem:[%s1 + $0xb8] sm:$0xff]
  %v182 = vld [vmem:[%s1 + $0xc0] sm:$0xff]
  %v183 = vld [vmem:[%s1 + $0xc8] sm:$0xff]
  %v184 = vld [vmem:[%s1 + $0xd0] sm:$0xff]
  %v185 = vld [vmem:[%s1 + $0xd8] sm:$0xff]
  %v186 = vld [vmem:[%s1 + $0xe0] sm:$0xff]
  %v187 = vld [vmem:[%s1 + $0xe8] sm:$0xff]
  %v188 = vld [vmem:[%s1 + $0xf0] sm:$0xff]
  %v189 = vld [vmem:[%s1 + $0xf8] sm:$0xff]
  %v190 = vld [vmem:[%s1 + $0x100] sm:$0xff]
  %v191 = vld [vmem:[%s1 + $0x108] sm:$0xff]
  %v192 = vld [vmem:[%s1 + $0x110] sm:$0xff]
  %v193 = vld [vmem:[%s1 + $0x118] sm:$0xff]
  %v194 = vld [vmem:[%s1 + $0x120] sm:$0xff]
  %v195 = vld [vmem:[%s1 + $0x128] sm:$0xff]
  %v196 = vld [vmem:[%s1 + $0x130] sm:$0xff]
  %v197 = vld [vmem:[%s1 + $0x138] sm:$0xff]
  %v198 = vld [vmem:[%s1 + $0x140] sm:$0xff]
  %v199 = vld [vmem:[%s1 + $0x148] sm:$0xff]
  %v200 = vld [vmem:[%s1 + $0x150] sm:$0xff]
  %v201 = vld [vmem:[%s1 + $0x158] sm:$0xff]
  %v202 = vld [vmem:[%s1 + $0x160] sm:$0xff]
  %v203 = vld [vmem:[%s1 + $0x168] sm:$0xff]
  %v204 = vld [vmem:[%s1 + $0x170] sm:$0xff]
  %v205 = vld [vmem:[%s1 + $0x178] sm:$0xff]
  %v206 = vld [vmem:[%s1 + $0x180] sm:$0xff]
  %v207 = vld [vmem:[%s1 + $0x188] sm:$0xff]
  %v208 = vld [vmem:[%s2] sm:$0x1]
  %v210 = vlaneseq
  %v211 = vshrl.u32 %v210, 7
  %v212 = vsub.s32 0, %v211
  %v213 = vrot.slane %v208, %v212
  %vm215 = vcmask 130048
  %v217 = vsel %vm215, %v17, 0
  %v220 = vsel %vm215, %v21, 0
  %v223 = vsel %vm215, %v25, 0
  %v226 = vsel %vm215, %v29, 0
  %v229 = vsel %vm215, %v33, 0
  %v232 = vsel %vm215, %v37, 0
  %v235 = vsel %vm215, %v41, 0
  %v238 = vsel %vm215, %v45, 0
  %v241 = vsel %vm215, %v49, 0
  %v244 = vsel %vm215, %v53, 0
  %v247 = vsel %vm215, %v57, 0
  %v250 = vsel %vm215, %v61, 0
  %v253 = vsel %vm215, %v65, 0
  %v256 = vsel %vm215, %v69, 0
  %v259 = vsel %vm215, %v73, 0
  %v262 = vsel %vm215, %v77, 0
  %v265 = vsel %vm215, %v81, 0
  %v268 = vsel %vm215, %v85, 0
  %v271 = vsel %vm215, %v89, 0
  %v274 = vsel %vm215, %v93, 0
  %v277 = vsel %vm215, %v97, 0
  %v280 = vsel %vm215, %v101, 0
  %v283 = vsel %vm215, %v105, 0
  %v286 = vsel %vm215, %v109, 0
  %v289 = vsel %vm215, %v113, 0
  %v292 = vsel %vm215, %v117, 0
  %v295 = vsel %vm215, %v121, 0
  %v298 = vsel %vm215, %v125, 0
  %v301 = vsel %vm215, %v129, 0
  %v304 = vsel %vm215, %v133, 0
  %v307 = vsel %vm215, %v137, 0
  %v310 = vsel %vm215, %v141, 0
  %v313 = vsel %vm215, %v145, 0
  %v316 = vsel %vm215, %v149, 0
  %v319 = vsel %vm215, %v153, 0
  %v322 = vsel %vm215, %v157, 0
  %324 = vmatprep.subr.mxu0 0.0
  %325 = vmatpush1.msra.mxu0 %v158
  %326 = vmatprep.subr.mxu0 0.0
  %327 = vmatpush1.msra.mxu0 %v159
  %328 = vmatprep.subr.mxu0 0.0
  %329 = vmatpush1.msra.mxu0 %v160
  %330 = vmatprep.subr.mxu0 0.0
  %331 = vmatpush1.msra.mxu0 %v161
  %332 = vmatprep.subr.mxu0 0.0
  %333 = vmatpush1.msra.mxu0 %v162
  %334 = vmatprep.subr.mxu0 0.0
  %335 = vmatpush1.msra.mxu0 %v163
  %336 = vmatprep.subr.mxu0 0.0
  %337 = vmatpush1.msra.mxu0 %v164
  %338 = vmatprep.subr.mxu0 0.0
  %339 = vmatpush1.msra.mxu0 %v165
  %340 = vmatprep.subr.mxu0 0.0
  %341 = vmatpush1.msra.mxu0 %v166
  %342 = vmatprep.subr.mxu0 0.0
  %343 = vmatpush1.msra.mxu0 %v167
  %344 = vmatprep.subr.mxu0 0.0
  %345 = vmatpush1.msra.mxu0 %v168
  %346 = vmatprep.subr.mxu0 0.0
  %347 = vmatpush1.msra.mxu0 %v169
  %348 = vmatprep.subr.mxu0 0.0
  %349 = vmatpush1.msra.mxu0 %v170
  %350 = vmatprep.subr.mxu0 0.0
  %351 = vmatpush1.msra.mxu0 %v171
  %352 = vmatprep.subr.mxu0 0.0
  %353 = vmatpush1.msra.mxu0 %v172
  %354 = vmatprep.subr.mxu0 0.0
  %355 = vmatpush1.msra.mxu0 %v173
  %356 = vmatprep.subr.mxu0 0.0
  %357 = vmatpush1.msra.mxu0 %v174
  %358 = vmatprep.subr.mxu0 0.0
  %359 = vmatpush1.msra.mxu0 %v175
  %360 = vmatprep.subr.mxu0 0.0
  %361 = vmatpush1.msra.mxu0 %v176
  %362 = vmatprep.subr.mxu0 0.0
  %363 = vmatpush1.msra.mxu0 %v177
  %364 = vmatprep.subr.mxu0 0.0
  %365 = vmatpush1.msra.mxu0 %v178
  %366 = vmatprep.subr.mxu0 0.0
  %367 = vmatpush1.msra.mxu0 %v179
  %368 = vmatprep.subr.mxu0 0.0
  %369 = vmatpush1.msra.mxu0 %v180
  %370 = vmatprep.subr.mxu0 0.0
  %371 = vmatpush1.msra.mxu0 %v181
  %372 = vmatprep.subr.mxu0 0.0
  %373 = vmatpush1.msra.mxu0 %v182
  %374 = vmatprep.subr.mxu0 0.0
  %375 = vmatpush1.msra.mxu0 %v183
  %376 = vmatprep.subr.mxu0 0.0
  %377 = vmatpush1.msra.mxu0 %v184
  %378 = vmatprep.subr.mxu0 0.0
  %379 = vmatpush1.msra.mxu0 %v185
  %380 = vmatprep.subr.mxu0 0.0
  %381 = vmatpush1.msra.mxu0 %v186
  %382 = vmatprep.subr.mxu0 0.0
  %383 = vmatpush1.msra.mxu0 %v187
  %384 = vmatprep.subr.mxu0 0.0
  %385 = vmatpush1.msra.mxu0 %v188
  %386 = vmatprep.subr.mxu0 0.0
  %387 = vmatpush1.msra.mxu0 %v189
  %388 = vmatprep.mubr.f32.mxu0 %v15
  %389 = vmatmul.mubr.f32.gmra.mrb[0].mxu0 %v14
  %v390 = vpop.f32.mrb[0].mxu0
  %v391 = vadd.f32 %v213, %v390
  %v392 = vpop.f32.mrb[0].mxu0
  %393 = vmatprep.mubr.f32.mxu0 %v19
  %394 = vmatmul.mubr.f32.gmra.mrb[0].mxu0 %v18
  %v395 = vpop.f32.mrb[0].mxu0
  %v396 = vadd.f32 %v213, %v395
  %v397 = vpop.f32.mrb[0].mxu0
  %398 = vmatprep.mubr.f32.mxu0 %v23
  %399 = vmatmul.mubr.f32.gmra.mrb[0].mxu0 %v22
  %v400 = vpop.f32.mrb[0].mxu0
  %v401 = vadd.f32 %v213, %v400
  %v402 = vpop.f32.mrb[0].mxu0
  %403 = vmatprep.mubr.f32.mxu0 %v27
  %404 = vmatmul.mubr.f32.gmra.mrb[0].mxu0 %v26
  %v405 = vpop.f32.mrb[0].mxu0
  %v406 = vadd.f32 %v213, %v405
  %v407 = vpop.f32.mrb[0].mxu0
  %408 = vmatprep.mubr.f32.mxu0 %v31
  %409 = vmatmul.mubr.f32.gmra.mrb[0].mxu0 %v30
  %v410 = vpop.f32.mrb[0].mxu0
  %v411 = vadd.f32 %v213, %v410
  %v412 = vpop.f32.mrb[0].mxu0
  %413 = vmatprep.mubr.f32.mxu0 %v35
  %414 = vmatmul.mubr.f32.gmra.mrb[0].mxu0 %v34
  %v415 = vpop.f32.mrb[0].mxu0
  %v416 = vadd.f32 %v213, %v415
  %v417 = vpop.f32.mrb[0].mxu0
  %418 = vmatprep.mubr.f32.mxu0 %v39
  %419 = vmatmul.mubr.f32.gmra.mrb[0].mxu0 %v38
  %v420 = vpop.f32.mrb[0].mxu0
  %v421 = vadd.f32 %v213, %v420
  %v422 = vpop.f32.mrb[0].mxu0
  %423 = vmatprep.mubr.f32.mxu0 %v43
  %424 = vmatmul.mubr.f32.gmra.mrb[0].mxu0 %v42
  %v425 = vpop.f32.mrb[0].mxu0
  %v426 = vadd.f32 %v213, %v425
  %v427 = vpop.f32.mrb[0].mxu0
  %428 = vmatprep.mubr.f32.mxu0 %v47
  %429 = vmatmul.mubr.f32.gmra.mrb[0].mxu0 %v46
  %v430 = vpop.f32.mrb[0].mxu0
  %v431 = vadd.f32 %v213, %v430
  %v432 = vpop.f32.mrb[0].mxu0
  %433 = vmatprep.mubr.f32.mxu0 %v51
  %434 = vmatmul.mubr.f32.gmra.mrb[0].mxu0 %v50
  %v435 = vpop.f32.mrb[0].mxu0
  %v436 = vadd.f32 %v213, %v435
  %v437 = vpop.f32.mrb[0].mxu0
  %438 = vmatprep.mubr.f32.mxu0 %v55
  %439 = vmatmul.mubr.f32.gmra.mrb[0].mxu0 %v54
  %v440 = vpop.f32.mrb[0].mxu0
  %v441 = vadd.f32 %v213, %v440
  %v442 = vpop.f32.mrb[0].mxu0
  %443 = vmatprep.mubr.f32.mxu0 %v59
  %444 = vmatmul.mubr.f32.gmra.mrb[0].mxu0 %v58
  %v445 = vpop.f32.mrb[0].mxu0
  %v446 = vadd.f32 %v213, %v445
  %v447 = vpop.f32.mrb[0].mxu0
  %448 = vmatprep.mubr.f32.mxu0 %v63
  %449 = vmatmul.mubr.f32.gmra.mrb[0].mxu0 %v62
  %v450 = vpop.f32.mrb[0].mxu0
  %v451 = vadd.f32 %v213, %v450
  %v452 = vpop.f32.mrb[0].mxu0
  %453 = vmatprep.mubr.f32.mxu0 %v67
  %454 = vmatmul.mubr.f32.gmra.mrb[0].mxu0 %v66
  %v455 = vpop.f32.mrb[0].mxu0
  %v456 = vadd.f32 %v213, %v455
  %v457 = vpop.f32.mrb[0].mxu0
  %458 = vmatprep.mubr.f32.mxu0 %v71
  %459 = vmatmul.mubr.f32.gmra.mrb[0].mxu0 %v70
  %v460 = vpop.f32.mrb[0].mxu0
  %v461 = vadd.f32 %v213, %v460
  %v462 = vpop.f32.mrb[0].mxu0
  %463 = vmatprep.mubr.f32.mxu0 %v75
  %464 = vmatmul.mubr.f32.gmra.mrb[0].mxu0 %v74
  %v465 = vpop.f32.mrb[0].mxu0
  %v466 = vadd.f32 %v213, %v465
  %v467 = vpop.f32.mrb[0].mxu0
  %468 = vmatprep.mubr.f32.mxu0 %v79
  %469 = vmatmul.mubr.f32.gmra.mrb[0].mxu0 %v78
  %v470 = vpop.f32.mrb[0].mxu0
  %v471 = vadd.f32 %v213, %v470
  %v472 = vpop.f32.mrb[0].mxu0
  %473 = vmatprep.mubr.f32.mxu0 %v83
  %474 = vmatmul.mubr.f32.gmra.mrb[0].mxu0 %v82
  %v475 = vpop.f32.mrb[0].mxu0
  %v476 = vadd.f32 %v213, %v475
  %v477 = vpop.f32.mrb[0].mxu0
  %478 = vmatprep.mubr.f32.mxu0 %v87
  %479 = vmatmul.mubr.f32.gmra.mrb[0].mxu0 %v86
  %v480 = vpop.f32.mrb[0].mxu0
  %v481 = vadd.f32 %v213, %v480
  %v482 = vpop.f32.mrb[0].mxu0
  %483 = vmatprep.mubr.f32.mxu0 %v91
  %484 = vmatmul.mubr.f32.gmra.mrb[0].mxu0 %v90
  %v485 = vpop.f32.mrb[0].mxu0
  %v486 = vadd.f32 %v213, %v485
  %v487 = vpop.f32.mrb[0].mxu0
  %488 = vmatprep.mubr.f32.mxu0 %v95
  %489 = vmatmul.mubr.f32.gmra.mrb[0].mxu0 %v94
  %v490 = vpop.f32.mrb[0].mxu0
  %v491 = vadd.f32 %v213, %v490
  %v492 = vpop.f32.mrb[0].mxu0
  %493 = vmatprep.mubr.f32.mxu0 %v99
  %494 = vmatmul.mubr.f32.gmra.mrb[0].mxu0 %v98
  %v495 = vpop.f32.mrb[0].mxu0
  %v496 = vadd.f32 %v213, %v495
  %v497 = vpop.f32.mrb[0].mxu0
  %498 = vmatprep.mubr.f32.mxu0 %v103
  %499 = vmatmul.mubr.f32.gmra.mrb[0].mxu0 %v102
  %v500 = vpop.f32.mrb[0].mxu0
  %v501 = vadd.f32 %v213, %v500
  %v502 = vpop.f32.mrb[0].mxu0
  %503 = vmatprep.mubr.f32.mxu0 %v107
  %504 = vmatmul.mubr.f32.gmra.mrb[0].mxu0 %v106
  %v505 = vpop.f32.mrb[0].mxu0
  %v506 = vadd.f32 %v213, %v505
  %v507 = vpop.f32.mrb[0].mxu0
  %508 = vmatprep.mubr.f32.mxu0 %v111
  %509 = vmatmul.mubr.f32.gmra.mrb[0].mxu0 %v110
  %v510 = vpop.f32.mrb[0].mxu0
  %v511 = vadd.f32 %v213, %v510
  %v512 = vpop.f32.mrb[0].mxu0
  %513 = vmatprep.mubr.f32.mxu0 %v115
  %514 = vmatmul.mubr.f32.gmra.mrb[0].mxu0 %v114
  %v515 = vpop.f32.mrb[0].mxu0
  %v516 = vadd.f32 %v213, %v515
  %v517 = vpop.f32.mrb[0].mxu0
  %518 = vmatprep.mubr.f32.mxu0 %v119
  %519 = vmatmul.mubr.f32.gmra.mrb[0].mxu0 %v118
  %v520 = vpop.f32.mrb[0].mxu0
  %v521 = vadd.f32 %v213, %v520
  %v522 = vpop.f32.mrb[0].mxu0
  %523 = vmatprep.mubr.f32.mxu0 %v123
  %524 = vmatmul.mubr.f32.gmra.mrb[0].mxu0 %v122
  %v525 = vpop.f32.mrb[0].mxu0
  %v526 = vadd.f32 %v213, %v525
  %v527 = vpop.f32.mrb[0].mxu0
  %528 = vmatprep.mubr.f32.mxu0 %v127
  %529 = vmatmul.mubr.f32.gmra.mrb[0].mxu0 %v126
  %v530 = vpop.f32.mrb[0].mxu0
  %v531 = vadd.f32 %v213, %v530
  %v532 = vpop.f32.mrb[0].mxu0
  %533 = vmatprep.mubr.f32.mxu0 %v131
  %534 = vmatmul.mubr.f32.gmra.mrb[0].mxu0 %v130
  %v535 = vpop.f32.mrb[0].mxu0
  %v536 = vadd.f32 %v213, %v535
  %v537 = vpop.f32.mrb[0].mxu0
  %538 = vmatprep.mubr.f32.mxu0 %v135
  %539 = vmatmul.mubr.f32.gmra.mrb[0].mxu0 %v134
  %v540 = vpop.f32.mrb[0].mxu0
  %v541 = vadd.f32 %v213, %v540
  %v542 = vpop.f32.mrb[0].mxu0
  %543 = vmatprep.mubr.f32.mxu0 %v139
  %544 = vmatmul.mubr.f32.gmra.mrb[0].mxu0 %v138
  %v545 = vpop.f32.mrb[0].mxu0
  %v546 = vadd.f32 %v213, %v545
  %v547 = vpop.f32.mrb[0].mxu0
  %548 = vmatprep.mubr.f32.mxu0 %v143
  %549 = vmatmul.mubr.f32.gmra.mrb[0].mxu0 %v142
  %v550 = vpop.f32.mrb[0].mxu0
  %v551 = vadd.f32 %v213, %v550
  %v552 = vpop.f32.mrb[0].mxu0
  %553 = vmatprep.mubr.f32.mxu0 %v147
  %554 = vmatmul.mubr.f32.gmra.mrb[0].mxu0 %v146
  %v555 = vpop.f32.mrb[0].mxu0
  %v556 = vadd.f32 %v213, %v555
  %v557 = vpop.f32.mrb[0].mxu0
  %558 = vmatprep.mubr.f32.mxu0 %v151
  %559 = vmatmul.mubr.f32.gmra.mrb[0].mxu0 %v150
  %v560 = vpop.f32.mrb[0].mxu0
  %v561 = vadd.f32 %v213, %v560
  %v562 = vpop.f32.mrb[0].mxu0
  %563 = vmatprep.mubr.f32.mxu0 %v155
  %564 = vmatmul.mubr.f32.gmra.mrb[0].mxu0 %v154
  %v565 = vpop.f32.mrb[0].mxu0
  %v566 = vadd.f32 %v213, %v565
  %v567 = vpop.f32.mrb[0].mxu0
  %568 = vdwg.mxu0
  %569 = vmatprep.subr.mxu0 0.0
  %570 = vmatpush1.msra.mxu0 %v190
  %571 = vmatprep.subr.mxu0 0.0
  %572 = vmatpush1.msra.mxu0 %v191
  %573 = vmatprep.subr.mxu0 0.0
  %574 = vmatpush1.msra.mxu0 %v192
  %575 = vmatprep.subr.mxu0 0.0
  %576 = vmatpush1.msra.mxu0 %v193
  %577 = vmatprep.subr.mxu0 0.0
  %578 = vmatpush1.msra.mxu0 %v194
  %579 = vmatprep.subr.mxu0 0.0
  %580 = vmatpush1.msra.mxu0 %v195
  %581 = vmatprep.subr.mxu0 0.0
  %582 = vmatpush1.msra.mxu0 %v196
  %583 = vmatprep.subr.mxu0 0.0
  %584 = vmatpush1.msra.mxu0 %v197
  %585 = vmatprep.subr.mxu0 0.0
  %586 = vmatpush1.msra.mxu0 %v198
  %587 = vmatprep.subr.mxu0 0.0
  %588 = vmatpush1.msra.mxu0 %v199
  %589 = vmatprep.subr.mxu0 0.0
  %590 = vmatpush1.msra.mxu0 %v200
  %591 = vmatprep.subr.mxu0 0.0
  %592 = vmatpush1.msra.mxu0 %v201
  %593 = vmatprep.subr.mxu0 0.0
  %594 = vmatpush1.msra.mxu0 %v202
  %595 = vmatprep.subr.mxu0 0.0
  %596 = vmatpush1.msra.mxu0 %v203
  %597 = vmatprep.subr.mxu0 0.0
  %598 = vmatpush1.msra.mxu0 %v204
  %599 = vmatprep.subr.mxu0 0.0
  %600 = vmatpush1.msra.mxu0 %v205
  %601 = vmatprep.subr.mxu0 0.0
  %602 = vmatpush1.msra.mxu0 %v206
  %603 = vmatprep.subr.mxu0 0.0
  %604 = vmatpush1.msra.mxu0 %v207
  %605 = vmatprep.subr.mxu0 0.0
  %606 = vmatpush1.msra.mxu0 0.0
  %607 = vmatprep.subr.mxu0 0.0
  %608 = vmatpush1.msra.mxu0 0.0
  %609 = vmatprep.subr.mxu0 0.0
  %610 = vmatpush1.msra.mxu0 0.0
  %611 = vmatprep.subr.mxu0 0.0
  %612 = vmatpush1.msra.mxu0 0.0
  %613 = vmatprep.subr.mxu0 0.0
  %614 = vmatpush1.msra.mxu0 0.0
  %615 = vmatprep.subr.mxu0 0.0
  %616 = vmatpush1.msra.mxu0 0.0
  %617 = vmatprep.subr.mxu0 0.0
  %618 = vmatpush1.msra.mxu0 0.0
  %619 = vmatprep.subr.mxu0 0.0
  %620 = vmatpush1.msra.mxu0 0.0
  %621 = vmatprep.subr.mxu0 0.0
  %622 = vmatpush1.msra.mxu0 0.0
  %623 = vmatprep.subr.mxu0 0.0
  %624 = vmatpush1.msra.mxu0 0.0
  %625 = vmatprep.subr.mxu0 0.0
  %626 = vmatpush1.msra.mxu0 0.0
  %627 = vmatprep.subr.mxu0 0.0
  %628 = vmatpush1.msra.mxu0 0.0
  %629 = vmatprep.subr.mxu0 0.0
  %630 = vmatpush1.msra.mxu0 0.0
  %631 = vmatprep.subr.mxu0 0.0
  %632 = vmatpush1.msra.mxu0 0.0
  %633 = vmatprep.mubr.f32.mxu0 %v217
  %634 = vmatmul.mubr.f32.gmra.mrb[0].mxu0 %v16
  %v635 = vpop.f32.mrb[0].mxu0
  %v636 = vadd.f32 %v391, %v635
  %v637 = vpop.f32.mrb[0].mxu0
  %638 = vmatprep.mubr.f32.mxu0 %v220
  %639 = vmatmul.mubr.f32.gmra.mrb[0].mxu0 %v20
  %v640 = vpop.f32.mrb[0].mxu0
  %v641 = vadd.f32 %v396, %v640
  %v642 = vpop.f32.mrb[0].mxu0
  %643 = vmatprep.mubr.f32.mxu0 %v223
  %644 = vmatmul.mubr.f32.gmra.mrb[0].mxu0 %v24
  %v645 = vpop.f32.mrb[0].mxu0
  %v646 = vadd.f32 %v401, %v645
  %v647 = vpop.f32.mrb[0].mxu0
  %648 = vmatprep.mubr.f32.mxu0 %v226
  %649 = vmatmul.mubr.f32.gmra.mrb[0].mxu0 %v28
  %v650 = vpop.f32.mrb[0].mxu0
  %v651 = vadd.f32 %v406, %v650
  %v652 = vpop.f32.mrb[0].mxu0
  %653 = vmatprep.mubr.f32.mxu0 %v229
  %654 = vmatmul.mubr.f32.gmra.mrb[0].mxu0 %v32
  %v655 = vpop.f32.mrb[0].mxu0
  %v656 = vadd.f32 %v411, %v655
  %v657 = vpop.f32.mrb[0].mxu0
  %658 = vmatprep.mubr.f32.mxu0 %v232
  %659 = vmatmul.mubr.f32.gmra.mrb[0].mxu0 %v36
  %v660 = vpop.f32.mrb[0].mxu0
  %v661 = vadd.f32 %v416, %v660
  %v662 = vpop.f32.mrb[0].mxu0
  %663 = vmatprep.mubr.f32.mxu0 %v235
  %664 = vmatmul.mubr.f32.gmra.mrb[0].mxu0 %v40
  %v665 = vpop.f32.mrb[0].mxu0
  %v666 = vadd.f32 %v421, %v665
  %v667 = vpop.f32.mrb[0].mxu0
  %668 = vmatprep.mubr.f32.mxu0 %v238
  %669 = vmatmul.mubr.f32.gmra.mrb[0].mxu0 %v44
  %v670 = vpop.f32.mrb[0].mxu0
  %v671 = vadd.f32 %v426, %v670
  %v672 = vpop.f32.mrb[0].mxu0
  %673 = vmatprep.mubr.f32.mxu0 %v241
  %674 = vmatmul.mubr.f32.gmra.mrb[0].mxu0 %v48
  %v675 = vpop.f32.mrb[0].mxu0
  %v676 = vadd.f32 %v431, %v675
  %v677 = vpop.f32.mrb[0].mxu0
  %678 = vmatprep.mubr.f32.mxu0 %v244
  %679 = vmatmul.mubr.f32.gmra.mrb[0].mxu0 %v52
  %v680 = vpop.f32.mrb[0].mxu0
  %v681 = vadd.f32 %v436, %v680
  %v682 = vpop.f32.mrb[0].mxu0
  %683 = vmatprep.mubr.f32.mxu0 %v247
  %684 = vmatmul.mubr.f32.gmra.mrb[0].mxu0 %v56
  %v685 = vpop.f32.mrb[0].mxu0
  %v686 = vadd.f32 %v441, %v685
  %v687 = vpop.f32.mrb[0].mxu0
  %688 = vmatprep.mubr.f32.mxu0 %v250
  %689 = vmatmul.mubr.f32.gmra.mrb[0].mxu0 %v60
  %v690 = vpop.f32.mrb[0].mxu0
  %v691 = vadd.f32 %v446, %v690
  %v692 = vpop.f32.mrb[0].mxu0
  %693 = vmatprep.mubr.f32.mxu0 %v253
  %694 = vmatmul.mubr.f32.gmra.mrb[0].mxu0 %v64
  %v695 = vpop.f32.mrb[0].mxu0
  %v696 = vadd.f32 %v451, %v695
  %v697 = vpop.f32.mrb[0].mxu0
  %698 = vmatprep.mubr.f32.mxu0 %v256
  %699 = vmatmul.mubr.f32.gmra.mrb[0].mxu0 %v68
  %v700 = vpop.f32.mrb[0].mxu0
  %v701 = vadd.f32 %v456, %v700
  %v702 = vpop.f32.mrb[0].mxu0
  %703 = vmatprep.mubr.f32.mxu0 %v259
  %704 = vmatmul.mubr.f32.gmra.mrb[0].mxu0 %v72
  %v705 = vpop.f32.mrb[0].mxu0
  %v706 = vadd.f32 %v461, %v705
  %v707 = vpop.f32.mrb[0].mxu0
  %708 = vmatprep.mubr.f32.mxu0 %v262
  %709 = vmatmul.mubr.f32.gmra.mrb[0].mxu0 %v76
  %v710 = vpop.f32.mrb[0].mxu0
  %v711 = vadd.f32 %v466, %v710
  %v712 = vpop.f32.mrb[0].mxu0
  %713 = vmatprep.mubr.f32.mxu0 %v265
  %714 = vmatmul.mubr.f32.gmra.mrb[0].mxu0 %v80
  %v715 = vpop.f32.mrb[0].mxu0
  %v716 = vadd.f32 %v471, %v715
  %v717 = vpop.f32.mrb[0].mxu0
  %718 = vmatprep.mubr.f32.mxu0 %v268
  %719 = vmatmul.mubr.f32.gmra.mrb[0].mxu0 %v84
  %v720 = vpop.f32.mrb[0].mxu0
  %v721 = vadd.f32 %v476, %v720
  %v722 = vpop.f32.mrb[0].mxu0
  %723 = vmatprep.mubr.f32.mxu0 %v271
  %724 = vmatmul.mubr.f32.gmra.mrb[0].mxu0 %v88
  %v725 = vpop.f32.mrb[0].mxu0
  %v726 = vadd.f32 %v481, %v725
  %v727 = vpop.f32.mrb[0].mxu0
  %728 = vmatprep.mubr.f32.mxu0 %v274
  %729 = vmatmul.mubr.f32.gmra.mrb[0].mxu0 %v92
  %v730 = vpop.f32.mrb[0].mxu0
  %v731 = vadd.f32 %v486, %v730
  %v732 = vpop.f32.mrb[0].mxu0
  %733 = vmatprep.mubr.f32.mxu0 %v277
  %734 = vmatmul.mubr.f32.gmra.mrb[0].mxu0 %v96
  %v735 = vpop.f32.mrb[0].mxu0
  %v736 = vadd.f32 %v491, %v735
  %v737 = vpop.f32.mrb[0].mxu0
  %738 = vmatprep.mubr.f32.mxu0 %v280
  %739 = vmatmul.mubr.f32.gmra.mrb[0].mxu0 %v100
  %v740 = vpop.f32.mrb[0].mxu0
  %v741 = vadd.f32 %v496, %v740
  %v742 = vpop.f32.mrb[0].mxu0
  %743 = vmatprep.mubr.f32.mxu0 %v283
  %744 = vmatmul.mubr.f32.gmra.mrb[0].mxu0 %v104
  %v745 = vpop.f32.mrb[0].mxu0
  %v746 = vadd.f32 %v501, %v745
  %v747 = vpop.f32.mrb[0].mxu0
  %748 = vmatprep.mubr.f32.mxu0 %v286
  %749 = vmatmul.mubr.f32.gmra.mrb[0].mxu0 %v108
  %v750 = vpop.f32.mrb[0].mxu0
  %v751 = vadd.f32 %v506, %v750
  %v752 = vpop.f32.mrb[0].mxu0
  %753 = vmatprep.mubr.f32.mxu0 %v289
  %754 = vmatmul.mubr.f32.gmra.mrb[0].mxu0 %v112
  %v755 = vpop.f32.mrb[0].mxu0
  %v756 = vadd.f32 %v511, %v755
  %v757 = vpop.f32.mrb[0].mxu0
  %758 = vmatprep.mubr.f32.mxu0 %v292
  %759 = vmatmul.mubr.f32.gmra.mrb[0].mxu0 %v116
  %v760 = vpop.f32.mrb[0].mxu0
  %v761 = vadd.f32 %v516, %v760
  %v762 = vpop.f32.mrb[0].mxu0
  %763 = vmatprep.mubr.f32.mxu0 %v295
  %764 = vmatmul.mubr.f32.gmra.mrb[0].mxu0 %v120
  %v765 = vpop.f32.mrb[0].mxu0
  %v766 = vadd.f32 %v521, %v765
  %v767 = vpop.f32.mrb[0].mxu0
  %768 = vmatprep.mubr.f32.mxu0 %v298
  %769 = vmatmul.mubr.f32.gmra.mrb[0].mxu0 %v124
  %v770 = vpop.f32.mrb[0].mxu0
  %v771 = vadd.f32 %v526, %v770
  %v772 = vpop.f32.mrb[0].mxu0
  %773 = vmatprep.mubr.f32.mxu0 %v301
  %774 = vmatmul.mubr.f32.gmra.mrb[0].mxu0 %v128
  %v775 = vpop.f32.mrb[0].mxu0
  %v776 = vadd.f32 %v531, %v775
  %v777 = vpop.f32.mrb[0].mxu0
  %778 = vmatprep.mubr.f32.mxu0 %v304
  %779 = vmatmul.mubr.f32.gmra.mrb[0].mxu0 %v132
  %v780 = vpop.f32.mrb[0].mxu0
  %v781 = vadd.f32 %v536, %v780
  %v782 = vpop.f32.mrb[0].mxu0
  %783 = vmatprep.mubr.f32.mxu0 %v307
  %784 = vmatmul.mubr.f32.gmra.mrb[0].mxu0 %v136
  %v785 = vpop.f32.mrb[0].mxu0
  %v786 = vadd.f32 %v541, %v785
  %v787 = vpop.f32.mrb[0].mxu0
  %788 = vmatprep.mubr.f32.mxu0 %v310
  %789 = vmatmul.mubr.f32.gmra.mrb[0].mxu0 %v140
  %v790 = vpop.f32.mrb[0].mxu0
  %v791 = vadd.f32 %v546, %v790
  %v792 = vpop.f32.mrb[0].mxu0
  %793 = vmatprep.mubr.f32.mxu0 %v313
  %794 = vmatmul.mubr.f32.gmra.mrb[0].mxu0 %v144
  %v795 = vpop.f32.mrb[0].mxu0
  %v796 = vadd.f32 %v551, %v795
  %v797 = vpop.f32.mrb[0].mxu0
  %798 = vmatprep.mubr.f32.mxu0 %v316
  %799 = vmatmul.mubr.f32.gmra.mrb[0].mxu0 %v148
  %v800 = vpop.f32.mrb[0].mxu0
  %v801 = vadd.f32 %v556, %v800
  %v802 = vpop.f32.mrb[0].mxu0
  %803 = vmatprep.mubr.f32.mxu0 %v319
  %804 = vmatmul.mubr.f32.gmra.mrb[0].mxu0 %v152
  %v805 = vpop.f32.mrb[0].mxu0
  %v806 = vadd.f32 %v561, %v805
  %v807 = vpop.f32.mrb[0].mxu0
  %808 = vmatprep.mubr.f32.mxu0 %v322
  %809 = vmatmul.mubr.f32.gmra.mrb[0].mxu0 %v156
  %v810 = vpop.f32.mrb[0].mxu0
  %v811 = vadd.f32 %v566, %v810
  %v812 = vpop.f32.mrb[0].mxu0
  %813 = vdwg.mxu0
  %vm814 = vcmp.gt.f32.partialorder %v636, 0.0
  %vm815 = vcmp.gt.f32.partialorder %v641, 0.0
  %vm816 = vcmp.gt.f32.partialorder %v646, 0.0
  %vm817 = vcmp.gt.f32.partialorder %v651, 0.0
  %vm818 = vcmp.gt.f32.partialorder %v656, 0.0
  %vm819 = vcmp.gt.f32.partialorder %v661, 0.0
  %vm820 = vcmp.gt.f32.partialorder %v666, 0.0
  %vm821 = vcmp.gt.f32.partialorder %v671, 0.0
  %vm822 = vcmp.gt.f32.partialorder %v676, 0.0
  %vm823 = vcmp.gt.f32.partialorder %v681, 0.0
  %vm824 = vcmp.gt.f32.partialorder %v686, 0.0
  %vm825 = vcmp.gt.f32.partialorder %v691, 0.0
  %vm826 = vcmp.gt.f32.partialorder %v696, 0.0
  %vm827 = vcmp.gt.f32.partialorder %v701, 0.0
  %vm828 = vcmp.gt.f32.partialorder %v706, 0.0
  %vm829 = vcmp.gt.f32.partialorder %v711, 0.0
  %vm830 = vcmp.gt.f32.partialorder %v716, 0.0
  %vm831 = vcmp.gt.f32.partialorder %v721, 0.0
  %vm832 = vcmp.gt.f32.partialorder %v726, 0.0
  %vm833 = vcmp.gt.f32.partialorder %v731, 0.0
  %vm834 = vcmp.gt.f32.partialorder %v736, 0.0
  %vm835 = vcmp.gt.f32.partialorder %v741, 0.0
  %vm836 = vcmp.gt.f32.partialorder %v746, 0.0
  %vm837 = vcmp.gt.f32.partialorder %v751, 0.0
  %vm838 = vcmp.gt.f32.partialorder %v756, 0.0
  %vm839 = vcmp.gt.f32.partialorder %v761, 0.0
  %vm840 = vcmp.gt.f32.partialorder %v766, 0.0
  %vm841 = vcmp.gt.f32.partialorder %v771, 0.0
  %vm842 = vcmp.gt.f32.partialorder %v776, 0.0
  %vm843 = vcmp.gt.f32.partialorder %v781, 0.0
  %vm844 = vcmp.gt.f32.partialorder %v786, 0.0
  %vm845 = vcmp.gt.f32.partialorder %v791, 0.0
  %vm846 = vcmp.gt.f32.partialorder %v796, 0.0
  %vm847 = vcmp.gt.f32.partialorder %v801, 0.0
  %vm848 = vcmp.gt.f32.partialorder %v806, 0.0
  %vm849 = vcmp.gt.f32.partialorder %v811, 0.0
  %v850 = vmin.f32 %v636, 0.0
  %v851 = vmin.f32 %v641, 0.0
  %v852 = vmin.f32 %v646, 0.0
  %v853 = vmin.f32 %v651, 0.0
  %v854 = vmin.f32 %v656, 0.0
  %v855 = vmin.f32 %v661, 0.0
  %v856 = vmin.f32 %v666, 0.0
  %v857 = vmin.f32 %v671, 0.0
  %v858 = vmin.f32 %v676, 0.0
  %v859 = vmin.f32 %v681, 0.0
  %v860 = vmin.f32 %v686, 0.0
  %v861 = vmin.f32 %v691, 0.0
  %v862 = vmin.f32 %v696, 0.0
  %v863 = vmin.f32 %v701, 0.0
  %v864 = vmin.f32 %v706, 0.0
  %v865 = vmin.f32 %v711, 0.0
  %v866 = vmin.f32 %v716, 0.0
  %v867 = vmin.f32 %v721, 0.0
  %v868 = vmin.f32 %v726, 0.0
  %v869 = vmin.f32 %v731, 0.0
  %v870 = vmin.f32 %v736, 0.0
  %v871 = vmin.f32 %v741, 0.0
  %v872 = vmin.f32 %v746, 0.0
  %v873 = vmin.f32 %v751, 0.0
  %v874 = vmin.f32 %v756, 0.0
  %v875 = vmin.f32 %v761, 0.0
  %v876 = vmin.f32 %v766, 0.0
  %v877 = vmin.f32 %v771, 0.0
  %v878 = vmin.f32 %v776, 0.0
  %v879 = vmin.f32 %v781, 0.0
  %v880 = vmin.f32 %v786, 0.0
  %v881 = vmin.f32 %v791, 0.0
  %v882 = vmin.f32 %v796, 0.0
  %v883 = vmin.f32 %v801, 0.0
  %v884 = vmin.f32 %v806, 0.0
  %v885 = vmin.f32 %v811, 0.0
  %v886 = vmul.f32 %v850, 1.442695
  %v887 = vpow.pop %v886
  %v888 = vmul.f32 %v851, 1.442695
  %v889 = vpow.pop %v888
  %v890 = vmul.f32 %v852, 1.442695
  %v891 = vpow.pop %v890
  %v892 = vmul.f32 %v853, 1.442695
  %v893 = vpow.pop %v892
  %v894 = vmul.f32 %v854, 1.442695
  %v895 = vpow.pop %v894
  %v896 = vmul.f32 %v855, 1.442695
  %v897 = vpow.pop %v896
  %v898 = vmul.f32 %v856, 1.442695
  %v899 = vpow.pop %v898
  %v900 = vmul.f32 %v857, 1.442695
  %v901 = vpow.pop %v900
  %v902 = vmul.f32 %v858, 1.442695
  %v903 = vpow.pop %v902
  %v904 = vmul.f32 %v859, 1.442695
  %v905 = vpow.pop %v904
  %v906 = vmul.f32 %v860, 1.442695
  %v907 = vpow.pop %v906
  %v908 = vmul.f32 %v861, 1.442695
  %v909 = vpow.pop %v908
  %v910 = vmul.f32 %v862, 1.442695
  %v911 = vpow.pop %v910
  %v912 = vmul.f32 %v863, 1.442695
  %v913 = vpow.pop %v912
  %v914 = vmul.f32 %v864, 1.442695
  %v915 = vpow.pop %v914
  %v916 = vmul.f32 %v865, 1.442695
  %v917 = vpow.pop %v916
  %v918 = vmul.f32 %v866, 1.442695
  %v919 = vpow.pop %v918
  %v920 = vmul.f32 %v867, 1.442695
  %v921 = vpow.pop %v920
  %v922 = vmul.f32 %v868, 1.442695
  %v923 = vpow.pop %v922
  %v924 = vmul.f32 %v869, 1.442695
  %v925 = vpow.pop %v924
  %v926 = vmul.f32 %v870, 1.442695
  %v927 = vpow.pop %v926
  %v928 = vmul.f32 %v871, 1.442695
  %v929 = vpow.pop %v928
  %v930 = vmul.f32 %v872, 1.442695
  %v931 = vpow.pop %v930
  %v932 = vmul.f32 %v873, 1.442695
  %v933 = vpow.pop %v932
  %v934 = vmul.f32 %v874, 1.442695
  %v935 = vpow.pop %v934
  %v936 = vmul.f32 %v875, 1.442695
  %v937 = vpow.pop %v936
  %v938 = vmul.f32 %v876, 1.442695
  %v939 = vpow.pop %v938
  %v940 = vmul.f32 %v877, 1.442695
  %v941 = vpow.pop %v940
  %v942 = vmul.f32 %v878, 1.442695
  %v943 = vpow.pop %v942
  %v944 = vmul.f32 %v879, 1.442695
  %v945 = vpow.pop %v944
  %v946 = vmul.f32 %v880, 1.442695
  %v947 = vpow.pop %v946
  %v948 = vmul.f32 %v881, 1.442695
  %v949 = vpow.pop %v948
  %v950 = vmul.f32 %v882, 1.442695
  %v951 = vpow.pop %v950
  %v952 = vmul.f32 %v883, 1.442695
  %v953 = vpow.pop %v952
  %v954 = vmul.f32 %v884, 1.442695
  %v955 = vpow.pop %v954
  %v956 = vmul.f32 %v885, 1.442695
  %v957 = vpow.pop %v956
  %v958 = vsub.f32 %v887, 1.0
  %v959 = vsub.f32 %v889, 1.0
  %v960 = vsub.f32 %v891, 1.0
  %v961 = vsub.f32 %v893, 1.0
  %v962 = vsub.f32 %v895, 1.0
  %v963 = vsub.f32 %v897, 1.0
  %v964 = vsub.f32 %v899, 1.0
  %v965 = vsub.f32 %v901, 1.0
  %v966 = vsub.f32 %v903, 1.0
  %v967 = vsub.f32 %v905, 1.0
  %v968 = vsub.f32 %v907, 1.0
  %v969 = vsub.f32 %v909, 1.0
  %v970 = vsub.f32 %v911, 1.0
  %v971 = vsub.f32 %v913, 1.0
  %v972 = vsub.f32 %v915, 1.0
  %v973 = vsub.f32 %v917, 1.0
  %v974 = vsub.f32 %v919, 1.0
  %v975 = vsub.f32 %v921, 1.0
  %v976 = vsub.f32 %v923, 1.0
  %v977 = vsub.f32 %v925, 1.0
  %v978 = vsub.f32 %v927, 1.0
  %v979 = vsub.f32 %v929, 1.0
  %v980 = vsub.f32 %v931, 1.0
  %v981 = vsub.f32 %v933, 1.0
  %v982 = vsub.f32 %v935, 1.0
  %v983 = vsub.f32 %v937, 1.0
  %v984 = vsub.f32 %v939, 1.0
  %v985 = vsub.f32 %v941, 1.0
  %v986 = vsub.f32 %v943, 1.0
  %v987 = vsub.f32 %v945, 1.0
  %v988 = vsub.f32 %v947, 1.0
  %v989 = vsub.f32 %v949, 1.0
  %v990 = vsub.f32 %v951, 1.0
  %v991 = vsub.f32 %v953, 1.0
  %v992 = vsub.f32 %v955, 1.0
  %v993 = vsub.f32 %v957, 1.0
  %v994 = vsel %vm814, %v636, %v958
  %v995 = vsel %vm815, %v641, %v959
  %v996 = vsel %vm816, %v646, %v960
  %v997 = vsel %vm817, %v651, %v961
  %v998 = vsel %vm818, %v656, %v962
  %v999 = vsel %vm819, %v661, %v963
  %v1000 = vsel %vm820, %v666, %v964
  %v1001 = vsel %vm821, %v671, %v965
  %v1002 = vsel %vm822, %v676, %v966
  %v1003 = vsel %vm823, %v681, %v967
  %v1004 = vsel %vm824, %v686, %v968
  %v1005 = vsel %vm825, %v691, %v969
  %v1006 = vsel %vm826, %v696, %v970
  %v1007 = vsel %vm827, %v701, %v971
  %v1008 = vsel %vm828, %v706, %v972
  %v1009 = vsel %vm829, %v711, %v973
  %v1010 = vsel %vm830, %v716, %v974
  %v1011 = vsel %vm831, %v721, %v975
  %v1012 = vsel %vm832, %v726, %v976
  %v1013 = vsel %vm833, %v731, %v977
  %v1014 = vsel %vm834, %v736, %v978
  %v1015 = vsel %vm835, %v741, %v979
  %v1016 = vsel %vm836, %v746, %v980
  %v1017 = vsel %vm837, %v751, %v981
  %v1018 = vsel %vm838, %v756, %v982
  %v1019 = vsel %vm839, %v761, %v983
  %v1020 = vsel %vm840, %v766, %v984
  %v1021 = vsel %vm841, %v771, %v985
  %v1022 = vsel %vm842, %v776, %v986
  %v1023 = vsel %vm843, %v781, %v987
  %v1024 = vsel %vm844, %v786, %v988
  %v1025 = vsel %vm845, %v791, %v989
  %v1026 = vsel %vm846, %v796, %v990
  %v1027 = vsel %vm847, %v801, %v991
  %v1028 = vsel %vm848, %v806, %v992
  %v1029 = vsel %vm849, %v811, %v993
  %vm1030 = vcmask 261120
  %1031 = vst.msk [vmem:[%s3] sm:$0xff] %vm1030, %v994
  %1032 = vst.msk [vmem:[%s3 + $0x8] sm:$0xff] %vm1030, %v995
  %1033 = vst.msk [vmem:[%s3 + $0x10] sm:$0xff] %vm1030, %v996
  %1034 = vst.msk [vmem:[%s3 + $0x18] sm:$0xff] %vm1030, %v997
  %1035 = vst.msk [vmem:[%s3 + $0x20] sm:$0xff] %vm1030, %v998
  %1036 = vst.msk [vmem:[%s3 + $0x28] sm:$0xff] %vm1030, %v999
  %1037 = vst.msk [vmem:[%s3 + $0x30] sm:$0xff] %vm1030, %v1000
  %1038 = vst.msk [vmem:[%s3 + $0x38] sm:$0xff] %vm1030, %v1001
  %1039 = vst.msk [vmem:[%s3 + $0x40] sm:$0xff] %vm1030, %v1002
  %1040 = vst.msk [vmem:[%s3 + $0x48] sm:$0xff] %vm1030, %v1003
  %1041 = vst.msk [vmem:[%s3 + $0x50] sm:$0xff] %vm1030, %v1004
  %1042 = vst.msk [vmem:[%s3 + $0x58] sm:$0xff] %vm1030, %v1005
  %1043 = vst.msk [vmem:[%s3 + $0x60] sm:$0xff] %vm1030, %v1006
  %1044 = vst.msk [vmem:[%s3 + $0x68] sm:$0xff] %vm1030, %v1007
  %1045 = vst.msk [vmem:[%s3 + $0x70] sm:$0xff] %vm1030, %v1008
  %1046 = vst.msk [vmem:[%s3 + $0x78] sm:$0xff] %vm1030, %v1009
  %1047 = vst.msk [vmem:[%s3 + $0x80] sm:$0xff] %vm1030, %v1010
  %1048 = vst.msk [vmem:[%s3 + $0x88] sm:$0xff] %vm1030, %v1011
  %1049 = vst.msk [vmem:[%s3 + $0x90] sm:$0xff] %vm1030, %v1012
  %1050 = vst.msk [vmem:[%s3 + $0x98] sm:$0xff] %vm1030, %v1013
  %1051 = vst.msk [vmem:[%s3 + $0xa0] sm:$0xff] %vm1030, %v1014
  %1052 = vst.msk [vmem:[%s3 + $0xa8] sm:$0xff] %vm1030, %v1015
  %1053 = vst.msk [vmem:[%s3 + $0xb0] sm:$0xff] %vm1030, %v1016
  %1054 = vst.msk [vmem:[%s3 + $0xb8] sm:$0xff] %vm1030, %v1017
  %1055 = vst.msk [vmem:[%s3 + $0xc0] sm:$0xff] %vm1030, %v1018
  %1056 = vst.msk [vmem:[%s3 + $0xc8] sm:$0xff] %vm1030, %v1019
  %1057 = vst.msk [vmem:[%s3 + $0xd0] sm:$0xff] %vm1030, %v1020
  %1058 = vst.msk [vmem:[%s3 + $0xd8] sm:$0xff] %vm1030, %v1021
  %1059 = vst.msk [vmem:[%s3 + $0xe0] sm:$0xff] %vm1030, %v1022
  %1060 = vst.msk [vmem:[%s3 + $0xe8] sm:$0xff] %vm1030, %v1023
  %1061 = vst.msk [vmem:[%s3 + $0xf0] sm:$0xff] %vm1030, %v1024
  %1062 = vst.msk [vmem:[%s3 + $0xf8] sm:$0xff] %vm1030, %v1025
  %1063 = vst.msk [vmem:[%s3 + $0x100] sm:$0xff] %vm1030, %v1026
  %1064 = vst.msk [vmem:[%s3 + $0x108] sm:$0xff] %vm1030, %v1027
  %1065 = vst.msk [vmem:[%s3 + $0x110] sm:$0xff] %vm1030, %v1028
  %1066 = vst.msk [vmem:[%s3 + $0x118] sm:$0xff] %vm1030, %v1029
  // Predicated region
  $region14: #{gaussian_policy_forward.4} parent=0 // pred_check
    _
  $region15: #{gaussian_policy_forward.4} parent=0 // pred_check_branch
    %1068 = sbr.rel (0) target = $region17
  $region16: #{gaussian_policy_forward.4} parent=0 // pred_region
    _
  $region17: #{gaussian_policy_forward.4} parent=0 // pred_fallthru
    _
  // Predicated region
  $region18: #{gaussian_policy_forward.4} parent=0 // pred_check
    _
  $region19: #{gaussian_policy_forward.4} parent=0 // pred_check_branch
    %1070 = sbr.rel (0) target = $region21
  $region20: #{gaussian_policy_forward.4} parent=0 // pred_region
    _
  $region21: #{gaussian_policy_forward.4} parent=0 // pred_fallthru
    _

// kernel: gaussian_policy_forward.5
$region0: #{gaussian_policy_forward.5}
  #allocation0 [shape = 'u32[]', space=smem, size = 0x4, offset = 0x4, fixed_abs, tag = 'smem constant byte address 0x4 - core index']
  #allocation1 [shape = 'u32[144,128]{1,0:T(1,128)}', space=vmem, size = 0x12000, scoped, tag = 'internal scratch']
  %s0 = inlined_call_operand.vmem [shape: f32[72,800], index: 0, kind: input, shape index: {}]
  %s1 = inlined_call_operand.vmem [shape: f32[800,64], index: 1, kind: input, shape index: {}]
  %s2 = inlined_call_operand.vmem [shape: f32[1,64], index: 2, kind: input, shape index: {}]
  %s3 = inlined_call_operand.vmem [shape: f32[64,128], index: 3, kind: input, shape index: {}]
  %s4 = inlined_call_operand.vmem [shape: f32[1,128], index: 4, kind: input, shape index: {}]
  %s5 = inlined_call_operand.vmem [shape: f32[128,2], index: 5, kind: input, shape index: {}]
  %s6 = inlined_call_operand.vmem [shape: f32[1,2], index: 6, kind: input, shape index: {}]
  %s7 = inlined_call_operand.vmem [shape: f32[2,2], index: 7, kind: output, shape index: {}]
  %s8 = sld [smem:[#allocation0]]
  $region38: #{gaussian_policy_forward.5} parent=0
    _
  %s10 = ssub.s32 1, %s8
  %s11 = scalar_select 0, %s10, %s8
  // Predicated region
  $region2: #{gaussian_policy_forward.5} parent=0 // pred_check
    _
  $region3: #{gaussian_policy_forward.5} parent=0 // pred_check_branch
    %13 = sbr.rel (0) target = $region5
  $region4: #{gaussian_policy_forward.5} parent=0 // pred_region
    _
  $region5: #{gaussian_policy_forward.5} parent=0 // pred_fallthru
    _
  // Predicated region
  $region6: #{gaussian_policy_forward.5} parent=0 // pred_check
    _
  $region7: #{gaussian_policy_forward.5} parent=0 // pred_check_branch
    %15 = sbr.rel (0) target = $region9
  $region8: #{gaussian_policy_forward.5} parent=0 // pred_region
    _
  $region9: #{gaussian_policy_forward.5} parent=0 // pred_fallthru
    _
  // Predicated region
  $region10: #{gaussian_policy_forward.5} parent=0 // pred_check
    _
  $region11: #{gaussian_policy_forward.5} parent=0 // pred_check_branch
    %17 = sbr.rel (0) target = $region13
  $region12: #{gaussian_policy_forward.5} parent=0 // pred_region
    _
  $region13: #{gaussian_policy_forward.5} parent=0 // pred_fallthru
    _
  // Predicated region
  $region14: #{gaussian_policy_forward.5} parent=0 // pred_check
    _
  $region15: #{gaussian_policy_forward.5} parent=0 // pred_check_branch
    %19 = sbr.rel (0) target = $region17
  $region16: #{gaussian_policy_forward.5} parent=0 // pred_region
    _
  $region17: #{gaussian_policy_forward.5} parent=0 // pred_fallthru
    _
  // Predicated region
  $region18: #{gaussian_policy_forward.5} parent=0 // pred_check
    _
  $region19: #{gaussian_policy_forward.5} parent=0 // pred_check_branch
    %21 = sbr.rel (0) target = $region21
  $region20: #{gaussian_policy_forward.5} parent=0 // pred_region
    _
  $region21: #{gaussian_policy_forward.5} parent=0 // pred_fallthru
    _
  // Predicated region
  $region22: #{gaussian_policy_forward.5} parent=0 // pred_check
    _
  $region23: #{gaussian_policy_forward.5} parent=0 // pred_check_branch
    %23 = sbr.rel (0) target = $region25
  $region24: #{gaussian_policy_forward.5} parent=0 // pred_region
    _
  $region25: #{gaussian_policy_forward.5} parent=0 // pred_fallthru
    _
  // Predicated region
  $region26: #{gaussian_policy_forward.5} parent=0 // pred_check
    _
  $region27: #{gaussian_policy_forward.5} parent=0 // pred_check_branch
    %25 = sbr.rel (0) target = $region29
  $region28: #{gaussian_policy_forward.5} parent=0 // pred_region
    _
  $region29: #{gaussian_policy_forward.5} parent=0 // pred_fallthru
    _
  %v26 = vld [vmem:[%s0] sm:$0xff]
  %v27 = vld [vmem:[%s0 + $0x8] sm:$0xff]
  %v28 = vld [vmem:[%s0 + $0x10] sm:$0xff]
  %v29 = vld [vmem:[%s0 + $0x18] sm:$0xff]
  %v30 = vld [vmem:[%s0 + $0x20] sm:$0xff]
  %v31 = vld [vmem:[%s0 + $0x28] sm:$0xff]
  %v32 = vld [vmem:[%s0 + $0x30] sm:$0xff]
  %v33 = vld [vmem:[%s0 + $0x38] sm:$0xff]
  %v34 = vld [vmem:[%s0 + $0x40] sm:$0xff]
  %v35 = vld [vmem:[%s0 + $0x48] sm:$0xff]
  %v36 = vld [vmem:[%s0 + $0x50] sm:$0xff]
  %v37 = vld [vmem:[%s0 + $0x58] sm:$0xff]
  %v38 = vld [vmem:[%s0 + $0x60] sm:$0xff]
  %v39 = vld [vmem:[%s0 + $0x68] sm:$0xff]
  %v40 = vld [vmem:[%s0 + $0x70] sm:$0xff]
  %v41 = vld [vmem:[%s0 + $0x78] sm:$0xff]
  %v42 = vld [vmem:[%s0 + $0x80] sm:$0xff]
  %v43 = vld [vmem:[%s0 + $0x88] sm:$0xff]
  %v44 = vld [vmem:[%s0 + $0x90] sm:$0xff]
  %v45 = vld [vmem:[%s0 + $0x98] sm:$0xff]
  %v46 = vld [vmem:[%s0 + $0xa0] sm:$0xff]
  %v47 = vld [vmem:[%s0 + $0xa8] sm:$0xff]
  %v48 = vld [vmem:[%s0 + $0xb0] sm:$0xff]
  %v49 = vld [vmem:[%s0 + $0xb8] sm:$0xff]
  %v50 = vld [vmem:[%s0 + $0xc0] sm:$0xff]
  %v51 = vld [vmem:[%s0 + $0xc8] sm:$0xff]
  %v52 = vld [vmem:[%s0 + $0xd0] sm:$0xff]
  %v53 = vld [vmem:[%s0 + $0xd8] sm:$0xff]
  %v54 = vld [vmem:[%s0 + $0xe0] sm:$0xff]
  %v55 = vld [vmem:[%s0 + $0xe8] sm:$0xff]
  %v56 = vld [vmem:[%s0 + $0xf0] sm:$0xff]
  %v57 = vld [vmem:[%s0 + $0xf8] sm:$0xff]
  %v58 = vld [vmem:[%s0 + $0x100] sm:$0xff]
  %v59 = vld [vmem:[%s0 + $0x108] sm:$0xff]
  %v60 = vld [vmem:[%s0 + $0x110] sm:$0xff]
  %v61 = vld [vmem:[%s0 + $0x118] sm:$0xff]
  %v62 = vld [vmem:[%s0 + $0x120] sm:$0xff]
  %v63 = vld [vmem:[%s0 + $0x128] sm:$0xff]
  %v64 = vld [vmem:[%s0 + $0x130] sm:$0xff]
  %v65 = vld [vmem:[%s0 + $0x138] sm:$0xff]
  %v66 = vld [vmem:[%s0 + $0x140] sm:$0xff]
  %v67 = vld [vmem:[%s0 + $0x148] sm:$0xff]
  %v68 = vld [vmem:[%s0 + $0x150] sm:$0xff]
  %v69 = vld [vmem:[%s0 + $0x158] sm:$0xff]
  %v70 = vld [vmem:[%s0 + $0x160] sm:$0xff]
  %v71 = vld [vmem:[%s0 + $0x168] sm:$0xff]
  %v72 = vld [vmem:[%s0 + $0x170] sm:$0xff]
  %v73 = vld [vmem:[%s0 + $0x178] sm:$0xff]
  %v74 = vld [vmem:[%s0 + $0x180] sm:$0xff]
  %v75 = vld [vmem:[%s0 + $0x188] sm:$0xff]
  %v76 = vld [vmem:[%s0 + $0x190] sm:$0xff]
  %v77 = vld [vmem:[%s0 + $0x198] sm:$0xff]
  %v78 = vld [vmem:[%s0 + $0x1a0] sm:$0xff]
  %v79 = vld [vmem:[%s0 + $0x1a8] sm:$0xff]
  %v80 = vld [vmem:[%s0 + $0x1b0] sm:$0xff]
  %v81 = vld [vmem:[%s0 + $0x1b8] sm:$0xff]
  %v82 = vld [vmem:[%s0 + $0x1c0] sm:$0xff]
  %v83 = vld [vmem:[%s0 + $0x1c8] sm:$0xff]
  %v84 = vld [vmem:[%s0 + $0x1d0] sm:$0xff]
  %v85 = vld [vmem:[%s0 + $0x1d8] sm:$0xff]
  %v86 = vld [vmem:[%s0 + $0x1e0] sm:$0xff]
  %v87 = vld [vmem:[%s0 + $0x1e8] sm:$0xff]
  %v88 = vld [vmem:[%s0 + $0x1f0] sm:$0xff]
  %v89 = vld [vmem:[%s1] sm:$0xff]
  %v90 = vld [vmem:[%s1 + $0x8] sm:$0xff]
  %v91 = vld [vmem:[%s1 + $0x10] sm:$0xff]
  %v92 = vld [vmem:[%s1 + $0x18] sm:$0xff]
  %v93 = vld [vmem:[%s1 + $0x20] sm:$0xff]
  %v94 = vld [vmem:[%s1 + $0x28] sm:$0xff]
  %v95 = vld [vmem:[%s1 + $0x30] sm:$0xff]
  %v96 = vld [vmem:[%s1 + $0x38] sm:$0xff]
  %v97 = vld [vmem:[%s1 + $0x40] sm:$0xff]
  %v98 = vld [vmem:[%s1 + $0x48] sm:$0xff]
  %v99 = vld [vmem:[%s1 + $0x50] sm:$0xff]
  %v100 = vld [vmem:[%s1 + $0x58] sm:$0xff]
  %v101 = vld [vmem:[%s1 + $0x60] sm:$0xff]
  %v102 = vld [vmem:[%s1 + $0x68] sm:$0xff]
  %v103 = vld [vmem:[%s1 + $0x70] sm:$0xff]
  %v104 = vld [vmem:[%s1 + $0x78] sm:$0xff]
  %v105 = vld [vmem:[%s1 + $0x80] sm:$0xff]
  %v106 = vld [vmem:[%s1 + $0x88] sm:$0xff]
  %v107 = vld [vmem:[%s1 + $0x90] sm:$0xff]
  %v108 = vld [vmem:[%s1 + $0x98] sm:$0xff]
  %v109 = vld [vmem:[%s1 + $0xa0] sm:$0xff]
  %v110 = vld [vmem:[%s1 + $0xa8] sm:$0xff]
  %v111 = vld [vmem:[%s1 + $0xb0] sm:$0xff]
  %v112 = vld [vmem:[%s1 + $0xb8] sm:$0xff]
  %v113 = vld [vmem:[%s1 + $0xc0] sm:$0xff]
  %v114 = vld [vmem:[%s1 + $0xc8] sm:$0xff]
  %v115 = vld [vmem:[%s1 + $0xd0] sm:$0xff]
  %v116 = vld [vmem:[%s1 + $0xd8] sm:$0xff]
  %v117 = vld [vmem:[%s1 + $0xe0] sm:$0xff]
  %v118 = vld [vmem:[%s1 + $0xe8] sm:$0xff]
  %v119 = vld [vmem:[%s1 + $0xf0] sm:$0xff]
  %v120 = vld [vmem:[%s1 + $0xf8] sm:$0xff]
  %v121 = vld [vmem:[%s1 + $0x100] sm:$0xff]
  %v122 = vld [vmem:[%s1 + $0x108] sm:$0xff]
  %v123 = vld [vmem:[%s1 + $0x110] sm:$0xff]
  %v124 = vld [vmem:[%s1 + $0x118] sm:$0xff]
  %v125 = vld [vmem:[%s1 + $0x120] sm:$0xff]
  %v126 = vld [vmem:[%s1 + $0x128] sm:$0xff]
  %v127 = vld [vmem:[%s1 + $0x130] sm:$0xff]
  %v128 = vld [vmem:[%s1 + $0x138] sm:$0xff]
  %v129 = vld [vmem:[%s1 + $0x140] sm:$0xff]
  %v130 = vld [vmem:[%s1 + $0x148] sm:$0xff]
  %v131 = vld [vmem:[%s1 + $0x150] sm:$0xff]
  %v132 = vld [vmem:[%s1 + $0x158] sm:$0xff]
  %v133 = vld [vmem:[%s1 + $0x160] sm:$0xff]
  %v134 = vld [vmem:[%s1 + $0x168] sm:$0xff]
  %v135 = vld [vmem:[%s1 + $0x170] sm:$0xff]
  %v136 = vld [vmem:[%s1 + $0x178] sm:$0xff]
  %v137 = vld [vmem:[%s1 + $0x180] sm:$0xff]
  %v138 = vld [vmem:[%s1 + $0x188] sm:$0xff]
  %v139 = vld [vmem:[%s1 + $0x190] sm:$0xff]
  %v140 = vld [vmem:[%s1 + $0x198] sm:$0xff]
  %v141 = vld [vmem:[%s1 + $0x1a0] sm:$0xff]
  %v142 = vld [vmem:[%s1 + $0x1a8] sm:$0xff]
  %v143 = vld [vmem:[%s1 + $0x1b0] sm:$0xff]
  %v144 = vld [vmem:[%s1 + $0x1b8] sm:$0xff]
  %v145 = vld [vmem:[%s1 + $0x1c0] sm:$0xff]
  %v146 = vld [vmem:[%s1 + $0x1c8] sm:$0xff]
  %v147 = vld [vmem:[%s1 + $0x1d0] sm:$0xff]
  %v148 = vld [vmem:[%s1 + $0x1d8] sm:$0xff]
  %v149 = vld [vmem:[%s1 + $0x1e0] sm:$0xff]
  %v150 = vld [vmem:[%s1 + $0x1e8] sm:$0xff]
  %v151 = vld [vmem:[%s1 + $0x1f0] sm:$0xff]
  %v152 = vld [vmem:[%s1 + $0x1f8] sm:$0xff]
  %v153 = vld [vmem:[%s1 + $0x200] sm:$0xff]
  %v154 = vld [vmem:[%s1 + $0x208] sm:$0xff]
  %v155 = vld [vmem:[%s1 + $0x210] sm:$0xff]
  %v156 = vld [vmem:[%s1 + $0x218] sm:$0xff]
  %v157 = vld [vmem:[%s1 + $0x220] sm:$0xff]
  %v158 = vld [vmem:[%s1 + $0x228] sm:$0xff]
  %v159 = vld [vmem:[%s1 + $0x230] sm:$0xff]
  %v160 = vld [vmem:[%s1 + $0x238] sm:$0xff]
  %v161 = vld [vmem:[%s1 + $0x240] sm:$0xff]
  %v162 = vld [vmem:[%s1 + $0x248] sm:$0xff]
  %v163 = vld [vmem:[%s1 + $0x250] sm:$0xff]
  %v164 = vld [vmem:[%s1 + $0x258] sm:$0xff]
  %v165 = vld [vmem:[%s1 + $0x260] sm:$0xff]
  %v166 = vld [vmem:[%s1 + $0x268] sm:$0xff]
  %v167 = vld [vmem:[%s1 + $0x270] sm:$0xff]
  %v168 = vld [vmem:[%s1 + $0x278] sm:$0xff]
  %v169 = vld [vmem:[%s1 + $0x280] sm:$0xff]
  %v170 = vld [vmem:[%s1 + $0x288] sm:$0xff]
  %v171 = vld [vmem:[%s1 + $0x290] sm:$0xff]
  %v172 = vld [vmem:[%s1 + $0x298] sm:$0xff]
  %v173 = vld [vmem:[%s1 + $0x2a0] sm:$0xff]
  %v174 = vld [vmem:[%s1 + $0x2a8] sm:$0xff]
  %v175 = vld [vmem:[%s1 + $0x2b0] sm:$0xff]
  %v176 = vld [vmem:[%s1 + $0x2b8] sm:$0xff]
  %v177 = vld [vmem:[%s1 + $0x2c0] sm:$0xff]
  %v178 = vld [vmem:[%s1 + $0x2c8] sm:$0xff]
  %v179 = vld [vmem:[%s1 + $0x2d0] sm:$0xff]
  %v180 = vld [vmem:[%s1 + $0x2d8] sm:$0xff]
  %v181 = vld [vmem:[%s1 + $0x2e0] sm:$0xff]
  %v182 = vld [vmem:[%s1 + $0x2e8] sm:$0xff]
  %v183 = vld [vmem:[%s1 + $0x2f0] sm:$0xff]
  %v184 = vld [vmem:[%s1 + $0x2f8] sm:$0xff]
  %v185 = vld [vmem:[%s1 + $0x300] sm:$0xff]
  %v186 = vld [vmem:[%s1 + $0x308] sm:$0xff]
  %v187 = vld [vmem:[%s1 + $0x310] sm:$0xff]
  %v188 = vld [vmem:[%s1 + $0x318] sm:$0xff]
  %v189 = vld [vmem:[%s2] sm:$0x1]
  %v191 = vlaneseq
  %v192 = vshrl.u32 %v191, 7
  %v193 = vsub.s32 0, %v192
  %v194 = vrot.slane %v189, %v193
  %vm196 = vcmask 261120
  %v198 = vsel %vm196, %v32, 0
  %v201 = vsel %vm196, %v39, 0
  %v204 = vsel %vm196, %v46, 0
  %v207 = vsel %vm196, %v53, 0
  %v210 = vsel %vm196, %v60, 0
  %v213 = vsel %vm196, %v67, 0
  %v216 = vsel %vm196, %v74, 0
  %v219 = vsel %vm196, %v81, 0
  %v222 = vsel %vm196, %v88, 0
  %224 = vmatprep.subr.mxu0 0.0
  %225 = vmatpush1.msra.mxu0 %v89
  %226 = vmatprep.subr.mxu0 0.0
  %227 = vmatpush1.msra.mxu0 %v90
  %228 = vmatprep.subr.mxu0 0.0
  %229 = vmatpush1.msra.mxu0 %v91
  %230 = vmatprep.subr.mxu0 0.0
  %231 = vmatpush1.msra.mxu0 %v92
  %232 = vmatprep.subr.mxu0 0.0
  %233 = vmatpush1.msra.mxu0 %v93
  %234 = vmatprep.subr.mxu0 0.0
  %235 = vmatpush1.msra.mxu0 %v94
  %236 = vmatprep.subr.mxu0 0.0
  %237 = vmatpush1.msra.mxu0 %v95
  %238 = vmatprep.subr.mxu0 0.0
  %239 = vmatpush1.msra.mxu0 %v96
  %240 = vmatprep.subr.mxu0 0.0
  %241 = vmatpush1.msra.mxu0 %v97
  %242 = vmatprep.subr.mxu0 0.0
  %243 = vmatpush1.msra.mxu0 %v98
  %244 = vmatprep.subr.mxu0 0.0
  %245 = vmatpush1.msra.mxu0 %v99
  %246 = vmatprep.subr.mxu0 0.0
  %247 = vmatpush1.msra.mxu0 %v100
  %248 = vmatprep.subr.mxu0 0.0
  %249 = vmatpush1.msra.mxu0 %v101
  %250 = vmatprep.subr.mxu0 0.0
  %251 = vmatpush1.msra.mxu0 %v102
  %252 = vmatprep.subr.mxu0 0.0
  %253 = vmatpush1.msra.mxu0 %v103
  %254 = vmatprep.subr.mxu0 0.0
  %255 = vmatpush1.msra.mxu0 %v104
  %256 = vmatprep.subr.mxu0 0.0
  %257 = vmatpush1.msra.mxu0 %v105
  %258 = vmatprep.subr.mxu0 0.0
  %259 = vmatpush1.msra.mxu0 %v106
  %260 = vmatprep.subr.mxu0 0.0
  %261 = vmatpush1.msra.mxu0 %v107
  %262 = vmatprep.subr.mxu0 0.0
  %263 = vmatpush1.msra.mxu0 %v108
  %264 = vmatprep.subr.mxu0 0.0
  %265 = vmatpush1.msra.mxu0 %v109
  %266 = vmatprep.subr.mxu0 0.0
  %267 = vmatpush1.msra.mxu0 %v110
  %268 = vmatprep.subr.mxu0 0.0
  %269 = vmatpush1.msra.mxu0 %v111
  %270 = vmatprep.subr.mxu0 0.0
  %271 = vmatpush1.msra.mxu0 %v112
  %272 = vmatprep.subr.mxu0 0.0
  %273 = vmatpush1.msra.mxu0 %v113
  %274 = vmatprep.subr.mxu0 0.0
  %275 = vmatpush1.msra.mxu0 %v114
  %276 = vmatprep.subr.mxu0 0.0
  %277 = vmatpush1.msra.mxu0 %v115
  %278 = vmatprep.subr.mxu0 0.0
  %279 = vmatpush1.msra.mxu0 %v116
  %280 = vmatprep.subr.mxu0 0.0
  %281 = vmatpush1.msra.mxu0 %v117
  %282 = vmatprep.subr.mxu0 0.0
  %283 = vmatpush1.msra.mxu0 %v118
  %284 = vmatprep.subr.mxu0 0.0
  %285 = vmatpush1.msra.mxu0 %v119
  %286 = vmatprep.subr.mxu0 0.0
  %287 = vmatpush1.msra.mxu0 %v120
  %288 = vmatprep.mubr.f32.mxu0 %v27
  %289 = vmatmul.mubr.f32.gmra.mrb[0].mxu0 %v26
  %v290 = vpop.f32.mrb[0].mxu0
  %v291 = vadd.f32 %v194, %v290
  %v292 = vpop.f32.mrb[0].mxu0
  %293 = vmatprep.mubr.f32.mxu0 %v34
  %294 = vmatmul.mubr.f32.gmra.mrb[0].mxu0 %v33
  %v295 = vpop.f32.mrb[0].mxu0
  %v296 = vadd.f32 %v194, %v295
  %v297 = vpop.f32.mrb[0].mxu0
  %298 = vmatprep.mubr.f32.mxu0 %v41
  %299 = vmatmul.mubr.f32.gmra.mrb[0].mxu0 %v40
  %v300 = vpop.f32.mrb[0].mxu0
  %v301 = vadd.f32 %v194, %v300
  %v302 = vpop.f32.mrb[0].mxu0
  %303 = vmatprep.mubr.f32.mxu0 %v48
  %304 = vmatmul.mubr.f32.gmra.mrb[0].mxu0 %v47
  %v305 = vpop.f32.mrb[0].mxu0
  %v306 = vadd.f32 %v194, %v305
  %v307 = vpop.f32.mrb[0].mxu0
  %308 = vmatprep.mubr.f32.mxu0 %v55
  %309 = vmatmul.mubr.f32.gmra.mrb[0].mxu0 %v54
  %v310 = vpop.f32.mrb[0].mxu0
  %v311 = vadd.f32 %v194, %v310
  %v312 = vpop.f32.mrb[0].mxu0
  %313 = vmatprep.mubr.f32.mxu0 %v62
  %314 = vmatmul.mubr.f32.gmra.mrb[0].mxu0 %v61
  %v315 = vpop.f32.mrb[0].mxu0
  %v316 = vadd.f32 %v194, %v315
  %v317 = vpop.f32.mrb[0].mxu0
  %318 = vmatprep.mubr.f32.mxu0 %v69
  %319 = vmatmul.mubr.f32.gmra.mrb[0].mxu0 %v68
  %v320 = vpop.f32.mrb[0].mxu0
  %v321 = vadd.f32 %v194, %v320
  %v322 = vpop.f32.mrb[0].mxu0
  %323 = vmatprep.mubr.f32.mxu0 %v76
  %324 = vmatmul.mubr.f32.gmra.mrb[0].mxu0 %v75
  %v325 = vpop.f32.mrb[0].mxu0
  %v326 = vadd.f32 %v194, %v325
  %v327 = vpop.f32.mrb[0].mxu0
  %328 = vmatprep.mubr.f32.mxu0 %v83
  %329 = vmatmul.mubr.f32.gmra.mrb[0].mxu0 %v82
  %v330 = vpop.f32.mrb[0].mxu0
  %v331 = vadd.f32 %v194, %v330
  %v332 = vpop.f32.mrb[0].mxu0
  %333 = vdwg.mxu0
  %334 = vmatprep.subr.mxu0 0.0
  %335 = vmatpush1.msra.mxu0 %v121
  %336 = vmatprep.subr.mxu0 0.0
  %337 = vmatpush1.msra.mxu0 %v122
  %338 = vmatprep.subr.mxu0 0.0
  %339 = vmatpush1.msra.mxu0 %v123
  %340 = vmatprep.subr.mxu0 0.0
  %341 = vmatpush1.msra.mxu0 %v124
  %342 = vmatprep.subr.mxu0 0.0
  %343 = vmatpush1.msra.mxu0 %v125
  %344 = vmatprep.subr.mxu0 0.0
  %345 = vmatpush1.msra.mxu0 %v126
  %346 = vmatprep.subr.mxu0 0.0
  %347 = vmatpush1.msra.mxu0 %v127
  %348 = vmatprep.subr.mxu0 0.0
  %349 = vmatpush1.msra.mxu0 %v128
  %350 = vmatprep.subr.mxu0 0.0
  %351 = vmatpush1.msra.mxu0 %v129
  %352 = vmatprep.subr.mxu0 0.0
  %353 = vmatpush1.msra.mxu0 %v130
  %354 = vmatprep.subr.mxu0 0.0
  %355 = vmatpush1.msra.mxu0 %v131
  %356 = vmatprep.subr.mxu0 0.0
  %357 = vmatpush1.msra.mxu0 %v132
  %358 = vmatprep.subr.mxu0 0.0
  %359 = vmatpush1.msra.mxu0 %v133
  %360 = vmatprep.subr.mxu0 0.0
  %361 = vmatpush1.msra.mxu0 %v134
  %362 = vmatprep.subr.mxu0 0.0
  %363 = vmatpush1.msra.mxu0 %v135
  %364 = vmatprep.subr.mxu0 0.0
  %365 = vmatpush1.msra.mxu0 %v136
  %366 = vmatprep.subr.mxu0 0.0
  %367 = vmatpush1.msra.mxu0 %v137
  %368 = vmatprep.subr.mxu0 0.0
  %369 = vmatpush1.msra.mxu0 %v138
  %370 = vmatprep.subr.mxu0 0.0
  %371 = vmatpush1.msra.mxu0 %v139
  %372 = vmatprep.subr.mxu0 0.0
  %373 = vmatpush1.msra.mxu0 %v140
  %374 = vmatprep.subr.mxu0 0.0
  %375 = vmatpush1.msra.mxu0 %v141
  %376 = vmatprep.subr.mxu0 0.0
  %377 = vmatpush1.msra.mxu0 %v142
  %378 = vmatprep.subr.mxu0 0.0
  %379 = vmatpush1.msra.mxu0 %v143
  %380 = vmatprep.subr.mxu0 0.0
  %381 = vmatpush1.msra.mxu0 %v144
  %382 = vmatprep.subr.mxu0 0.0
  %383 = vmatpush1.msra.mxu0 %v145
  %384 = vmatprep.subr.mxu0 0.0
  %385 = vmatpush1.msra.mxu0 %v146
  %386 = vmatprep.subr.mxu0 0.0
  %387 = vmatpush1.msra.mxu0 %v147
  %388 = vmatprep.subr.mxu0 0.0
  %389 = vmatpush1.msra.mxu0 %v148
  %390 = vmatprep.subr.mxu0 0.0
  %391 = vmatpush1.msra.mxu0 %v149
  %392 = vmatprep.subr.mxu0 0.0
  %393 = vmatpush1.msra.mxu0 %v150
  %394 = vmatprep.subr.mxu0 0.0
  %395 = vmatpush1.msra.mxu0 %v151
  %396 = vmatprep.subr.mxu0 0.0
  %397 = vmatpush1.msra.mxu0 %v152
  %398 = vmatprep.mubr.f32.mxu0 %v29
  %399 = vmatmul.mubr.f32.gmra.mrb[0].mxu0 %v28
  %v400 = vpop.f32.mrb[0].mxu0
  %v401 = vadd.f32 %v291, %v400
  %v402 = vpop.f32.mrb[0].mxu0
  %403 = vmatprep.mubr.f32.mxu0 %v36
  %404 = vmatmul.mubr.f32.gmra.mrb[0].mxu0 %v35
  %v405 = vpop.f32.mrb[0].mxu0
  %v406 = vadd.f32 %v296, %v405
  %v407 = vpop.f32.mrb[0].mxu0
  %408 = vmatprep.mubr.f32.mxu0 %v43
  %409 = vmatmul.mubr.f32.gmra.mrb[0].mxu0 %v42
  %v410 = vpop.f32.mrb[0].mxu0
  %v411 = vadd.f32 %v301, %v410
  %v412 = vpop.f32.mrb[0].mxu0
  %413 = vmatprep.mubr.f32.mxu0 %v50
  %414 = vmatmul.mubr.f32.gmra.mrb[0].mxu0 %v49
  %v415 = vpop.f32.mrb[0].mxu0
  %v416 = vadd.f32 %v306, %v415
  %v417 = vpop.f32.mrb[0].mxu0
  %418 = vmatprep.mubr.f32.mxu0 %v57
  %419 = vmatmul.mubr.f32.gmra.mrb[0].mxu0 %v56
  %v420 = vpop.f32.mrb[0].mxu0
  %v421 = vadd.f32 %v311, %v420
  %v422 = vpop.f32.mrb[0].mxu0
  %423 = vmatprep.mubr.f32.mxu0 %v64
  %424 = vmatmul.mubr.f32.gmra.mrb[0].mxu0 %v63
  %v425 = vpop.f32.mrb[0].mxu0
  %v426 = vadd.f32 %v316, %v425
  %v427 = vpop.f32.mrb[0].mxu0
  %428 = vmatprep.mubr.f32.mxu0 %v71
  %429 = vmatmul.mubr.f32.gmra.mrb[0].mxu0 %v70
  %v430 = vpop.f32.mrb[0].mxu0
  %v431 = vadd.f32 %v321, %v430
  %v432 = vpop.f32.mrb[0].mxu0
  %433 = vmatprep.mubr.f32.mxu0 %v78
  %434 = vmatmul.mubr.f32.gmra.mrb[0].mxu0 %v77
  %v435 = vpop.f32.mrb[0].mxu0
  %v436 = vadd.f32 %v326, %v435
  %v437 = vpop.f32.mrb[0].mxu0
  %438 = vmatprep.mubr.f32.mxu0 %v85
  %439 = vmatmul.mubr.f32.gmra.mrb[0].mxu0 %v84
  %v440 = vpop.f32.mrb[0].mxu0
  %v441 = vadd.f32 %v331, %v440
  %v442 = vpop.f32.mrb[0].mxu0
  %443 = vdwg.mxu0
  %444 = vmatprep.subr.mxu0 0.0
  %445 = vmatpush1.msra.mxu0 %v153
  %446 = vmatprep.subr.mxu0 0.0
  %447 = vmatpush1.msra.mxu0 %v154
  %448 = vmatprep.subr.mxu0 0.0
  %449 = vmatpush1.msra.mxu0 %v155
  %450 = vmatprep.subr.mxu0 0.0
  %451 = vmatpush1.msra.mxu0 %v156
  %452 = vmatprep.subr.mxu0 0.0
  %453 = vmatpush1.msra.mxu0 %v157
  %454 = vmatprep.subr.mxu0 0.0
  %455 = vmatpush1.msra.mxu0 %v158
  %456 = vmatprep.subr.mxu0 0.0
  %457 = vmatpush1.msra.mxu0 %v159
  %458 = vmatprep.subr.mxu0 0.0
  %459 = vmatpush1.msra.mxu0 %v160
  %460 = vmatprep.subr.mxu0 0.0
  %461 = vmatpush1.msra.mxu0 %v161
  %462 = vmatprep.subr.mxu0 0.0
  %463 = vmatpush1.msra.mxu0 %v162
  %464 = vmatprep.subr.mxu0 0.0
  %465 = vmatpush1.msra.mxu0 %v163
  %466 = vmatprep.subr.mxu0 0.0
  %467 = vmatpush1.msra.mxu0 %v164
  %468 = vmatprep.subr.mxu0 0.0
  %469 = vmatpush1.msra.mxu0 %v165
  %470 = vmatprep.subr.mxu0 0.0
  %471 = vmatpush1.msra.mxu0 %v166
  %472 = vmatprep.subr.mxu0 0.0
  %473 = vmatpush1.msra.mxu0 %v167
  %474 = vmatprep.subr.mxu0 0.0
  %475 = vmatpush1.msra.mxu0 %v168
  %476 = vmatprep.subr.mxu0 0.0
  %477 = vmatpush1.msra.mxu0 %v169
  %478 = vmatprep.subr.mxu0 0.0
  %479 = vmatpush1.msra.mxu0 %v170
  %480 = vmatprep.subr.mxu0 0.0
  %481 = vmatpush1.msra.mxu0 %v171
  %482 = vmatprep.subr.mxu0 0.0
  %483 = vmatpush1.msra.mxu0 %v172
  %484 = vmatprep.subr.mxu0 0.0
  %485 = vmatpush1.msra.mxu0 %v173
  %486 = vmatprep.subr.mxu0 0.0
  %487 = vmatpush1.msra.mxu0 %v174
  %488 = vmatprep.subr.mxu0 0.0
  %489 = vmatpush1.msra.mxu0 %v175
  %490 = vmatprep.subr.mxu0 0.0
  %491 = vmatpush1.msra.mxu0 %v176
  %492 = vmatprep.subr.mxu0 0.0
  %493 = vmatpush1.msra.mxu0 %v177
  %494 = vmatprep.subr.mxu0 0.0
  %495 = vmatpush1.msra.mxu0 %v178
  %496 = vmatprep.subr.mxu0 0.0
  %497 = vmatpush1.msra.mxu0 %v179
  %498 = vmatprep.subr.mxu0 0.0
  %499 = vmatpush1.msra.mxu0 %v180
  %500 = vmatprep.subr.mxu0 0.0
  %501 = vmatpush1.msra.mxu0 %v181
  %502 = vmatprep.subr.mxu0 0.0
  %503 = vmatpush1.msra.mxu0 %v182
  %504 = vmatprep.subr.mxu0 0.0
  %505 = vmatpush1.msra.mxu0 %v183
  %506 = vmatprep.subr.mxu0 0.0
  %507 = vmatpush1.msra.mxu0 %v184
  %508 = vmatprep.mubr.f32.mxu0 %v31
  %509 = vmatmul.mubr.f32.gmra.mrb[0].mxu0 %v30
  %v510 = vpop.f32.mrb[0].mxu0
  %v511 = vadd.f32 %v401, %v510
  %v512 = vpop.f32.mrb[0].mxu0
  %513 = vmatprep.mubr.f32.mxu0 %v38
  %514 = vmatmul.mubr.f32.gmra.mrb[0].mxu0 %v37
  %v515 = vpop.f32.mrb[0].mxu0
  %v516 = vadd.f32 %v406, %v515
  %v517 = vpop.f32.mrb[0].mxu0
  %518 = vmatprep.mubr.f32.mxu0 %v45
  %519 = vmatmul.mubr.f32.gmra.mrb[0].mxu0 %v44
  %v520 = vpop.f32.mrb[0].mxu0
  %v521 = vadd.f32 %v411, %v520
  %v522 = vpop.f32.mrb[0].mxu0
  %523 = vmatprep.mubr.f32.mxu0 %v52
  %524 = vmatmul.mubr.f32.gmra.mrb[0].mxu0 %v51
  %v525 = vpop.f32.mrb[0].mxu0
  %v526 = vadd.f32 %v416, %v525
  %v527 = vpop.f32.mrb[0].mxu0
  %528 = vmatprep.mubr.f32.mxu0 %v59
  %529 = vmatmul.mubr.f32.gmra.mrb[0].mxu0 %v58
  %v530 = vpop.f32.mrb[0].mxu0
  %v531 = vadd.f32 %v421, %v530
  %v532 = vpop.f32.mrb[0].mxu0
  %533 = vmatprep.mubr.f32.mxu0 %v66
  %534 = vmatmul.mubr.f32.gmra.mrb[0].mxu0 %v65
  %v535 = vpop.f32.mrb[0].mxu0
  %v536 = vadd.f32 %v426, %v535
  %v537 = vpop.f32.mrb[0].mxu0
  %538 = vmatprep.mubr.f32.mxu0 %v73
  %539 = vmatmul.mubr.f32.gmra.mrb[0].mxu0 %v72
  %v540 = vpop.f32.mrb[0].mxu0
  %v541 = vadd.f32 %v431, %v540
  %v542 = vpop.f32.mrb[0].mxu0
  %543 = vmatprep.mubr.f32.mxu0 %v80
  %544 = vmatmul.mubr.f32.gmra.mrb[0].mxu0 %v79
  %v545 = vpop.f32.mrb[0].mxu0
  %v546 = vadd.f32 %v436, %v545
  %v547 = vpop.f32.mrb[0].mxu0
  %548 = vmatprep.mubr.f32.mxu0 %v87
  %549 = vmatmul.mubr.f32.gmra.mrb[0].mxu0 %v86
  %v550 = vpop.f32.mrb[0].mxu0
  %v551 = vadd.f32 %v441, %v550
  %v552 = vpop.f32.mrb[0].mxu0
  %553 = vdwg.mxu0
  %554 = vmatprep.subr.mxu0 0.0
  %555 = vmatpush1.msra.mxu0 %v185
  %556 = vmatprep.subr.mxu0 0.0
  %557 = vmatpush1.msra.mxu0 %v186
  %558 = vmatprep.subr.mxu0 0.0
  %559 = vmatpush1.msra.mxu0 %v187
  %560 = vmatprep.subr.mxu0 0.0
  %561 = vmatpush1.msra.mxu0 %v188
  %562 = vmatprep.subr.mxu0 0.0
  %563 = vmatpush1.msra.mxu0 0.0
  %564 = vmatprep.subr.mxu0 0.0
  %565 = vmatpush1.msra.mxu0 0.0
  %566 = vmatprep.subr.mxu0 0.0
  %567 = vmatpush1.msra.mxu0 0.0
  %568 = vmatprep.subr.mxu0 0.0
  %569 = vmatpush1.msra.mxu0 0.0
  %570 = vmatprep.subr.mxu0 0.0
  %571 = vmatpush1.msra.mxu0 0.0
  %572 = vmatprep.subr.mxu0 0.0
  %573 = vmatpush1.msra.mxu0 0.0
  %574 = vmatprep.subr.mxu0 0.0
  %575 = vmatpush1.msra.mxu0 0.0
  %576 = vmatprep.subr.mxu0 0.0
  %577 = vmatpush1.msra.mxu0 0.0
  %578 = vmatprep.subr.mxu0 0.0
  %579 = vmatpush1.msra.mxu0 0.0
  %580 = vmatprep.subr.mxu0 0.0
  %581 = vmatpush1.msra.mxu0 0.0
  %582 = vmatprep.subr.mxu0 0.0
  %583 = vmatpush1.msra.mxu0 0.0
  %584 = vmatprep.subr.mxu0 0.0
  %585 = vmatpush1.msra.mxu0 0.0
  %586 = vmatprep.subr.mxu0 0.0
  %587 = vmatpush1.msra.mxu0 0.0
  %588 = vmatprep.subr.mxu0 0.0
  %589 = vmatpush1.msra.mxu0 0.0
  %590 = vmatprep.subr.mxu0 0.0
  %591 = vmatpush1.msra.mxu0 0.0
  %592 = vmatprep.subr.mxu0 0.0
  %593 = vmatpush1.msra.mxu0 0.0
  %594 = vmatprep.subr.mxu0 0.0
  %595 = vmatpush1.msra.mxu0 0.0
  %596 = vmatprep.subr.mxu0 0.0
  %597 = vmatpush1.msra.mxu0 0.0
  %598 = vmatprep.subr.mxu0 0.0
  %599 = vmatpush1.msra.mxu0 0.0
  %600 = vmatprep.subr.mxu0 0.0
  %601 = vmatpush1.msra.mxu0 0.0
  %602 = vmatprep.subr.mxu0 0.0
  %603 = vmatpush1.msra.mxu0 0.0
  %604 = vmatprep.subr.mxu0 0.0
  %605 = vmatpush1.msra.mxu0 0.0
  %606 = vmatprep.subr.mxu0 0.0
  %607 = vmatpush1.msra.mxu0 0.0
  %608 = vmatprep.subr.mxu0 0.0
  %609 = vmatpush1.msra.mxu0 0.0
  %610 = vmatprep.subr.mxu0 0.0
  %611 = vmatpush1.msra.mxu0 0.0
  %612 = vmatprep.subr.mxu0 0.0
  %613 = vmatpush1.msra.mxu0 0.0
  %614 = vmatprep.subr.mxu0 0.0
  %615 = vmatpush1.msra.mxu0 0.0
  %616 = vmatprep.subr.mxu0 0.0
  %617 = vmatpush1.msra.mxu0 0.0
  %618 = vmatprep.mubr.f32.mxu0 0.0
  %619 = vmatmul.mubr.f32.gmra.mrb[0].mxu0 %v198
  %v620 = vpop.f32.mrb[0].mxu0
  %v621 = vadd.f32 %v511, %v620
  %v622 = vpop.f32.mrb[0].mxu0
  %623 = vmatprep.mubr.f32.mxu0 0.0
  %624 = vmatmul.mubr.f32.gmra.mrb[0].mxu0 %v201
  %v625 = vpop.f32.mrb[0].mxu0
  %v626 = vadd.f32 %v516, %v625
  %v627 = vpop.f32.mrb[0].mxu0
  %628 = vmatprep.mubr.f32.mxu0 0.0
  %629 = vmatmul.mubr.f32.gmra.mrb[0].mxu0 %v204
  %v630 = vpop.f32.mrb[0].mxu0
  %v631 = vadd.f32 %v521, %v630
  %v632 = vpop.f32.mrb[0].mxu0
  %633 = vmatprep.mubr.f32.mxu0 0.0
  %634 = vmatmul.mubr.f32.gmra.mrb[0].mxu0 %v207
  %v635 = vpop.f32.mrb[0].mxu0
  %v636 = vadd.f32 %v526, %v635
  %v637 = vpop.f32.mrb[0].mxu0
  %638 = vmatprep.mubr.f32.mxu0 0.0
  %639 = vmatmul.mubr.f32.gmra.mrb[0].mxu0 %v210
  %v640 = vpop.f32.mrb[0].mxu0
  %v641 = vadd.f32 %v531, %v640
  %v642 = vpop.f32.mrb[0].mxu0
  %643 = vmatprep.mubr.f32.mxu0 0.0
  %644 = vmatmul.mubr.f32.gmra.mrb[0].mxu0 %v213
  %v645 = vpop.f32.mrb[0].mxu0
  %v646 = vadd.f32 %v536, %v645
  %v647 = vpop.f32.mrb[0].mxu0
  %648 = vmatprep.mubr.f32.mxu0 0.0
  %649 = vmatmul.mubr.f32.gmra.mrb[0].mxu0 %v216
  %v650 = vpop.f32.mrb[0].mxu0
  %v651 = vadd.f32 %v541, %v650
  %v652 = vpop.f32.mrb[0].mxu0
  %653 = vmatprep.mubr.f32.mxu0 0.0
  %654 = vmatmul.mubr.f32.gmra.mrb[0].mxu0 %v219
  %v655 = vpop.f32.mrb[0].mxu0
  %v656 = vadd.f32 %v546, %v655
  %v657 = vpop.f32.mrb[0].mxu0
  %658 = vmatprep.mubr.f32.mxu0 0.0
  %659 = vmatmul.mubr.f32.gmra.mrb[0].mxu0 %v222
  %v660 = vpop.f32.mrb[0].mxu0
  %v661 = vadd.f32 %v551, %v660
  %v662 = vpop.f32.mrb[0].mxu0
  %663 = vdwg.mxu0
  %vm664 = vcmp.gt.f32.partialorder %v621, 0.0
  %vm665 = vcmp.gt.f32.partialorder %v626, 0.0
  %vm666 = vcmp.gt.f32.partialorder %v631, 0.0
  %vm667 = vcmp.gt.f32.partialorder %v636, 0.0
  %vm668 = vcmp.gt.f32.partialorder %v641, 0.0
  %vm669 = vcmp.gt.f32.partialorder %v646, 0.0
  %vm670 = vcmp.gt.f32.partialorder %v651, 0.0
  %vm671 = vcmp.gt.f32.partialorder %v656, 0.0
  %vm672 = vcmp.gt.f32.partialorder %v661, 0.0
  %v673 = vmin.f32 %v621, 0.0
  %v674 = vmin.f32 %v626, 0.0
  %v675 = vmin.f32 %v631, 0.0
  %v676 = vmin.f32 %v636, 0.0
  %v677 = vmin.f32 %v641, 0.0
  %v678 = vmin.f32 %v646, 0.0
  %v679 = vmin.f32 %v651, 0.0
  %v680 = vmin.f32 %v656, 0.0
  %v681 = vmin.f32 %v661, 0.0
  %v682 = vmul.f32 %v673, 1.442695
  %v683 = vpow.pop %v682
  %v684 = vmul.f32 %v674, 1.442695
  %v685 = vpow.pop %v684
  %v686 = vmul.f32 %v675, 1.442695
  %v687 = vpow.pop %v686
  %v688 = vmul.f32 %v676, 1.442695
  %v689 = vpow.pop %v688
  %v690 = vmul.f32 %v677, 1.442695
  %v691 = vpow.pop %v690
  %v692 = vmul.f32 %v678, 1.442695
  %v693 = vpow.pop %v692
  %v694 = vmul.f32 %v679, 1.442695
  %v695 = vpow.pop %v694
  %v696 = vmul.f32 %v680, 1.442695
  %v697 = vpow.pop %v696
  %v698 = vmul.f32 %v681, 1.442695
  %v699 = vpow.pop %v698
  %v700 = vsub.f32 %v683, 1.0
  %v701 = vsub.f32 %v685, 1.0
  %v702 = vsub.f32 %v687, 1.0
  %v703 = vsub.f32 %v689, 1.0
  %v704 = vsub.f32 %v691, 1.0
  %v705 = vsub.f32 %v693, 1.0
  %v706 = vsub.f32 %v695, 1.0
  %v707 = vsub.f32 %v697, 1.0
  %v708 = vsub.f32 %v699, 1.0
  %v709 = vsel %vm664, %v621, %v700
  %v710 = vsel %vm665, %v626, %v701
  %v711 = vsel %vm666, %v631, %v702
  %v712 = vsel %vm667, %v636, %v703
  %v713 = vsel %vm668, %v641, %v704
  %v714 = vsel %vm669, %v646, %v705
  %v715 = vsel %vm670, %v651, %v706
  %v716 = vsel %vm671, %v656, %v707
  %v717 = vsel %vm672, %v661, %v708
  %v718 = vlaneseq
  %v719 = vshrl.u32 %v718, 7
  %v720 = vlaneseq
  %v721 = vand.u32 %v720, 127
  %v722 = vmul.u32 %v719, 36
  %vm723 = vcmp.ge.s32.totalorder %v721, %v722
  %v724 = vadd.s32 %v719, 1
  %v725 = vmul.u32 %v724, 36
  %vm726 = vcmp.lt.s32.totalorder %v721, %v725
  %vm727 = vmand %vm723, %vm726
  %v728 = vsel %vm727, 0.027777778, 0.0
  %vm729 = vcmask 588800
  %v731 = vsel %vm729, %v728, 0
  %733 = vmatprep.subr.mxu0 0.0
  %734 = vmatpush1.msra.mxu0 %v709
  %735 = vmatprep.subr.mxu0 0.0
  %736 = vmatpush1.msra.mxu0 %v710
  %737 = vmatprep.subr.mxu0 0.0
  %738 = vmatpush1.msra.mxu0 %v711
  %739 = vmatprep.subr.mxu0 0.0
  %740 = vmatpush1.msra.mxu0 %v712
  %741 = vmatprep.subr.mxu0 0.0
  %742 = vmatpush1.msra.mxu0 %v713
  %743 = vmatprep.subr.mxu0 0.0
  %744 = vmatpush1.msra.mxu0 %v714
  %745 = vmatprep.subr.mxu0 0.0
  %746 = vmatpush1.msra.mxu0 %v715
  %747 = vmatprep.subr.mxu0 0.0
  %748 = vmatpush1.msra.mxu0 %v716
  %749 = vmatprep.subr.mxu0 0.0
  %750 = vmatpush1.msra.mxu0 %v717
  %751 = vmatprep.subr.mxu0 0.0
  %752 = vmatpush1.msra.mxu0 0.0
  %753 = vmatprep.subr.mxu0 0.0
  %754 = vmatpush1.msra.mxu0 0.0
  %755 = vmatprep.subr.mxu0 0.0
  %756 = vmatpush1.msra.mxu0 0.0
  %757 = vmatprep.subr.mxu0 0.0
  %758 = vmatpush1.msra.mxu0 0.0
  %759 = vmatprep.subr.mxu0 0.0
  %760 = vmatpush1.msra.mxu0 0.0
  %761 = vmatprep.subr.mxu0 0.0
  %762 = vmatpush1.msra.mxu0 0.0
  %763 = vmatprep.subr.mxu0 0.0
  %764 = vmatpush1.msra.mxu0 0.0
  %765 = vmatprep.subr.mxu0 0.0
  %766 = vmatpush1.msra.mxu0 0.0
  %767 = vmatprep.subr.mxu0 0.0
  %768 = vmatpush1.msra.mxu0 0.0
  %769 = vmatprep.subr.mxu0 0.0
  %770 = vmatpush1.msra.mxu0 0.0
  %771 = vmatprep.subr.mxu0 0.0
  %772 = vmatpush1.msra.mxu0 0.0
  %773 = vmatprep.subr.mxu0 0.0
  %774 = vmatpush1.msra.mxu0 0.0
  %775 = vmatprep.subr.mxu0 0.0
  %776 = vmatpush1.msra.mxu0 0.0
  %777 = vmatprep.subr.mxu0 0.0
  %778 = vmatpush1.msra.mxu0 0.0
  %779 = vmatprep.subr.mxu0 0.0
  %780 = vmatpush1.msra.mxu0 0.0
  %781 = vmatprep.subr.mxu0 0.0
  %782 = vmatpush1.msra.mxu0 0.0
  %783 = vmatprep.subr.mxu0 0.0
  %784 = vmatpush1.msra.mxu0 0.0
  %785 = vmatprep.subr.mxu0 0.0
  %786 = vmatpush1.msra.mxu0 0.0
  %787 = vmatprep.subr.mxu0 0.0
  %788 = vmatpush1.msra.mxu0 0.0
  %789 = vmatprep.subr.mxu0 0.0
  %790 = vmatpush1.msra.mxu0 0.0
  %791 = vmatprep.subr.mxu0 0.0
  %792 = vmatpush1.msra.mxu0 0.0
  %793 = vmatprep.subr.mxu0 0.0
  %794 = vmatpush1.msra.mxu0 0.0
  %795 = vmatprep.subr.mxu0 0.0
  %796 = vmatpush1.msra.mxu0 0.0
  %797 = vmatprep.mubr.f32.mxu0 0.0
  %798 = vmatmul.mubr.f32.gmra.mrb[0].mxu0 %v731
  %v799 = vpop.f32.mrb[0].mxu0
  %v800 = vadd.f32 0.0, %v799
  %v801 = vpop.f32.mrb[0].mxu0
  %802 = vdwg.mxu0
  %vm803 = vcmp.gt.f32.partialorder %v800, 0.0
  %v804 = vmin.f32 %v800, 0.0
  %v805 = vmul.f32 %v804, 1.442695
  %v806 = vpow.pop %v805
  %v807 = vsub.f32 %v806, 1.0
  %v808 = vsel %vm803, %v800, %v807
  %v809 = vld [vmem:[%s3] sm:$0xff]
  %v810 = vld [vmem:[%s3 + $0x8] sm:$0xff]
  %v811 = vld [vmem:[%s3 + $0x10] sm:$0xff]
  %v812 = vld [vmem:[%s3 + $0x18] sm:$0xff]
  %v813 = vld [vmem:[%s3 + $0x20] sm:$0xff]
  %v814 = vld [vmem:[%s3 + $0x28] sm:$0xff]
  %v815 = vld [vmem:[%s3 + $0x30] sm:$0xff]
  %v816 = vld [vmem:[%s3 + $0x38] sm:$0xff]
  %v817 = vld [vmem:[%s4] sm:$0x1]
  %v819 = vlaneseq
  %v820 = vshrl.u32 %v819, 7
  %v821 = vsub.s32 0, %v820
  %v822 = vrot.slane %v817, %v821
  %vm824 = vcmask 523264
  %v826 = vsel %vm824, %v808, 0
  %828 = vmatprep.subr.mxu0 0.0
  %829 = vmatpush1.msra.mxu0 %v809
  %830 = vmatprep.subr.mxu0 0.0
  %831 = vmatpush1.msra.mxu0 %v810
  %832 = vmatprep.subr.mxu0 0.0
  %833 = vmatpush1.msra.mxu0 %v811
  %834 = vmatprep.subr.mxu0 0.0
  %835 = vmatpush1.msra.mxu0 %v812
  %836 = vmatprep.subr.mxu0 0.0
  %837 = vmatpush1.msra.mxu0 %v813
  %838 = vmatprep.subr.mxu0 0.0
  %839 = vmatpush1.msra.mxu0 %v814
  %840 = vmatprep.subr.mxu0 0.0
  %841 = vmatpush1.msra.mxu0 %v815
  %842 = vmatprep.subr.mxu0 0.0
  %843 = vmatpush1.msra.mxu0 %v816
  %844 = vmatprep.subr.mxu0 0.0
  %845 = vmatpush1.msra.mxu0 0.0
  %846 = vmatprep.subr.mxu0 0.0
  %847 = vmatpush1.msra.mxu0 0.0
  %848 = vmatprep.subr.mxu0 0.0
  %849 = vmatpush1.msra.mxu0 0.0
  %850 = vmatprep.subr.mxu0 0.0
  %851 = vmatpush1.msra.mxu0 0.0
  %852 = vmatprep.subr.mxu0 0.0
  %853 = vmatpush1.msra.mxu0 0.0
  %854 = vmatprep.subr.mxu0 0.0
  %855 = vmatpush1.msra.mxu0 0.0
  %856 = vmatprep.subr.mxu0 0.0
  %857 = vmatpush1.msra.mxu0 0.0
  %858 = vmatprep.subr.mxu0 0.0
  %859 = vmatpush1.msra.mxu0 0.0
  %860 = vmatprep.subr.mxu0 0.0
  %861 = vmatpush1.msra.mxu0 0.0
  %862 = vmatprep.subr.mxu0 0.0
  %863 = vmatpush1.msra.mxu0 0.0
  %864 = vmatprep.subr.mxu0 0.0
  %865 = vmatpush1.msra.mxu0 0.0
  %866 = vmatprep.subr.mxu0 0.0
  %867 = vmatpush1.msra.mxu0 0.0
  %868 = vmatprep.subr.mxu0 0.0
  %869 = vmatpush1.msra.mxu0 0.0
  %870 = vmatprep.subr.mxu0 0.0
  %871 = vmatpush1.msra.mxu0 0.0
  %872 = vmatprep.subr.mxu0 0.0
  %873 = vmatpush1.msra.mxu0 0.0
  %874 = vmatprep.subr.mxu0 0.0
  %875 = vmatpush1.msra.mxu0 0.0
  %876 = vmatprep.subr.mxu0 0.0
  %877 = vmatpush1.msra.mxu0 0.0
  %878 = vmatprep.subr.mxu0 0.0
  %879 = vmatpush1.msra.mxu0 0.0
  %880 = vmatprep.subr.mxu0 0.0
  %881 = vmatpush1.msra.mxu0 0.0
  %882 = vmatprep.subr.mxu0 0.0
  %883 = vmatpush1.msra.mxu0 0.0
  %884 = vmatprep.subr.mxu0 0.0
  %885 = vmatpush1.msra.mxu0 0.0
  %886 = vmatprep.subr.mxu0 0.0
  %887 = vmatpush1.msra.mxu0 0.0
  %888 = vmatprep.subr.mxu0 0.0
  %889 = vmatpush1.msra.mxu0 0.0
  %890 = vmatprep.subr.mxu0 0.0
  %891 = vmatpush1.msra.mxu0 0.0
  %892 = vmatprep.mubr.f32.mxu0 0.0
  %893 = vmatmul.mubr.f32.gmra.mrb[0].mxu0 %v826
  %v894 = vpop.f32.mrb[0].mxu0
  %v895 = vadd.f32 %v822, %v894
  %v896 = vpop.f32.mrb[0].mxu0
  %897 = vdwg.mxu0
  %vm898 = vcmp.gt.f32.partialorder %v895, 0.0
  %v899 = vmin.f32 %v895, 0.0
  %v900 = vmul.f32 %v899, 1.442695
  %v901 = vpow.pop %v900
  %v902 = vsub.f32 %v901, 1.0
  %v903 = vsel %vm898, %v895, %v902
  %v904 = vld [vmem:[%s5] sm:$0xff]
  %v905 = vld [vmem:[%s5 + $0x8] sm:$0xff]
  %v906 = vld [vmem:[%s5 + $0x10] sm:$0xff]
  %v907 = vld [vmem:[%s5 + $0x18] sm:$0xff]
  %v908 = vld [vmem:[%s5 + $0x20] sm:$0xff]
  %v909 = vld [vmem:[%s5 + $0x28] sm:$0xff]
  %v910 = vld [vmem:[%s5 + $0x30] sm:$0xff]
  %v911 = vld [vmem:[%s5 + $0x38] sm:$0xff]
  %v912 = vld [vmem:[%s5 + $0x40] sm:$0xff]
  %v913 = vld [vmem:[%s5 + $0x48] sm:$0xff]
  %v914 = vld [vmem:[%s5 + $0x50] sm:$0xff]
  %v915 = vld [vmem:[%s5 + $0x58] sm:$0xff]
  %v916 = vld [vmem:[%s5 + $0x60] sm:$0xff]
  %v917 = vld [vmem:[%s5 + $0x68] sm:$0xff]
  %v918 = vld [vmem:[%s5 + $0x70] sm:$0xff]
  %v919 = vld [vmem:[%s5 + $0x78] sm:$0xff]
  %v920 = vld [vmem:[%s6] sm:$0x1]
  %v922 = vlaneseq
  %v923 = vshrl.u32 %v922, 7
  %v924 = vsub.s32 0, %v923
  %v925 = vrot.slane %v920, %v924
  %927 = vmatprep.subr.mxu0 0.0
  %928 = vmatpush1.msra.mxu0 %v904
  %929 = vmatprep.subr.mxu0 0.0
  %930 = vmatpush1.msra.mxu0 %v905
  %931 = vmatprep.subr.mxu0 0.0
  %932 = vmatpush1.msra.mxu0 %v906
  %933 = vmatprep.subr.mxu0 0.0
  %934 = vmatpush1.msra.mxu0 %v907
  %935 = vmatprep.subr.mxu0 0.0
  %936 = vmatpush1.msra.mxu0 %v908
  %937 = vmatprep.subr.mxu0 0.0
  %938 = vmatpush1.msra.mxu0 %v909
  %939 = vmatprep.subr.mxu0 0.0
  %940 = vmatpush1.msra.mxu0 %v910
  %941 = vmatprep.subr.mxu0 0.0
  %942 = vmatpush1.msra.mxu0 %v911
  %943 = vmatprep.subr.mxu0 0.0
  %944 = vmatpush1.msra.mxu0 %v912
  %945 = vmatprep.subr.mxu0 0.0
  %946 = vmatpush1.msra.mxu0 %v913
  %947 = vmatprep.subr.mxu0 0.0
  %948 = vmatpush1.msra.mxu0 %v914
  %949 = vmatprep.subr.mxu0 0.0
  %950 = vmatpush1.msra.mxu0 %v915
  %951 = vmatprep.subr.mxu0 0.0
  %952 = vmatpush1.msra.mxu0 %v916
  %953 = vmatprep.subr.mxu0 0.0
  %954 = vmatpush1.msra.mxu0 %v917
  %955 = vmatprep.subr.mxu0 0.0
  %956 = vmatpush1.msra.mxu0 %v918
  %957 = vmatprep.subr.mxu0 0.0
  %958 = vmatpush1.msra.mxu0 %v919
  %959 = vmatprep.subr.mxu0 0.0
  %960 = vmatpush1.msra.mxu0 0.0
  %961 = vmatprep.subr.mxu0 0.0
  %962 = vmatpush1.msra.mxu0 0.0
  %963 = vmatprep.subr.mxu0 0.0
  %964 = vmatpush1.msra.mxu0 0.0
  %965 = vmatprep.subr.mxu0 0.0
  %966 = vmatpush1.msra.mxu0 0.0
  %967 = vmatprep.subr.mxu0 0.0
  %968 = vmatpush1.msra.mxu0 0.0
  %969 = vmatprep.subr.mxu0 0.0
  %970 = vmatpush1.msra.mxu0 0.0
  %971 = vmatprep.subr.mxu0 0.0
  %972 = vmatpush1.msra.mxu0 0.0
  %973 = vmatprep.subr.mxu0 0.0
  %974 = vmatpush1.msra.mxu0 0.0
  %975 = vmatprep.subr.mxu0 0.0
  %976 = vmatpush1.msra.mxu0 0.0
  %977 = vmatprep.subr.mxu0 0.0
  %978 = vmatpush1.msra.mxu0 0.0
  %979 = vmatprep.subr.mxu0 0.0
  %980 = vmatpush1.msra.mxu0 0.0
  %981 = vmatprep.subr.mxu0 0.0
  %982 = vmatpush1.msra.mxu0 0.0
  %983 = vmatprep.subr.mxu0 0.0
  %984 = vmatpush1.msra.mxu0 0.0
  %985 = vmatprep.subr.mxu0 0.0
  %986 = vmatpush1.msra.mxu0 0.0
  %987 = vmatprep.subr.mxu0 0.0
  %988 = vmatpush1.msra.mxu0 0.0
  %989 = vmatprep.subr.mxu0 0.0
  %990 = vmatpush1.msra.mxu0 0.0
  %991 = vmatprep.mubr.f32.mxu0 0.0
  %992 = vmatmul.mubr.f32.gmra.mrb[0].mxu0 %v903
  %v993 = vpop.f32.mrb[0].mxu0
  %v994 = vadd.f32 %v925, %v993
  %v995 = vpop.f32.mrb[0].mxu0
  %996 = vdwg.mxu0
  %v997 = vmax.f32 %v994, -5.0
  %v998 = vmin.f32 %v997, -2.0
  %vm999 = vcmp.eq.s32.totalorder %v721, 0
  %v1000 = vsel %vm999, %v994, %v998
  %vm1001 = vcmask 9216
  %1002 = vst.msk [vmem:[%s7] sm:$0x3] %vm1001, %v1000
  // Predicated region
  $region30: #{gaussian_policy_forward.5} parent=0 // pred_check
    _
  $region31: #{gaussian_policy_forward.5} parent=0 // pred_check_branch
    %1004 = sbr.rel (0) target = $region33
  $region32: #{gaussian_policy_forward.5} parent=0 // pred_region
    _
  $region33: #{gaussian_policy_forward.5} parent=0 // pred_fallthru
    _
  // Predicated region
  $region34: #{gaussian_policy_forward.5} parent=0 // pred_check
    _
  $region35: #{gaussian_policy_forward.5} parent=0 // pred_check_branch
    %1006 = sbr.rel (0) target = $region37
  $region36: #{gaussian_policy_forward.5} parent=0 // pred_region
    _
  $region37: #{gaussian_policy_forward.5} parent=0 // pred_fallthru
    _

</llo_original>
